<compile_context>
chip_gen: v7x
topology: tpu7x:2x2x1
jax: 0.10.0
libtpu: 0.0.40
codegen_flags: <defaults>
</compile_context>

<pallas_src>
import numpy as np

import jax
import jax.numpy as jnp
from jax.experimental import pallas as pl
from jax.experimental.pallas import tpu as pltpu

_EPS = 1e-5  # torch.nn.GroupNorm default eps


def _silu_ref(v):
    return v * jax.nn.sigmoid(v)


def _silu_kernel(v):
    # sigmoid(v) == 0.5 * tanh(v/2) + 0.5  : exact identity, EUP tanh, no divide.
    return v * (0.5 * jnp.tanh(0.5 * v) + 0.5)


def _resnet_block_kernel(
    x_ref,                               # (1, H, W, Cin)  bf16, this batch element
    t_ref,                               # (B, T)          f32, full time-emb matrix
    w1_ref, b1_ref, g1w_ref, g1b_ref,    # conv1 (3, 3*Cin, Cout) bf16 + GN1 rows f32
    w2_ref, b2_ref, g2w_ref, g2b_ref,    # conv2 (3, 3*Cout, Cout) bf16 + GN2 rows f32
    ws_ref, wh_ref, bs_ref, bh_ref,      # time-MLP split: scale / shift weights + bias
    wr_ref, br_ref,                      # 1x1 residual conv (Cin, Cout) bf16, (1, Cout) f32
    gmat_ref,                            # (Cout, Cout) group-mean aggregation matrix f32
    o_ref,                               # (1, H, W, Cout) f32
    col1_ref,                            # VMEM (H+2, W, 3*Cin)  bf16, dx-folded im2col
    col2_ref,                            # VMEM (H+2, W, 3*Cout) bf16, dx-folded im2col
):
    _, H, W, Cout = o_ref.shape
    Cin = x_ref.shape[3]
    HW = H * W
    b = pl.program_id(0)
    bf16 = jnp.bfloat16

    # ---------- time MLP: per-sample FiLM scale & shift (tiny, f32) ----------
    t = _silu_kernel(t_ref[pl.ds(b, 1), :])                               # (1, T)
    scale = jnp.dot(t, ws_ref[...], preferred_element_type=jnp.float32) + bs_ref[...]
    shift = jnp.dot(t, wh_ref[...], preferred_element_type=jnp.float32) + bh_ref[...]

    # ---------- helpers ----------
    def fill_col(col_ref, get, c):
        """col[yp, x, dx*c+ci] = zero-padded src[yp-1, x+dx-1, ci];
        get(lo, hi) must return the (H, hi-lo, c) bf16 source slab."""
        # never-overwritten halo: 2 border rows + 2 single-column slivers
        col_ref[0] = jnp.zeros((W, 3 * c), bf16)
        col_ref[H + 1] = jnp.zeros((W, 3 * c), bf16)
        col_ref[1:H + 1, 0:1, 0:c] = jnp.zeros((H, 1, c), bf16)
        col_ref[1:H + 1, W - 1:W, 2 * c:3 * c] = jnp.zeros((H, 1, c), bf16)
        # interior: three dx-shifted copies of the source rows
        col_ref[1:H + 1, 1:W, 0:c] = get(0, W - 1)              # dx = 0
        col_ref[1:H + 1, :, c:2 * c] = get(0, W)                 # dx = 1
        col_ref[1:H + 1, 0:W - 1, 2 * c:3 * c] = get(1, W)       # dx = 2

    def conv3x3(col_ref, w_ref, kdim):
        acc = jnp.zeros((HW, Cout), jnp.float32)
        for dy in range(3):                                      # 3 matmuls, K = 3*C
            lhs = col_ref[dy:dy + H].reshape(HW, kdim)           # aligned first-axis slice
            acc = acc + jnp.dot(lhs, w_ref[dy],
                                preferred_element_type=jnp.float32)
        return acc

    def group_norm(h, gw_ref, gb_ref):
        gmat = gmat_ref[...]              # rows pre-scaled by 1/(HW*group_size)
        mean = jnp.dot(jnp.sum(h, axis=0, keepdims=True), gmat,
                       preferred_element_type=jnp.float32)
        ex2 = jnp.dot(jnp.sum(h * h, axis=0, keepdims=True), gmat,
                      preferred_element_type=jnp.float32)
        var = jnp.maximum(ex2 - mean * mean, 0.0)
        inv = jax.lax.rsqrt(var + _EPS)
        return (h - mean) * (inv * gw_ref[...]) + gb_ref[...]

    # ---------- block 1: conv3x3 -> GN -> x*(scale+1)+shift -> SiLU ----------
    fill_col(col1_ref, lambda lo, hi: x_ref[0, :, lo:hi, :], Cin)
    h = conv3x3(col1_ref, w1_ref, 3 * Cin) + b1_ref[...]
    h = group_norm(h, g1w_ref, g1b_ref)
    h = h * (scale + 1.0) + shift
    h = _silu_kernel(h)

    # ---------- block 2: conv3x3 -> GN -> SiLU ----------
    hb = h.astype(bf16).reshape(H, W, Cout)
    fill_col(col2_ref, lambda lo, hi: hb[:, lo:hi, :], Cout)
    h = conv3x3(col2_ref, w2_ref, 3 * Cout) + b2_ref[...]
    h = group_norm(h, g2w_ref, g2b_ref)
    h = _silu_kernel(h)

    # ---------- residual 1x1 conv + add ----------
    res = jnp.dot(x_ref[0].reshape(HW, Cin), wr_ref[...],
                  preferred_element_type=jnp.float32) + br_ref[...]
    o_ref[...] = (h + res).reshape(1, H, W, Cout)


def resnet_block(x, time_emb, params, *, groups=8):
    """x: (B, H, W, Cin) NHWC; time_emb: (B, T).  Returns (B, H, W, Cout) f32."""
    B, H, W, Cin = x.shape
    T = time_emb.shape[1]
    Cout = params["b1"].shape[0]
    gsize = Cout // groups
    bf16 = jnp.bfloat16

    x_bf = x.astype(bf16)                                        # no wrapper-side pad
    w1f = params["w1"].astype(bf16).reshape(3, 3 * Cin, Cout)    # (dy, dx*Cin+ci, co)
    w2f = params["w2"].astype(bf16).reshape(3, 3 * Cout, Cout)
    wrf = params["w_res"].astype(bf16)

    def row(v):
        return v.astype(jnp.float32).reshape(1, -1)

    wm = params["w_mlp"].astype(jnp.float32)
    bm = params["b_mlp"].astype(jnp.float32)
    ws, wh = wm[:, :Cout], wm[:, Cout:]                          # FiLM scale / shift
    bs, bh = bm[:Cout].reshape(1, Cout), bm[Cout:].reshape(1, Cout)

    gid = np.arange(Cout) // gsize
    gmat = jnp.asarray(
        (gid[:, None] == gid[None, :]).astype(np.float32) / float(H * W * gsize))

    def full(shape):
        return pl.BlockSpec(shape, lambda b, shape=shape: (0,) * len(shape))

    out = pl.pallas_call(
        _resnet_block_kernel,
        out_shape=jax.ShapeDtypeStruct((B, H, W, Cout), jnp.float32),
        grid_spec=pltpu.PrefetchScalarGridSpec(
            num_scalar_prefetch=0,
            grid=(B,),
            in_specs=[
                pl.BlockSpec((1, H, W, Cin), lambda b: (b, 0, 0, 0)),
                full((B, T)),
                full((3, 3 * Cin, Cout)),
                full((1, Cout)), full((1, Cout)), full((1, Cout)),
                full((3, 3 * Cout, Cout)),
                full((1, Cout)), full((1, Cout)), full((1, Cout)),
                full((T, Cout)), full((T, Cout)),
                full((1, Cout)), full((1, Cout)),
                full((Cin, Cout)), full((1, Cout)),
                full((Cout, Cout)),
            ],
            out_specs=pl.BlockSpec((1, H, W, Cout), lambda b: (b, 0, 0, 0)),
            scratch_shapes=[
                pltpu.VMEM((H + 2, W, 3 * Cin), bf16),
                pltpu.VMEM((H + 2, W, 3 * Cout), bf16),
            ],
        ),
        compiler_params=pltpu.CompilerParams(
            dimension_semantics=("parallel",)),
    )(
        x_bf, time_emb.astype(jnp.float32),
        w1f, row(params["b1"]), row(params["gn1_w"]), row(params["gn1_b"]),
        w2f, row(params["b2"]), row(params["gn2_w"]), row(params["gn2_b"]),
        ws, wh, bs, bh,
        wrf, row(params["b_res"]),
        gmat,
    )
    return out


def _reference(x, time_emb, params, *, groups=8):
    """Pure-JAX (f32) mirror of the PyTorch ResnetBlock forward (NHWC / HWIO)."""
    Cout = params["b1"].shape[0]
    Cin = x.shape[-1]

    def conv(h, w, b):
        y = jax.lax.conv_general_dilated(
            h, w, window_strides=(1, 1), padding="SAME",
            dimension_numbers=("NHWC", "HWIO", "NHWC"))
        return y + b.reshape(1, 1, 1, -1)

    def group_norm(h, gw, gb):
        B, H, W, C = h.shape
        hg = h.reshape(B, H, W, groups, C // groups)
        mean = hg.mean(axis=(1, 2, 4), keepdims=True)
        var = hg.var(axis=(1, 2, 4), keepdims=True)
        hg = (hg - mean) / jnp.sqrt(var + _EPS)
        return hg.reshape(B, H, W, C) * gw.reshape(1, 1, 1, -1) + gb.reshape(1, 1, 1, -1)

    ss = _silu_ref(time_emb) @ params["w_mlp"] + params["b_mlp"]   # (B, 2*Cout)
    scale, shift = ss[:, :Cout], ss[:, Cout:]

    h = conv(x, params["w1"], params["b1"])
    h = group_norm(h, params["gn1_w"], params["gn1_b"])
    h = h * (scale[:, None, None, :] + 1.0) + shift[:, None, None, :]
    h = _silu_ref(h)

    h = conv(h, params["w2"], params["b2"])
    h = group_norm(h, params["gn2_w"], params["gn2_b"])
    h = _silu_ref(h)

    res = conv(x, params["w_res"].reshape(1, 1, Cin, Cout), params["b_res"])
    return h + res


if __name__ == "__main__":
    B, H, W = 2, 16, 16
    Cin, Cout = 4, 16       # dim != dim_out  ->  real 1x1 res_conv
    T, G = 32, 8            # time_emb_dim=32, groups=8 (group size 2)

    key = jax.random.PRNGKey(0)
    ks = jax.random.split(key, 16)
    s = 0.3
    params = {
        "w1": s * jax.random.normal(ks[0], (3, 3, Cin, Cout), jnp.float32),
        "b1": s * jax.random.normal(ks[1], (Cout,), jnp.float32),
        "gn1_w": 1.0 + 0.1 * jax.random.normal(ks[2], (Cout,), jnp.float32),
        "gn1_b": 0.1 * jax.random.normal(ks[3], (Cout,), jnp.float32),
        "w2": s * jax.random.normal(ks[4], (3, 3, Cout, Cout), jnp.float32),
        "b2": s * jax.random.normal(ks[5], (Cout,), jnp.float32),
        "gn2_w": 1.0 + 0.1 * jax.random.normal(ks[6], (Cout,), jnp.float32),
        "gn2_b": 0.1 * jax.random.normal(ks[7], (Cout,), jnp.float32),
        "w_mlp": s * jax.random.normal(ks[8], (T, 2 * Cout), jnp.float32),
        "b_mlp": s * jax.random.normal(ks[9], (2 * Cout,), jnp.float32),
        "w_res": s * jax.random.normal(ks[10], (Cin, Cout), jnp.float32),
        "b_res": s * jax.random.normal(ks[11], (Cout,), jnp.float32),
    }
    x = jax.random.normal(ks[12], (B, H, W, Cin), jnp.float32)
    time_emb = jax.random.normal(ks[13], (B, T), jnp.float32)

    out = resnet_block(x, time_emb, params, groups=G)
    out = jax.block_until_ready(out)

    ref = _reference(x, time_emb, params, groups=G)
    assert out.shape == ref.shape == (B, H, W, Cout), out.shape
    max_err = float(jnp.max(jnp.abs(out - ref)))
    # bf16 MXU operands in the kernel vs an f32 reference -> looser tolerance.
    assert jnp.allclose(out, ref, atol=3e-2, rtol=3e-2), (
        f"mismatch vs reference, max_abs_err={max_err}")

    print("KERNEL_OK")
</pallas_src>

<mosaic_0001>
module attributes {stable_mosaic.version = 11 : i64} {
  func.func @_resnet_block_kernel(%arg0: i32, %arg1: memref<1x16x16x4xbf16, #tpu.memory_space<vmem>>, %arg2: memref<2x32xf32, #tpu.memory_space<vmem>>, %arg3: memref<3x12x16xbf16, #tpu.memory_space<vmem>>, %arg4: memref<1x16xf32, #tpu.memory_space<vmem>>, %arg5: memref<1x16xf32, #tpu.memory_space<vmem>>, %arg6: memref<1x16xf32, #tpu.memory_space<vmem>>, %arg7: memref<3x48x16xbf16, #tpu.memory_space<vmem>>, %arg8: memref<1x16xf32, #tpu.memory_space<vmem>>, %arg9: memref<1x16xf32, #tpu.memory_space<vmem>>, %arg10: memref<1x16xf32, #tpu.memory_space<vmem>>, %arg11: memref<32x16xf32, #tpu.memory_space<vmem>>, %arg12: memref<32x16xf32, #tpu.memory_space<vmem>>, %arg13: memref<1x16xf32, #tpu.memory_space<vmem>>, %arg14: memref<1x16xf32, #tpu.memory_space<vmem>>, %arg15: memref<4x16xbf16, #tpu.memory_space<vmem>>, %arg16: memref<1x16xf32, #tpu.memory_space<vmem>>, %arg17: memref<16x16xf32, #tpu.memory_space<vmem>>, %arg18: memref<1x16x16x16xf32, #tpu.memory_space<vmem>>, %arg19: memref<18x16x12xbf16, #tpu.memory_space<vmem>>, %arg20: memref<18x16x48xbf16, #tpu.memory_space<vmem>>) attributes {dimension_semantics = [#tpu.dimension_semantics<parallel>], iteration_bounds = array<i64: 2>, scalar_prefetch = 0 : i64, scratch_operands = 2 : i64, tpu.core_type = #tpu.core_type<tc>, window_params = [{transform_indices = @transform_0, window_bounds = array<i64: 1, 16, 16, 4>}, {pipeline_mode = #tpu.pipeline_mode<synchronous>, transform_indices = @transform_1, window_bounds = array<i64: 2, 32>}, {pipeline_mode = #tpu.pipeline_mode<synchronous>, transform_indices = @transform_2, window_bounds = array<i64: 3, 12, 16>}, {pipeline_mode = #tpu.pipeline_mode<synchronous>, transform_indices = @transform_3, window_bounds = array<i64: 1, 16>}, {pipeline_mode = #tpu.pipeline_mode<synchronous>, transform_indices = @transform_4, window_bounds = array<i64: 1, 16>}, {pipeline_mode = #tpu.pipeline_mode<synchronous>, transform_indices = @transform_5, window_bounds = array<i64: 1, 16>}, {pipeline_mode = #tpu.pipeline_mode<synchronous>, transform_indices = @transform_6, window_bounds = array<i64: 3, 48, 16>}, {pipeline_mode = #tpu.pipeline_mode<synchronous>, transform_indices = @transform_7, window_bounds = array<i64: 1, 16>}, {pipeline_mode = #tpu.pipeline_mode<synchronous>, transform_indices = @transform_8, window_bounds = array<i64: 1, 16>}, {pipeline_mode = #tpu.pipeline_mode<synchronous>, transform_indices = @transform_9, window_bounds = array<i64: 1, 16>}, {pipeline_mode = #tpu.pipeline_mode<synchronous>, transform_indices = @transform_10, window_bounds = array<i64: 32, 16>}, {pipeline_mode = #tpu.pipeline_mode<synchronous>, transform_indices = @transform_11, window_bounds = array<i64: 32, 16>}, {pipeline_mode = #tpu.pipeline_mode<synchronous>, transform_indices = @transform_12, window_bounds = array<i64: 1, 16>}, {pipeline_mode = #tpu.pipeline_mode<synchronous>, transform_indices = @transform_13, window_bounds = array<i64: 1, 16>}, {pipeline_mode = #tpu.pipeline_mode<synchronous>, transform_indices = @transform_14, window_bounds = array<i64: 4, 16>}, {pipeline_mode = #tpu.pipeline_mode<synchronous>, transform_indices = @transform_15, window_bounds = array<i64: 1, 16>}, {pipeline_mode = #tpu.pipeline_mode<synchronous>, transform_indices = @transform_16, window_bounds = array<i64: 16, 16>}, {transform_indices = @transform_17, window_bounds = array<i64: 1, 16, 16, 16>}]} {
    %0 = arith.index_cast %arg0 : i32 to index
    %c0 = arith.constant 0 : index
    %1 = vector.load %arg2[%0, %c0] : memref<2x32xf32, #tpu.memory_space<vmem>>, vector<1x32xf32>
    %cst = arith.constant 5.000000e-01 : f32
    %2 = vector.broadcast %cst : f32 to vector<1x32xf32>
    %3 = arith.mulf %2, %1 : vector<1x32xf32>
    %4 = math.tanh %3 : vector<1x32xf32>
    %cst_0 = arith.constant 5.000000e-01 : f32
    %5 = vector.broadcast %cst_0 : f32 to vector<1x32xf32>
    %6 = arith.mulf %5, %4 : vector<1x32xf32>
    %cst_1 = arith.constant 5.000000e-01 : f32
    %7 = vector.broadcast %cst_1 : f32 to vector<1x32xf32>
    %8 = arith.addf %6, %7 : vector<1x32xf32>
    %9 = arith.mulf %1, %8 : vector<1x32xf32>
    %c0_2 = arith.constant 0 : index
    %c0_3 = arith.constant 0 : index
    %10 = vector.load %arg11[%c0_2, %c0_3] : memref<32x16xf32, #tpu.memory_space<vmem>>, vector<32x16xf32>
    %cst_4 = arith.constant dense<0.000000e+00> : vector<1x16xf32>
    %11 = tpu.matmul %9, %10, %cst_4 {dimension_numbers = #tpu.dot_dimension_numbers<[1], [0], [0], [1], [0, 0, 1, 1], [], []>} : vector<1x32xf32>, vector<32x16xf32>, vector<1x16xf32> -> vector<1x16xf32>
    %c0_5 = arith.constant 0 : index
    %c0_6 = arith.constant 0 : index
    %12 = vector.load %arg13[%c0_5, %c0_6] : memref<1x16xf32, #tpu.memory_space<vmem>>, vector<1x16xf32>
    %13 = arith.addf %11, %12 : vector<1x16xf32>
    %c0_7 = arith.constant 0 : index
    %c0_8 = arith.constant 0 : index
    %14 = vector.load %arg12[%c0_7, %c0_8] : memref<32x16xf32, #tpu.memory_space<vmem>>, vector<32x16xf32>
    %cst_9 = arith.constant dense<0.000000e+00> : vector<1x16xf32>
    %15 = tpu.matmul %9, %14, %cst_9 {dimension_numbers = #tpu.dot_dimension_numbers<[1], [0], [0], [1], [0, 0, 1, 1], [], []>} : vector<1x32xf32>, vector<32x16xf32>, vector<1x16xf32> -> vector<1x16xf32>
    %c0_10 = arith.constant 0 : index
    %c0_11 = arith.constant 0 : index
    %16 = vector.load %arg14[%c0_10, %c0_11] : memref<1x16xf32, #tpu.memory_space<vmem>>, vector<1x16xf32>
    %17 = arith.addf %15, %16 : vector<1x16xf32>
    %cst_12 = arith.constant 0.000000e+00 : bf16
    %18 = vector.broadcast %cst_12 : bf16 to vector<16x12xbf16>
    %c0_13 = arith.constant 0 : index
    %c0_14 = arith.constant 0 : index
    %c0_15 = arith.constant 0 : index
    %19 = vector.load %arg19[%c0_13, %c0_14, %c0_15] : memref<18x16x12xbf16, #tpu.memory_space<vmem>>, vector<1x16x12xbf16>
    %20 = vector.shape_cast %19 : vector<1x16x12xbf16> to vector<16x12xbf16>
    %21 = vector.shape_cast %18 : vector<16x12xbf16> to vector<1x16x12xbf16>
    tpu.vector_store %arg19[%c0_13, %c0_14, %c0_15], %21 {strides = array<i32>} : memref<18x16x12xbf16, #tpu.memory_space<vmem>>, vector<1x16x12xbf16>,
    %cst_16 = arith.constant 0.000000e+00 : bf16
    %22 = vector.broadcast %cst_16 : bf16 to vector<16x12xbf16>
    %c17 = arith.constant 17 : index
    %c0_17 = arith.constant 0 : index
    %c0_18 = arith.constant 0 : index
    %23 = vector.load %arg19[%c17, %c0_17, %c0_18] : memref<18x16x12xbf16, #tpu.memory_space<vmem>>, vector<1x16x12xbf16>
    %24 = vector.shape_cast %23 : vector<1x16x12xbf16> to vector<16x12xbf16>
    %25 = vector.shape_cast %22 : vector<16x12xbf16> to vector<1x16x12xbf16>
    tpu.vector_store %arg19[%c17, %c0_17, %c0_18], %25 {strides = array<i32>} : memref<18x16x12xbf16, #tpu.memory_space<vmem>>, vector<1x16x12xbf16>,
    %cst_19 = arith.constant 0.000000e+00 : bf16
    %26 = vector.broadcast %cst_19 : bf16 to vector<16x1x4xbf16>
    %c1 = arith.constant 1 : index
    %c0_20 = arith.constant 0 : index
    %c0_21 = arith.constant 0 : index
    %27 = vector.load %arg19[%c1, %c0_20, %c0_21] : memref<18x16x12xbf16, #tpu.memory_space<vmem>>, vector<16x1x4xbf16>
    tpu.vector_store %arg19[%c1, %c0_20, %c0_21], %26 {strides = array<i32>} : memref<18x16x12xbf16, #tpu.memory_space<vmem>>, vector<16x1x4xbf16>,
    %cst_22 = arith.constant 0.000000e+00 : bf16
    %28 = vector.broadcast %cst_22 : bf16 to vector<16x1x4xbf16>
    %c1_23 = arith.constant 1 : index
    %c15 = arith.constant 15 : index
    %c8 = arith.constant 8 : index
    %29 = vector.load %arg19[%c1_23, %c15, %c8] : memref<18x16x12xbf16, #tpu.memory_space<vmem>>, vector<16x1x4xbf16>
    tpu.vector_store %arg19[%c1_23, %c15, %c8], %28 {strides = array<i32>} : memref<18x16x12xbf16, #tpu.memory_space<vmem>>, vector<16x1x4xbf16>,
    %c0_24 = arith.constant 0 : index
    %c0_25 = arith.constant 0 : index
    %c0_26 = arith.constant 0 : index
    %c0_27 = arith.constant 0 : index
    %30 = vector.load %arg1[%c0_24, %c0_25, %c0_26, %c0_27] : memref<1x16x16x4xbf16, #tpu.memory_space<vmem>>, vector<1x16x15x4xbf16>
    %31 = vector.shape_cast %30 : vector<1x16x15x4xbf16> to vector<16x15x4xbf16>
    %c1_28 = arith.constant 1 : index
    %c1_29 = arith.constant 1 : index
    %c0_30 = arith.constant 0 : index
    %32 = vector.load %arg19[%c1_28, %c1_29, %c0_30] : memref<18x16x12xbf16, #tpu.memory_space<vmem>>, vector<16x15x4xbf16>
    tpu.vector_store %arg19[%c1_28, %c1_29, %c0_30], %31 {strides = array<i32>} : memref<18x16x12xbf16, #tpu.memory_space<vmem>>, vector<16x15x4xbf16>,
    %c0_31 = arith.constant 0 : index
    %c0_32 = arith.constant 0 : index
    %c0_33 = arith.constant 0 : index
    %c0_34 = arith.constant 0 : index
    %33 = vector.load %arg1[%c0_31, %c0_32, %c0_33, %c0_34] : memref<1x16x16x4xbf16, #tpu.memory_space<vmem>>, vector<1x16x16x4xbf16>
    %34 = vector.shape_cast %33 : vector<1x16x16x4xbf16> to vector<16x16x4xbf16>
    %c1_35 = arith.constant 1 : index
    %c0_36 = arith.constant 0 : index
    %c4 = arith.constant 4 : index
    %35 = vector.load %arg19[%c1_35, %c0_36, %c4] : memref<18x16x12xbf16, #tpu.memory_space<vmem>>, vector<16x16x4xbf16>
    tpu.vector_store %arg19[%c1_35, %c0_36, %c4], %34 {strides = array<i32>} : memref<18x16x12xbf16, #tpu.memory_space<vmem>>, vector<16x16x4xbf16>,
    %c0_37 = arith.constant 0 : index
    %c0_38 = arith.constant 0 : index
    %c1_39 = arith.constant 1 : index
    %c0_40 = arith.constant 0 : index
    %36 = vector.load %arg1[%c0_37, %c0_38, %c1_39, %c0_40] : memref<1x16x16x4xbf16, #tpu.memory_space<vmem>>, vector<1x16x15x4xbf16>
    %37 = vector.shape_cast %36 : vector<1x16x15x4xbf16> to vector<16x15x4xbf16>
    %c1_41 = arith.constant 1 : index
    %c0_42 = arith.constant 0 : index
    %c8_43 = arith.constant 8 : index
    %38 = vector.load %arg19[%c1_41, %c0_42, %c8_43] : memref<18x16x12xbf16, #tpu.memory_space<vmem>>, vector<16x15x4xbf16>
    tpu.vector_store %arg19[%c1_41, %c0_42, %c8_43], %37 {strides = array<i32>} : memref<18x16x12xbf16, #tpu.memory_space<vmem>>, vector<16x15x4xbf16>,
    %cst_44 = arith.constant 0.000000e+00 : f32
    %39 = vector.broadcast %cst_44 : f32 to vector<256x16xf32>
    %c0_45 = arith.constant 0 : index
    %c0_46 = arith.constant 0 : index
    %c0_47 = arith.constant 0 : index
    %40 = vector.load %arg19[%c0_45, %c0_46, %c0_47] : memref<18x16x12xbf16, #tpu.memory_space<vmem>>, vector<16x16x12xbf16>
    %41 = vector.shape_cast %40 : vector<16x16x12xbf16> to vector<256x12xbf16>
    %c0_48 = arith.constant 0 : index
    %c0_49 = arith.constant 0 : index
    %c0_50 = arith.constant 0 : index
    %42 = vector.load %arg3[%c0_48, %c0_49, %c0_50] : memref<3x12x16xbf16, #tpu.memory_space<vmem>>, vector<1x12x16xbf16>
    %43 = vector.shape_cast %42 : vector<1x12x16xbf16> to vector<12x16xbf16>
    %cst_51 = arith.constant dense<0.000000e+00> : vector<256x16xf32>
    %44 = tpu.matmul %41, %43, %cst_51 {dimension_numbers = #tpu.dot_dimension_numbers<[1], [0], [0], [1], [0, 0, 1, 1], [], []>} : vector<256x12xbf16>, vector<12x16xbf16>, vector<256x16xf32> -> vector<256x16xf32>
    %45 = arith.addf %39, %44 : vector<256x16xf32>
    %c1_52 = arith.constant 1 : index
    %c0_53 = arith.constant 0 : index
    %c0_54 = arith.constant 0 : index
    %46 = vector.load %arg19[%c1_52, %c0_53, %c0_54] : memref<18x16x12xbf16, #tpu.memory_space<vmem>>, vector<16x16x12xbf16>
    %47 = vector.shape_cast %46 : vector<16x16x12xbf16> to vector<256x12xbf16>
    %c1_55 = arith.constant 1 : index
    %c0_56 = arith.constant 0 : index
    %c0_57 = arith.constant 0 : index
    %48 = vector.load %arg3[%c1_55, %c0_56, %c0_57] : memref<3x12x16xbf16, #tpu.memory_space<vmem>>, vector<1x12x16xbf16>
    %49 = vector.shape_cast %48 : vector<1x12x16xbf16> to vector<12x16xbf16>
    %cst_58 = arith.constant dense<0.000000e+00> : vector<256x16xf32>
    %50 = tpu.matmul %47, %49, %cst_58 {dimension_numbers = #tpu.dot_dimension_numbers<[1], [0], [0], [1], [0, 0, 1, 1], [], []>} : vector<256x12xbf16>, vector<12x16xbf16>, vector<256x16xf32> -> vector<256x16xf32>
    %51 = arith.addf %45, %50 : vector<256x16xf32>
    %c2 = arith.constant 2 : index
    %c0_59 = arith.constant 0 : index
    %c0_60 = arith.constant 0 : index
    %52 = vector.load %arg19[%c2, %c0_59, %c0_60] : memref<18x16x12xbf16, #tpu.memory_space<vmem>>, vector<16x16x12xbf16>
    %53 = vector.shape_cast %52 : vector<16x16x12xbf16> to vector<256x12xbf16>
    %c2_61 = arith.constant 2 : index
    %c0_62 = arith.constant 0 : index
    %c0_63 = arith.constant 0 : index
    %54 = vector.load %arg3[%c2_61, %c0_62, %c0_63] : memref<3x12x16xbf16, #tpu.memory_space<vmem>>, vector<1x12x16xbf16>
    %55 = vector.shape_cast %54 : vector<1x12x16xbf16> to vector<12x16xbf16>
    %cst_64 = arith.constant dense<0.000000e+00> : vector<256x16xf32>
    %56 = tpu.matmul %53, %55, %cst_64 {dimension_numbers = #tpu.dot_dimension_numbers<[1], [0], [0], [1], [0, 0, 1, 1], [], []>} : vector<256x12xbf16>, vector<12x16xbf16>, vector<256x16xf32> -> vector<256x16xf32>
    %57 = arith.addf %51, %56 : vector<256x16xf32>
    %c0_65 = arith.constant 0 : index
    %c0_66 = arith.constant 0 : index
    %58 = vector.load %arg4[%c0_65, %c0_66] : memref<1x16xf32, #tpu.memory_space<vmem>>, vector<1x16xf32>
    %59 = vector.broadcast %58 : vector<1x16xf32> to vector<256x16xf32>
    %60 = arith.addf %57, %59 : vector<256x16xf32>
    %c0_67 = arith.constant 0 : index
    %c0_68 = arith.constant 0 : index
    %61 = vector.load %arg17[%c0_67, %c0_68] : memref<16x16xf32, #tpu.memory_space<vmem>>, vector<16x16xf32>
    %cst_69 = arith.constant dense<0.000000e+00> : vector<16xf32>
    %62 = vector.multi_reduction <add>, %60, %cst_69 [0] : vector<256x16xf32> to vector<16xf32>
    %63 = vector.shape_cast %62 : vector<16xf32> to vector<1x16xf32>
    %cst_70 = arith.constant dense<0.000000e+00> : vector<1x16xf32>
    %64 = tpu.matmul %63, %61, %cst_70 {dimension_numbers = #tpu.dot_dimension_numbers<[1], [0], [0], [1], [0, 0, 1, 1], [], []>} : vector<1x16xf32>, vector<16x16xf32>, vector<1x16xf32> -> vector<1x16xf32>
    %65 = arith.mulf %60, %60 : vector<256x16xf32>
    %cst_71 = arith.constant dense<0.000000e+00> : vector<16xf32>
    %66 = vector.multi_reduction <add>, %65, %cst_71 [0] : vector<256x16xf32> to vector<16xf32>
    %67 = vector.shape_cast %66 : vector<16xf32> to vector<1x16xf32>
    %cst_72 = arith.constant dense<0.000000e+00> : vector<1x16xf32>
    %68 = tpu.matmul %67, %61, %cst_72 {dimension_numbers = #tpu.dot_dimension_numbers<[1], [0], [0], [1], [0, 0, 1, 1], [], []>} : vector<1x16xf32>, vector<16x16xf32>, vector<1x16xf32> -> vector<1x16xf32>
    %69 = arith.mulf %64, %64 : vector<1x16xf32>
    %70 = arith.subf %68, %69 : vector<1x16xf32>
    %cst_73 = arith.constant 0.000000e+00 : f32
    %71 = vector.broadcast %cst_73 : f32 to vector<1x16xf32>
    %72 = arith.maximumf %70, %71 : vector<1x16xf32>
    %cst_74 = arith.constant 9.99999974E-6 : f32
    %73 = vector.broadcast %cst_74 : f32 to vector<1x16xf32>
    %74 = arith.addf %72, %73 : vector<1x16xf32>
    %75 = math.rsqrt %74 : vector<1x16xf32>
    %76 = vector.broadcast %64 : vector<1x16xf32> to vector<256x16xf32>
    %77 = arith.subf %60, %76 : vector<256x16xf32>
    %c0_75 = arith.constant 0 : index
    %c0_76 = arith.constant 0 : index
    %78 = vector.load %arg5[%c0_75, %c0_76] : memref<1x16xf32, #tpu.memory_space<vmem>>, vector<1x16xf32>
    %79 = arith.mulf %75, %78 : vector<1x16xf32>
    %80 = vector.broadcast %79 : vector<1x16xf32> to vector<256x16xf32>
    %81 = arith.mulf %77, %80 : vector<256x16xf32>
    %c0_77 = arith.constant 0 : index
    %c0_78 = arith.constant 0 : index
    %82 = vector.load %arg6[%c0_77, %c0_78] : memref<1x16xf32, #tpu.memory_space<vmem>>, vector<1x16xf32>
    %83 = vector.broadcast %82 : vector<1x16xf32> to vector<256x16xf32>
    %84 = arith.addf %81, %83 : vector<256x16xf32>
    %cst_79 = arith.constant 1.000000e+00 : f32
    %85 = vector.broadcast %cst_79 : f32 to vector<1x16xf32>
    %86 = arith.addf %13, %85 : vector<1x16xf32>
    %87 = vector.broadcast %86 : vector<1x16xf32> to vector<256x16xf32>
    %88 = arith.mulf %84, %87 : vector<256x16xf32>
    %89 = vector.broadcast %17 : vector<1x16xf32> to vector<256x16xf32>
    %90 = arith.addf %88, %89 : vector<256x16xf32>
    %cst_80 = arith.constant 5.000000e-01 : f32
    %91 = vector.broadcast %cst_80 : f32 to vector<256x16xf32>
    %92 = arith.mulf %91, %90 : vector<256x16xf32>
    %93 = math.tanh %92 : vector<256x16xf32>
    %cst_81 = arith.constant 5.000000e-01 : f32
    %94 = vector.broadcast %cst_81 : f32 to vector<256x16xf32>
    %95 = arith.mulf %94, %93 : vector<256x16xf32>
    %cst_82 = arith.constant 5.000000e-01 : f32
    %96 = vector.broadcast %cst_82 : f32 to vector<256x16xf32>
    %97 = arith.addf %95, %96 : vector<256x16xf32>
    %98 = arith.mulf %90, %97 : vector<256x16xf32>
    %99 = arith.truncf %98 : vector<256x16xf32> to vector<256x16xbf16>
    %100 = vector.shape_cast %99 : vector<256x16xbf16> to vector<16x16x16xbf16>
    %cst_83 = arith.constant 0.000000e+00 : bf16
    %101 = vector.broadcast %cst_83 : bf16 to vector<16x48xbf16>
    %c0_84 = arith.constant 0 : index
    %c0_85 = arith.constant 0 : index
    %c0_86 = arith.constant 0 : index
    %102 = vector.load %arg20[%c0_84, %c0_85, %c0_86] : memref<18x16x48xbf16, #tpu.memory_space<vmem>>, vector<1x16x48xbf16>
    %103 = vector.shape_cast %102 : vector<1x16x48xbf16> to vector<16x48xbf16>
    %104 = vector.shape_cast %101 : vector<16x48xbf16> to vector<1x16x48xbf16>
    tpu.vector_store %arg20[%c0_84, %c0_85, %c0_86], %104 {strides = array<i32>} : memref<18x16x48xbf16, #tpu.memory_space<vmem>>, vector<1x16x48xbf16>,
    %cst_87 = arith.constant 0.000000e+00 : bf16
    %105 = vector.broadcast %cst_87 : bf16 to vector<16x48xbf16>
    %c17_88 = arith.constant 17 : index
    %c0_89 = arith.constant 0 : index
    %c0_90 = arith.constant 0 : index
    %106 = vector.load %arg20[%c17_88, %c0_89, %c0_90] : memref<18x16x48xbf16, #tpu.memory_space<vmem>>, vector<1x16x48xbf16>
    %107 = vector.shape_cast %106 : vector<1x16x48xbf16> to vector<16x48xbf16>
    %108 = vector.shape_cast %105 : vector<16x48xbf16> to vector<1x16x48xbf16>
    tpu.vector_store %arg20[%c17_88, %c0_89, %c0_90], %108 {strides = array<i32>} : memref<18x16x48xbf16, #tpu.memory_space<vmem>>, vector<1x16x48xbf16>,
    %cst_91 = arith.constant 0.000000e+00 : bf16
    %109 = vector.broadcast %cst_91 : bf16 to vector<16x1x16xbf16>
    %c1_92 = arith.constant 1 : index
    %c0_93 = arith.constant 0 : index
    %c0_94 = arith.constant 0 : index
    %110 = vector.load %arg20[%c1_92, %c0_93, %c0_94] : memref<18x16x48xbf16, #tpu.memory_space<vmem>>, vector<16x1x16xbf16>
    tpu.vector_store %arg20[%c1_92, %c0_93, %c0_94], %109 {strides = array<i32>} : memref<18x16x48xbf16, #tpu.memory_space<vmem>>, vector<16x1x16xbf16>,
    %cst_95 = arith.constant 0.000000e+00 : bf16
    %111 = vector.broadcast %cst_95 : bf16 to vector<16x1x16xbf16>
    %c1_96 = arith.constant 1 : index
    %c15_97 = arith.constant 15 : index
    %c32 = arith.constant 32 : index
    %112 = vector.load %arg20[%c1_96, %c15_97, %c32] : memref<18x16x48xbf16, #tpu.memory_space<vmem>>, vector<16x1x16xbf16>
    tpu.vector_store %arg20[%c1_96, %c15_97, %c32], %111 {strides = array<i32>} : memref<18x16x48xbf16, #tpu.memory_space<vmem>>, vector<16x1x16xbf16>,
    %113 = vector.extract_strided_slice %100 {offsets = [0, 0, 0], sizes = [16, 15, 16], strides = [1, 1, 1]} : vector<16x16x16xbf16> to vector<16x15x16xbf16>
    %c1_98 = arith.constant 1 : index
    %c1_99 = arith.constant 1 : index
    %c0_100 = arith.constant 0 : index
    %114 = vector.load %arg20[%c1_98, %c1_99, %c0_100] : memref<18x16x48xbf16, #tpu.memory_space<vmem>>, vector<16x15x16xbf16>
    tpu.vector_store %arg20[%c1_98, %c1_99, %c0_100], %113 {strides = array<i32>} : memref<18x16x48xbf16, #tpu.memory_space<vmem>>, vector<16x15x16xbf16>,
    %c1_101 = arith.constant 1 : index
    %c0_102 = arith.constant 0 : index
    %c16 = arith.constant 16 : index
    %115 = vector.load %arg20[%c1_101, %c0_102, %c16] : memref<18x16x48xbf16, #tpu.memory_space<vmem>>, vector<16x16x16xbf16>
    tpu.vector_store %arg20[%c1_101, %c0_102, %c16], %100 {strides = array<i32>} : memref<18x16x48xbf16, #tpu.memory_space<vmem>>, vector<16x16x16xbf16>,
    %116 = vector.extract_strided_slice %100 {offsets = [0, 1, 0], sizes = [16, 15, 16], strides = [1, 1, 1]} : vector<16x16x16xbf16> to vector<16x15x16xbf16>
    %c1_103 = arith.constant 1 : index
    %c0_104 = arith.constant 0 : index
    %c32_105 = arith.constant 32 : index
    %117 = vector.load %arg20[%c1_103, %c0_104, %c32_105] : memref<18x16x48xbf16, #tpu.memory_space<vmem>>, vector<16x15x16xbf16>
    tpu.vector_store %arg20[%c1_103, %c0_104, %c32_105], %116 {strides = array<i32>} : memref<18x16x48xbf16, #tpu.memory_space<vmem>>, vector<16x15x16xbf16>,
    %cst_106 = arith.constant 0.000000e+00 : f32
    %118 = vector.broadcast %cst_106 : f32 to vector<256x16xf32>
    %c0_107 = arith.constant 0 : index
    %c0_108 = arith.constant 0 : index
    %c0_109 = arith.constant 0 : index
    %119 = vector.load %arg20[%c0_107, %c0_108, %c0_109] : memref<18x16x48xbf16, #tpu.memory_space<vmem>>, vector<16x16x48xbf16>
    %120 = vector.shape_cast %119 : vector<16x16x48xbf16> to vector<256x48xbf16>
    %c0_110 = arith.constant 0 : index
    %c0_111 = arith.constant 0 : index
    %c0_112 = arith.constant 0 : index
    %121 = vector.load %arg7[%c0_110, %c0_111, %c0_112] : memref<3x48x16xbf16, #tpu.memory_space<vmem>>, vector<1x48x16xbf16>
    %122 = vector.shape_cast %121 : vector<1x48x16xbf16> to vector<48x16xbf16>
    %cst_113 = arith.constant dense<0.000000e+00> : vector<256x16xf32>
    %123 = tpu.matmul %120, %122, %cst_113 {dimension_numbers = #tpu.dot_dimension_numbers<[1], [0], [0], [1], [0, 0, 1, 1], [], []>} : vector<256x48xbf16>, vector<48x16xbf16>, vector<256x16xf32> -> vector<256x16xf32>
    %124 = arith.addf %118, %123 : vector<256x16xf32>
    %c1_114 = arith.constant 1 : index
    %c0_115 = arith.constant 0 : index
    %c0_116 = arith.constant 0 : index
    %125 = vector.load %arg20[%c1_114, %c0_115, %c0_116] : memref<18x16x48xbf16, #tpu.memory_space<vmem>>, vector<16x16x48xbf16>
    %126 = vector.shape_cast %125 : vector<16x16x48xbf16> to vector<256x48xbf16>
    %c1_117 = arith.constant 1 : index
    %c0_118 = arith.constant 0 : index
    %c0_119 = arith.constant 0 : index
    %127 = vector.load %arg7[%c1_117, %c0_118, %c0_119] : memref<3x48x16xbf16, #tpu.memory_space<vmem>>, vector<1x48x16xbf16>
    %128 = vector.shape_cast %127 : vector<1x48x16xbf16> to vector<48x16xbf16>
    %cst_120 = arith.constant dense<0.000000e+00> : vector<256x16xf32>
    %129 = tpu.matmul %126, %128, %cst_120 {dimension_numbers = #tpu.dot_dimension_numbers<[1], [0], [0], [1], [0, 0, 1, 1], [], []>} : vector<256x48xbf16>, vector<48x16xbf16>, vector<256x16xf32> -> vector<256x16xf32>
    %130 = arith.addf %124, %129 : vector<256x16xf32>
    %c2_121 = arith.constant 2 : index
    %c0_122 = arith.constant 0 : index
    %c0_123 = arith.constant 0 : index
    %131 = vector.load %arg20[%c2_121, %c0_122, %c0_123] : memref<18x16x48xbf16, #tpu.memory_space<vmem>>, vector<16x16x48xbf16>
    %132 = vector.shape_cast %131 : vector<16x16x48xbf16> to vector<256x48xbf16>
    %c2_124 = arith.constant 2 : index
    %c0_125 = arith.constant 0 : index
    %c0_126 = arith.constant 0 : index
    %133 = vector.load %arg7[%c2_124, %c0_125, %c0_126] : memref<3x48x16xbf16, #tpu.memory_space<vmem>>, vector<1x48x16xbf16>
    %134 = vector.shape_cast %133 : vector<1x48x16xbf16> to vector<48x16xbf16>
    %cst_127 = arith.constant dense<0.000000e+00> : vector<256x16xf32>
    %135 = tpu.matmul %132, %134, %cst_127 {dimension_numbers = #tpu.dot_dimension_numbers<[1], [0], [0], [1], [0, 0, 1, 1], [], []>} : vector<256x48xbf16>, vector<48x16xbf16>, vector<256x16xf32> -> vector<256x16xf32>
    %136 = arith.addf %130, %135 : vector<256x16xf32>
    %c0_128 = arith.constant 0 : index
    %c0_129 = arith.constant 0 : index
    %137 = vector.load %arg8[%c0_128, %c0_129] : memref<1x16xf32, #tpu.memory_space<vmem>>, vector<1x16xf32>
    %138 = vector.broadcast %137 : vector<1x16xf32> to vector<256x16xf32>
    %139 = arith.addf %136, %138 : vector<256x16xf32>
    %c0_130 = arith.constant 0 : index
    %c0_131 = arith.constant 0 : index
    %140 = vector.load %arg17[%c0_130, %c0_131] : memref<16x16xf32, #tpu.memory_space<vmem>>, vector<16x16xf32>
    %cst_132 = arith.constant dense<0.000000e+00> : vector<16xf32>
    %141 = vector.multi_reduction <add>, %139, %cst_132 [0] : vector<256x16xf32> to vector<16xf32>
    %142 = vector.shape_cast %141 : vector<16xf32> to vector<1x16xf32>
    %cst_133 = arith.constant dense<0.000000e+00> : vector<1x16xf32>
    %143 = tpu.matmul %142, %140, %cst_133 {dimension_numbers = #tpu.dot_dimension_numbers<[1], [0], [0], [1], [0, 0, 1, 1], [], []>} : vector<1x16xf32>, vector<16x16xf32>, vector<1x16xf32> -> vector<1x16xf32>
    %144 = arith.mulf %139, %139 : vector<256x16xf32>
    %cst_134 = arith.constant dense<0.000000e+00> : vector<16xf32>
    %145 = vector.multi_reduction <add>, %144, %cst_134 [0] : vector<256x16xf32> to vector<16xf32>
    %146 = vector.shape_cast %145 : vector<16xf32> to vector<1x16xf32>
    %cst_135 = arith.constant dense<0.000000e+00> : vector<1x16xf32>
    %147 = tpu.matmul %146, %140, %cst_135 {dimension_numbers = #tpu.dot_dimension_numbers<[1], [0], [0], [1], [0, 0, 1, 1], [], []>} : vector<1x16xf32>, vector<16x16xf32>, vector<1x16xf32> -> vector<1x16xf32>
    %148 = arith.mulf %143, %143 : vector<1x16xf32>
    %149 = arith.subf %147, %148 : vector<1x16xf32>
    %cst_136 = arith.constant 0.000000e+00 : f32
    %150 = vector.broadcast %cst_136 : f32 to vector<1x16xf32>
    %151 = arith.maximumf %149, %150 : vector<1x16xf32>
    %cst_137 = arith.constant 9.99999974E-6 : f32
    %152 = vector.broadcast %cst_137 : f32 to vector<1x16xf32>
    %153 = arith.addf %151, %152 : vector<1x16xf32>
    %154 = math.rsqrt %153 : vector<1x16xf32>
    %155 = vector.broadcast %143 : vector<1x16xf32> to vector<256x16xf32>
    %156 = arith.subf %139, %155 : vector<256x16xf32>
    %c0_138 = arith.constant 0 : index
    %c0_139 = arith.constant 0 : index
    %157 = vector.load %arg9[%c0_138, %c0_139] : memref<1x16xf32, #tpu.memory_space<vmem>>, vector<1x16xf32>
    %158 = arith.mulf %154, %157 : vector<1x16xf32>
    %159 = vector.broadcast %158 : vector<1x16xf32> to vector<256x16xf32>
    %160 = arith.mulf %156, %159 : vector<256x16xf32>
    %c0_140 = arith.constant 0 : index
    %c0_141 = arith.constant 0 : index
    %161 = vector.load %arg10[%c0_140, %c0_141] : memref<1x16xf32, #tpu.memory_space<vmem>>, vector<1x16xf32>
    %162 = vector.broadcast %161 : vector<1x16xf32> to vector<256x16xf32>
    %163 = arith.addf %160, %162 : vector<256x16xf32>
    %cst_142 = arith.constant 5.000000e-01 : f32
    %164 = vector.broadcast %cst_142 : f32 to vector<256x16xf32>
    %165 = arith.mulf %164, %163 : vector<256x16xf32>
    %166 = math.tanh %165 : vector<256x16xf32>
    %cst_143 = arith.constant 5.000000e-01 : f32
    %167 = vector.broadcast %cst_143 : f32 to vector<256x16xf32>
    %168 = arith.mulf %167, %166 : vector<256x16xf32>
    %cst_144 = arith.constant 5.000000e-01 : f32
    %169 = vector.broadcast %cst_144 : f32 to vector<256x16xf32>
    %170 = arith.addf %168, %169 : vector<256x16xf32>
    %171 = arith.mulf %163, %170 : vector<256x16xf32>
    %c0_145 = arith.constant 0 : index
    %c0_146 = arith.constant 0 : index
    %c0_147 = arith.constant 0 : index
    %c0_148 = arith.constant 0 : index
    %172 = vector.load %arg1[%c0_145, %c0_146, %c0_147, %c0_148] : memref<1x16x16x4xbf16, #tpu.memory_space<vmem>>, vector<1x16x16x4xbf16>
    %173 = vector.shape_cast %172 : vector<1x16x16x4xbf16> to vector<16x16x4xbf16>
    %174 = vector.shape_cast %173 : vector<16x16x4xbf16> to vector<256x4xbf16>
    %c0_149 = arith.constant 0 : index
    %c0_150 = arith.constant 0 : index
    %175 = vector.load %arg15[%c0_149, %c0_150] : memref<4x16xbf16, #tpu.memory_space<vmem>>, vector<4x16xbf16>
    %cst_151 = arith.constant dense<0.000000e+00> : vector<256x16xf32>
    %176 = tpu.matmul %174, %175, %cst_151 {dimension_numbers = #tpu.dot_dimension_numbers<[1], [0], [0], [1], [0, 0, 1, 1], [], []>} : vector<256x4xbf16>, vector<4x16xbf16>, vector<256x16xf32> -> vector<256x16xf32>
    %c0_152 = arith.constant 0 : index
    %c0_153 = arith.constant 0 : index
    %177 = vector.load %arg16[%c0_152, %c0_153] : memref<1x16xf32, #tpu.memory_space<vmem>>, vector<1x16xf32>
    %178 = vector.broadcast %177 : vector<1x16xf32> to vector<256x16xf32>
    %179 = arith.addf %176, %178 : vector<256x16xf32>
    %180 = arith.addf %171, %179 : vector<256x16xf32>
    %181 = vector.shape_cast %180 : vector<256x16xf32> to vector<1x16x16x16xf32>
    %c0_154 = arith.constant 0 : index
    %c0_155 = arith.constant 0 : index
    %c0_156 = arith.constant 0 : index
    %c0_157 = arith.constant 0 : index
    %182 = vector.load %arg18[%c0_154, %c0_155, %c0_156, %c0_157] : memref<1x16x16x16xf32, #tpu.memory_space<vmem>>, vector<1x16x16x16xf32>
    tpu.vector_store %arg18[%c0_154, %c0_155, %c0_156, %c0_157], %181 {strides = array<i32>} : memref<1x16x16x16xf32, #tpu.memory_space<vmem>>, vector<1x16x16x16xf32>,
    return
  }
  func.func @transform_0(%arg0: i32) -> (i32, i32, i32, i32) {
    %c0_i32 = arith.constant 0 : i32
    %c0_i32_0 = arith.constant 0 : i32
    %c0_i32_1 = arith.constant 0 : i32
    %c0_i32_2 = arith.constant 0 : i32
    return %arg0, %c0_i32, %c0_i32_0, %c0_i32_1 : i32, i32, i32, i32
  }
  func.func @transform_1(%arg0: i32) -> (i32, i32) {
    %c0_i32 = arith.constant 0 : i32
    %c0_i32_0 = arith.constant 0 : i32
    %c0_i32_1 = arith.constant 0 : i32
    return %c0_i32, %c0_i32_0 : i32, i32
  }
  func.func @transform_2(%arg0: i32) -> (i32, i32, i32) {
    %c0_i32 = arith.constant 0 : i32
    %c0_i32_0 = arith.constant 0 : i32
    %c0_i32_1 = arith.constant 0 : i32
    %c0_i32_2 = arith.constant 0 : i32
    return %c0_i32, %c0_i32_0, %c0_i32_1 : i32, i32, i32
  }
  func.func @transform_3(%arg0: i32) -> (i32, i32) {
    %c0_i32 = arith.constant 0 : i32
    %c0_i32_0 = arith.constant 0 : i32
    %c0_i32_1 = arith.constant 0 : i32
    return %c0_i32, %c0_i32_0 : i32, i32
  }
  func.func @transform_4(%arg0: i32) -> (i32, i32) {
    %c0_i32 = arith.constant 0 : i32
    %c0_i32_0 = arith.constant 0 : i32
    %c0_i32_1 = arith.constant 0 : i32
    return %c0_i32, %c0_i32_0 : i32, i32
  }
  func.func @transform_5(%arg0: i32) -> (i32, i32) {
    %c0_i32 = arith.constant 0 : i32
    %c0_i32_0 = arith.constant 0 : i32
    %c0_i32_1 = arith.constant 0 : i32
    return %c0_i32, %c0_i32_0 : i32, i32
  }
  func.func @transform_6(%arg0: i32) -> (i32, i32, i32) {
    %c0_i32 = arith.constant 0 : i32
    %c0_i32_0 = arith.constant 0 : i32
    %c0_i32_1 = arith.constant 0 : i32
    %c0_i32_2 = arith.constant 0 : i32
    return %c0_i32, %c0_i32_0, %c0_i32_1 : i32, i32, i32
  }
  func.func @transform_7(%arg0: i32) -> (i32, i32) {
    %c0_i32 = arith.constant 0 : i32
    %c0_i32_0 = arith.constant 0 : i32
    %c0_i32_1 = arith.constant 0 : i32
    return %c0_i32, %c0_i32_0 : i32, i32
  }
  func.func @transform_8(%arg0: i32) -> (i32, i32) {
    %c0_i32 = arith.constant 0 : i32
    %c0_i32_0 = arith.constant 0 : i32
    %c0_i32_1 = arith.constant 0 : i32
    return %c0_i32, %c0_i32_0 : i32, i32
  }
  func.func @transform_9(%arg0: i32) -> (i32, i32) {
    %c0_i32 = arith.constant 0 : i32
    %c0_i32_0 = arith.constant 0 : i32
    %c0_i32_1 = arith.constant 0 : i32
    return %c0_i32, %c0_i32_0 : i32, i32
  }
  func.func @transform_10(%arg0: i32) -> (i32, i32) {
    %c0_i32 = arith.constant 0 : i32
    %c0_i32_0 = arith.constant 0 : i32
    %c0_i32_1 = arith.constant 0 : i32
    return %c0_i32, %c0_i32_0 : i32, i32
  }
  func.func @transform_11(%arg0: i32) -> (i32, i32) {
    %c0_i32 = arith.constant 0 : i32
    %c0_i32_0 = arith.constant 0 : i32
    %c0_i32_1 = arith.constant 0 : i32
    return %c0_i32, %c0_i32_0 : i32, i32
  }
  func.func @transform_12(%arg0: i32) -> (i32, i32) {
    %c0_i32 = arith.constant 0 : i32
    %c0_i32_0 = arith.constant 0 : i32
    %c0_i32_1 = arith.constant 0 : i32
    return %c0_i32, %c0_i32_0 : i32, i32
  }
  func.func @transform_13(%arg0: i32) -> (i32, i32) {
    %c0_i32 = arith.constant 0 : i32
    %c0_i32_0 = arith.constant 0 : i32
    %c0_i32_1 = arith.constant 0 : i32
    return %c0_i32, %c0_i32_0 : i32, i32
  }
  func.func @transform_14(%arg0: i32) -> (i32, i32) {
    %c0_i32 = arith.constant 0 : i32
    %c0_i32_0 = arith.constant 0 : i32
    %c0_i32_1 = arith.constant 0 : i32
    return %c0_i32, %c0_i32_0 : i32, i32
  }
  func.func @transform_15(%arg0: i32) -> (i32, i32) {
    %c0_i32 = arith.constant 0 : i32
    %c0_i32_0 = arith.constant 0 : i32
    %c0_i32_1 = arith.constant 0 : i32
    return %c0_i32, %c0_i32_0 : i32, i32
  }
  func.func @transform_16(%arg0: i32) -> (i32, i32) {
    %c0_i32 = arith.constant 0 : i32
    %c0_i32_0 = arith.constant 0 : i32
    %c0_i32_1 = arith.constant 0 : i32
    return %c0_i32, %c0_i32_0 : i32, i32
  }
  func.func @transform_17(%arg0: i32) -> (i32, i32, i32, i32) {
    %c0_i32 = arith.constant 0 : i32
    %c0_i32_0 = arith.constant 0 : i32
    %c0_i32_1 = arith.constant 0 : i32
    %c0_i32_2 = arith.constant 0 : i32
    return %arg0, %c0_i32, %c0_i32_0, %c0_i32_1 : i32, i32, i32, i32
  }
}

</mosaic_0001>

<llo_original>
// kernel: tpu_custom_call.1
$region0: #{tpu_custom_call.1}
  #allocation0 [shape = 'u32[]', space=smem, size = 0x4, offset = 0x4, fixed_abs, tag = 'smem constant byte address 0x4 - core index']
  #allocation1 [shape = 'u32[144,128]{1,0:T(1,128)}', space=vmem, size = 0x12000, scoped, tag = 'internal scratch']
  #allocation2 [shape = 'bf16[18,16,12]{2,1,0:T(16,128)(2,1)}', space=vmem, size = 0x12000, scoped, tag = 'scratch operand']
  #allocation3 [shape = 'bf16[18,16,48]{2,1,0:T(16,128)(2,1)}', space=vmem, size = 0x12000, scoped, tag = 'scratch operand']
  %s0 = inlined_call_operand.vmem [shape: bf16[2,16,16,4], index: 0, kind: input, shape index: {}]
  %s1 = inlined_call_operand.vmem [shape: f32[2,32], index: 1, kind: input, shape index: {}]
  %s2 = inlined_call_operand.vmem [shape: bf16[3,12,16], index: 2, kind: input, shape index: {}]
  %s3 = inlined_call_operand.vmem [shape: f32[1,16], index: 3, kind: input, shape index: {}]
  %s4 = inlined_call_operand.vmem [shape: f32[1,16], index: 4, kind: input, shape index: {}]
  %s5 = inlined_call_operand.vmem [shape: f32[1,16], index: 5, kind: input, shape index: {}]
  %s6 = inlined_call_operand.vmem [shape: bf16[3,48,16], index: 6, kind: input, shape index: {}]
  %s7 = inlined_call_operand.vmem [shape: f32[1,16], index: 7, kind: input, shape index: {}]
  %s8 = inlined_call_operand.vmem [shape: f32[1,16], index: 8, kind: input, shape index: {}]
  %s9 = inlined_call_operand.vmem [shape: f32[1,16], index: 9, kind: input, shape index: {}]
  %s10 = inlined_call_operand.vmem [shape: f32[32,16], index: 10, kind: input, shape index: {}]
  %s11 = inlined_call_operand.vmem [shape: f32[32,16], index: 11, kind: input, shape index: {}]
  %s12 = inlined_call_operand.vmem [shape: f32[1,16], index: 12, kind: input, shape index: {}]
  %s13 = inlined_call_operand.vmem [shape: f32[1,16], index: 13, kind: input, shape index: {}]
  %s14 = inlined_call_operand.vmem [shape: bf16[4,16], index: 14, kind: input, shape index: {}]
  %s15 = inlined_call_operand.vmem [shape: f32[1,16], index: 15, kind: input, shape index: {}]
  %s16 = inlined_call_operand.vmem [shape: f32[16,16], index: 16, kind: input, shape index: {}]
  %s17 = inlined_call_operand.hbm [shape: f32[2,16,16,16], index: 17, kind: output, shape index: {}]
  %s18 = sld [smem:[#allocation0]]
  $region101: #{tpu_custom_call.1} parent=0
    _
  %s20 = ssub.s32 1, %s18
  %s21 = scalar_select 0, %s20, %s18
  $region1: #{tpu_custom_call.1} parent=0
    #allocation4 [shape = 'u8[262144]{0}', space=vmem, size = 0x40000, scoped, tag = 'output window, operand 0']
    #allocation5 [shape = 's32[2]{0}', space=sflag, size = 0x8, scoped, tag = 'scoped memory for tpu_custom_call.1']
    %22 = vsyncpa [#allocation5], 0
    %s23 = scalar_lea.sflag [#allocation5], 1
    %24 = vsyncpa %s23, 0
    loop: start=0, step=1, limit=4
    $region2: #{tpu_custom_call.1} parent=1 // loop_pre_header
      _
    $region3: #{tpu_custom_call.1} parent=1 // loop_header
      %s26 = sphi 0, %s30
      %p27 = scmp.ge.s32.totalorder %s26, 4
      %s36 = sphi 0, %s38
      %s39 = sphi 0, %s36
      %s40 = sphi 0, %s39
      %s56 = sphi 0, %s40
      %s60 = sphi 0, %s60
      %s62 = sphi 0, %s60
      %s63 = sphi 0, %s62
      %s77 = sphi 0, %s63
      %s81 = sphi 0, %s81
      %s83 = sphi 0, %s81
      %s84 = sphi 0, %s83
      %s98 = sphi 0, %s84
      %s102 = sphi 0, %s102
      %s104 = sphi 0, %s102
      %s105 = sphi 0, %s104
      %s119 = sphi 0, %s105
      %s123 = sphi 0, %s123
      %s125 = sphi 0, %s123
      %s126 = sphi 0, %s125
      %s140 = sphi 0, %s126
      %s144 = sphi 0, %s144
      %s146 = sphi 0, %s144
      %s147 = sphi 0, %s146
      %s161 = sphi 0, %s147
      %s165 = sphi 0, %s165
      %s167 = sphi 0, %s165
      %s168 = sphi 0, %s167
      %s182 = sphi 0, %s168
      %s186 = sphi 0, %s186
      %s188 = sphi 0, %s186
      %s189 = sphi 0, %s188
      %s203 = sphi 0, %s189
      %s207 = sphi 0, %s207
      %s209 = sphi 0, %s207
      %s210 = sphi 0, %s209
      %s224 = sphi 0, %s210
      %s228 = sphi 0, %s228
      %s230 = sphi 0, %s228
      %s231 = sphi 0, %s230
      %s245 = sphi 0, %s231
      %s249 = sphi 0, %s249
      %s251 = sphi 0, %s249
      %s252 = sphi 0, %s251
      %s266 = sphi 0, %s252
      %s270 = sphi 0, %s270
      %s272 = sphi 0, %s270
      %s273 = sphi 0, %s272
      %s287 = sphi 0, %s273
      %s291 = sphi 0, %s291
      %s293 = sphi 0, %s291
      %s294 = sphi 0, %s293
      %s308 = sphi 0, %s294
      %s312 = sphi 0, %s312
      %s314 = sphi 0, %s312
      %s315 = sphi 0, %s314
      %s329 = sphi 0, %s315
      %s333 = sphi 0, %s333
      %s335 = sphi 0, %s333
      %s336 = sphi 0, %s335
      %s350 = sphi 0, %s336
      %s354 = sphi 0, %s354
      %s356 = sphi 0, %s354
      %s357 = sphi 0, %s356
      %s371 = sphi 0, %s357
      %s375 = sphi 0, %s375
      %s377 = sphi 0, %s375
      %s378 = sphi 0, %s377
      %s392 = sphi 0, %s378
      %s398 = sphi 0, %s400
      %s401 = sphi 0, %s398
      %s402 = sphi 0, %s401
      %s418 = sphi 0, %s402
    $region4: #{tpu_custom_call.1} parent=1 // loop_header_branch
      %29 = sbr.rel (%p27) target = $region8
    $region5: #{tpu_custom_call.1} parent=1 // loop_body
      %s31 = ssub.s32 %s26, 1
      %s32 = ssub.s32 %s26, 2
      %s33 = sadd.s32 %s26, 1
      %s34 = ssub.s32 %s26, %s33
      %p35 = scmp.eq.s32.totalorder %s34, 0
      %s37 = sadd.s32 %s36, 1
      %s38 = scalar_select %p35, %s36, %s37
      %p41 = pneg %p35
      %p42 = scmp.eq.s32.totalorder %s26, 1
      %p43 = por %p41, %p42
      %p44 = scmp.ne.s32.totalorder %s36, %s39
      %p45 = scmp.eq.s32.totalorder %s26, 0
      %p46 = por %p44, %p45
      %p47 = scmp.ne.s32.totalorder %s36, %s39
      %p48 = scmp.eq.s32.totalorder %s31, 1
      %p49 = por %p47, %p48
      %p50 = scmp.ne.s32.totalorder %s39, %s40
      %p51 = scmp.eq.s32.totalorder %s31, 0
      %p52 = por %p50, %p51
      %p53 = scmp.ne.s32.totalorder %s39, %s40
      %p54 = scmp.eq.s32.totalorder %s32, 1
      %p55 = por %p53, %p54
      %p57 = scmp.ne.s32.totalorder %s40, %s56
      %p58 = scmp.eq.s32.totalorder %s32, 0
      %p59 = por %p57, %p58
      %s61 = sadd.s32 %s60, 1
      %p64 = scmp.eq.s32.totalorder %s26, 1
      %p65 = scmp.ne.s32.totalorder %s60, %s62
      %p66 = scmp.eq.s32.totalorder %s26, 0
      %p67 = por %p65, %p66
      %p68 = scmp.ne.s32.totalorder %s60, %s62
      %p69 = scmp.eq.s32.totalorder %s31, 1
      %p70 = por %p68, %p69
      %p71 = scmp.ne.s32.totalorder %s62, %s63
      %p72 = scmp.eq.s32.totalorder %s31, 0
      %p73 = por %p71, %p72
      %p74 = scmp.ne.s32.totalorder %s62, %s63
      %p75 = scmp.eq.s32.totalorder %s32, 1
      %p76 = por %p74, %p75
      %p78 = scmp.ne.s32.totalorder %s63, %s77
      %p79 = scmp.eq.s32.totalorder %s32, 0
      %p80 = por %p78, %p79
      %s82 = sadd.s32 %s81, 1
      %p85 = scmp.eq.s32.totalorder %s26, 1
      %p86 = scmp.ne.s32.totalorder %s81, %s83
      %p87 = scmp.eq.s32.totalorder %s26, 0
      %p88 = por %p86, %p87
      %p89 = scmp.ne.s32.totalorder %s81, %s83
      %p90 = scmp.eq.s32.totalorder %s31, 1
      %p91 = por %p89, %p90
      %p92 = scmp.ne.s32.totalorder %s83, %s84
      %p93 = scmp.eq.s32.totalorder %s31, 0
      %p94 = por %p92, %p93
      %p95 = scmp.ne.s32.totalorder %s83, %s84
      %p96 = scmp.eq.s32.totalorder %s32, 1
      %p97 = por %p95, %p96
      %p99 = scmp.ne.s32.totalorder %s84, %s98
      %p100 = scmp.eq.s32.totalorder %s32, 0
      %p101 = por %p99, %p100
      %s103 = sadd.s32 %s102, 1
      %p106 = scmp.eq.s32.totalorder %s26, 1
      %p107 = scmp.ne.s32.totalorder %s102, %s104
      %p108 = scmp.eq.s32.totalorder %s26, 0
      %p109 = por %p107, %p108
      %p110 = scmp.ne.s32.totalorder %s102, %s104
      %p111 = scmp.eq.s32.totalorder %s31, 1
      %p112 = por %p110, %p111
      %p113 = scmp.ne.s32.totalorder %s104, %s105
      %p114 = scmp.eq.s32.totalorder %s31, 0
      %p115 = por %p113, %p114
      %p116 = scmp.ne.s32.totalorder %s104, %s105
      %p117 = scmp.eq.s32.totalorder %s32, 1
      %p118 = por %p116, %p117
      %p120 = scmp.ne.s32.totalorder %s105, %s119
      %p121 = scmp.eq.s32.totalorder %s32, 0
      %p122 = por %p120, %p121
      %s124 = sadd.s32 %s123, 1
      %p127 = scmp.eq.s32.totalorder %s26, 1
      %p128 = scmp.ne.s32.totalorder %s123, %s125
      %p129 = scmp.eq.s32.totalorder %s26, 0
      %p130 = por %p128, %p129
      %p131 = scmp.ne.s32.totalorder %s123, %s125
      %p132 = scmp.eq.s32.totalorder %s31, 1
      %p133 = por %p131, %p132
      %p134 = scmp.ne.s32.totalorder %s125, %s126
      %p135 = scmp.eq.s32.totalorder %s31, 0
      %p136 = por %p134, %p135
      %p137 = scmp.ne.s32.totalorder %s125, %s126
      %p138 = scmp.eq.s32.totalorder %s32, 1
      %p139 = por %p137, %p138
      %p141 = scmp.ne.s32.totalorder %s126, %s140
      %p142 = scmp.eq.s32.totalorder %s32, 0
      %p143 = por %p141, %p142
      %s145 = sadd.s32 %s144, 1
      %p148 = scmp.eq.s32.totalorder %s26, 1
      %p149 = scmp.ne.s32.totalorder %s144, %s146
      %p150 = scmp.eq.s32.totalorder %s26, 0
      %p151 = por %p149, %p150
      %p152 = scmp.ne.s32.totalorder %s144, %s146
      %p153 = scmp.eq.s32.totalorder %s31, 1
      %p154 = por %p152, %p153
      %p155 = scmp.ne.s32.totalorder %s146, %s147
      %p156 = scmp.eq.s32.totalorder %s31, 0
      %p157 = por %p155, %p156
      %p158 = scmp.ne.s32.totalorder %s146, %s147
      %p159 = scmp.eq.s32.totalorder %s32, 1
      %p160 = por %p158, %p159
      %p162 = scmp.ne.s32.totalorder %s147, %s161
      %p163 = scmp.eq.s32.totalorder %s32, 0
      %p164 = por %p162, %p163
      %s166 = sadd.s32 %s165, 1
      %p169 = scmp.eq.s32.totalorder %s26, 1
      %p170 = scmp.ne.s32.totalorder %s165, %s167
      %p171 = scmp.eq.s32.totalorder %s26, 0
      %p172 = por %p170, %p171
      %p173 = scmp.ne.s32.totalorder %s165, %s167
      %p174 = scmp.eq.s32.totalorder %s31, 1
      %p175 = por %p173, %p174
      %p176 = scmp.ne.s32.totalorder %s167, %s168
      %p177 = scmp.eq.s32.totalorder %s31, 0
      %p178 = por %p176, %p177
      %p179 = scmp.ne.s32.totalorder %s167, %s168
      %p180 = scmp.eq.s32.totalorder %s32, 1
      %p181 = por %p179, %p180
      %p183 = scmp.ne.s32.totalorder %s168, %s182
      %p184 = scmp.eq.s32.totalorder %s32, 0
      %p185 = por %p183, %p184
      %s187 = sadd.s32 %s186, 1
      %p190 = scmp.eq.s32.totalorder %s26, 1
      %p191 = scmp.ne.s32.totalorder %s186, %s188
      %p192 = scmp.eq.s32.totalorder %s26, 0
      %p193 = por %p191, %p192
      %p194 = scmp.ne.s32.totalorder %s186, %s188
      %p195 = scmp.eq.s32.totalorder %s31, 1
      %p196 = por %p194, %p195
      %p197 = scmp.ne.s32.totalorder %s188, %s189
      %p198 = scmp.eq.s32.totalorder %s31, 0
      %p199 = por %p197, %p198
      %p200 = scmp.ne.s32.totalorder %s188, %s189
      %p201 = scmp.eq.s32.totalorder %s32, 1
      %p202 = por %p200, %p201
      %p204 = scmp.ne.s32.totalorder %s189, %s203
      %p205 = scmp.eq.s32.totalorder %s32, 0
      %p206 = por %p204, %p205
      %s208 = sadd.s32 %s207, 1
      %p211 = scmp.eq.s32.totalorder %s26, 1
      %p212 = scmp.ne.s32.totalorder %s207, %s209
      %p213 = scmp.eq.s32.totalorder %s26, 0
      %p214 = por %p212, %p213
      %p215 = scmp.ne.s32.totalorder %s207, %s209
      %p216 = scmp.eq.s32.totalorder %s31, 1
      %p217 = por %p215, %p216
      %p218 = scmp.ne.s32.totalorder %s209, %s210
      %p219 = scmp.eq.s32.totalorder %s31, 0
      %p220 = por %p218, %p219
      %p221 = scmp.ne.s32.totalorder %s209, %s210
      %p222 = scmp.eq.s32.totalorder %s32, 1
      %p223 = por %p221, %p222
      %p225 = scmp.ne.s32.totalorder %s210, %s224
      %p226 = scmp.eq.s32.totalorder %s32, 0
      %p227 = por %p225, %p226
      %s229 = sadd.s32 %s228, 1
      %p232 = scmp.eq.s32.totalorder %s26, 1
      %p233 = scmp.ne.s32.totalorder %s228, %s230
      %p234 = scmp.eq.s32.totalorder %s26, 0
      %p235 = por %p233, %p234
      %p236 = scmp.ne.s32.totalorder %s228, %s230
      %p237 = scmp.eq.s32.totalorder %s31, 1
      %p238 = por %p236, %p237
      %p239 = scmp.ne.s32.totalorder %s230, %s231
      %p240 = scmp.eq.s32.totalorder %s31, 0
      %p241 = por %p239, %p240
      %p242 = scmp.ne.s32.totalorder %s230, %s231
      %p243 = scmp.eq.s32.totalorder %s32, 1
      %p244 = por %p242, %p243
      %p246 = scmp.ne.s32.totalorder %s231, %s245
      %p247 = scmp.eq.s32.totalorder %s32, 0
      %p248 = por %p246, %p247
      %s250 = sadd.s32 %s249, 1
      %p253 = scmp.eq.s32.totalorder %s26, 1
      %p254 = scmp.ne.s32.totalorder %s249, %s251
      %p255 = scmp.eq.s32.totalorder %s26, 0
      %p256 = por %p254, %p255
      %p257 = scmp.ne.s32.totalorder %s249, %s251
      %p258 = scmp.eq.s32.totalorder %s31, 1
      %p259 = por %p257, %p258
      %p260 = scmp.ne.s32.totalorder %s251, %s252
      %p261 = scmp.eq.s32.totalorder %s31, 0
      %p262 = por %p260, %p261
      %p263 = scmp.ne.s32.totalorder %s251, %s252
      %p264 = scmp.eq.s32.totalorder %s32, 1
      %p265 = por %p263, %p264
      %p267 = scmp.ne.s32.totalorder %s252, %s266
      %p268 = scmp.eq.s32.totalorder %s32, 0
      %p269 = por %p267, %p268
      %s271 = sadd.s32 %s270, 1
      %p274 = scmp.eq.s32.totalorder %s26, 1
      %p275 = scmp.ne.s32.totalorder %s270, %s272
      %p276 = scmp.eq.s32.totalorder %s26, 0
      %p277 = por %p275, %p276
      %p278 = scmp.ne.s32.totalorder %s270, %s272
      %p279 = scmp.eq.s32.totalorder %s31, 1
      %p280 = por %p278, %p279
      %p281 = scmp.ne.s32.totalorder %s272, %s273
      %p282 = scmp.eq.s32.totalorder %s31, 0
      %p283 = por %p281, %p282
      %p284 = scmp.ne.s32.totalorder %s272, %s273
      %p285 = scmp.eq.s32.totalorder %s32, 1
      %p286 = por %p284, %p285
      %p288 = scmp.ne.s32.totalorder %s273, %s287
      %p289 = scmp.eq.s32.totalorder %s32, 0
      %p290 = por %p288, %p289
      %s292 = sadd.s32 %s291, 1
      %p295 = scmp.eq.s32.totalorder %s26, 1
      %p296 = scmp.ne.s32.totalorder %s291, %s293
      %p297 = scmp.eq.s32.totalorder %s26, 0
      %p298 = por %p296, %p297
      %p299 = scmp.ne.s32.totalorder %s291, %s293
      %p300 = scmp.eq.s32.totalorder %s31, 1
      %p301 = por %p299, %p300
      %p302 = scmp.ne.s32.totalorder %s293, %s294
      %p303 = scmp.eq.s32.totalorder %s31, 0
      %p304 = por %p302, %p303
      %p305 = scmp.ne.s32.totalorder %s293, %s294
      %p306 = scmp.eq.s32.totalorder %s32, 1
      %p307 = por %p305, %p306
      %p309 = scmp.ne.s32.totalorder %s294, %s308
      %p310 = scmp.eq.s32.totalorder %s32, 0
      %p311 = por %p309, %p310
      %s313 = sadd.s32 %s312, 1
      %p316 = scmp.eq.s32.totalorder %s26, 1
      %p317 = scmp.ne.s32.totalorder %s312, %s314
      %p318 = scmp.eq.s32.totalorder %s26, 0
      %p319 = por %p317, %p318
      %p320 = scmp.ne.s32.totalorder %s312, %s314
      %p321 = scmp.eq.s32.totalorder %s31, 1
      %p322 = por %p320, %p321
      %p323 = scmp.ne.s32.totalorder %s314, %s315
      %p324 = scmp.eq.s32.totalorder %s31, 0
      %p325 = por %p323, %p324
      %p326 = scmp.ne.s32.totalorder %s314, %s315
      %p327 = scmp.eq.s32.totalorder %s32, 1
      %p328 = por %p326, %p327
      %p330 = scmp.ne.s32.totalorder %s315, %s329
      %p331 = scmp.eq.s32.totalorder %s32, 0
      %p332 = por %p330, %p331
      %s334 = sadd.s32 %s333, 1
      %p337 = scmp.eq.s32.totalorder %s26, 1
      %p338 = scmp.ne.s32.totalorder %s333, %s335
      %p339 = scmp.eq.s32.totalorder %s26, 0
      %p340 = por %p338, %p339
      %p341 = scmp.ne.s32.totalorder %s333, %s335
      %p342 = scmp.eq.s32.totalorder %s31, 1
      %p343 = por %p341, %p342
      %p344 = scmp.ne.s32.totalorder %s335, %s336
      %p345 = scmp.eq.s32.totalorder %s31, 0
      %p346 = por %p344, %p345
      %p347 = scmp.ne.s32.totalorder %s335, %s336
      %p348 = scmp.eq.s32.totalorder %s32, 1
      %p349 = por %p347, %p348
      %p351 = scmp.ne.s32.totalorder %s336, %s350
      %p352 = scmp.eq.s32.totalorder %s32, 0
      %p353 = por %p351, %p352
      %s355 = sadd.s32 %s354, 1
      %p358 = scmp.eq.s32.totalorder %s26, 1
      %p359 = scmp.ne.s32.totalorder %s354, %s356
      %p360 = scmp.eq.s32.totalorder %s26, 0
      %p361 = por %p359, %p360
      %p362 = scmp.ne.s32.totalorder %s354, %s356
      %p363 = scmp.eq.s32.totalorder %s31, 1
      %p364 = por %p362, %p363
      %p365 = scmp.ne.s32.totalorder %s356, %s357
      %p366 = scmp.eq.s32.totalorder %s31, 0
      %p367 = por %p365, %p366
      %p368 = scmp.ne.s32.totalorder %s356, %s357
      %p369 = scmp.eq.s32.totalorder %s32, 1
      %p370 = por %p368, %p369
      %p372 = scmp.ne.s32.totalorder %s357, %s371
      %p373 = scmp.eq.s32.totalorder %s32, 0
      %p374 = por %p372, %p373
      %s376 = sadd.s32 %s375, 1
      %p379 = scmp.eq.s32.totalorder %s26, 1
      %p380 = scmp.ne.s32.totalorder %s375, %s377
      %p381 = scmp.eq.s32.totalorder %s26, 0
      %p382 = por %p380, %p381
      %p383 = scmp.ne.s32.totalorder %s375, %s377
      %p384 = scmp.eq.s32.totalorder %s31, 1
      %p385 = por %p383, %p384
      %p386 = scmp.ne.s32.totalorder %s377, %s378
      %p387 = scmp.eq.s32.totalorder %s31, 0
      %p388 = por %p386, %p387
      %p389 = scmp.ne.s32.totalorder %s377, %s378
      %p390 = scmp.eq.s32.totalorder %s32, 1
      %p391 = por %p389, %p390
      %p393 = scmp.ne.s32.totalorder %s378, %s392
      %p394 = scmp.eq.s32.totalorder %s32, 0
      %p395 = por %p393, %p394
      %s396 = ssub.s32 %s26, %s33
      %p397 = scmp.eq.s32.totalorder %s396, 0
      %s399 = sadd.s32 %s398, 1
      %s400 = scalar_select %p397, %s398, %s399
      %p403 = pneg %p397
      %p404 = scmp.eq.s32.totalorder %s26, 1
      %p405 = por %p403, %p404
      %p406 = scmp.ne.s32.totalorder %s398, %s401
      %p407 = scmp.eq.s32.totalorder %s26, 0
      %p408 = por %p406, %p407
      %p409 = scmp.ne.s32.totalorder %s398, %s401
      %p410 = scmp.eq.s32.totalorder %s31, 1
      %p411 = por %p409, %p410
      %p412 = scmp.ne.s32.totalorder %s401, %s402
      %p413 = scmp.eq.s32.totalorder %s31, 0
      %p414 = por %p412, %p413
      %p415 = scmp.ne.s32.totalorder %s401, %s402
      %p416 = scmp.eq.s32.totalorder %s32, 1
      %p417 = por %p415, %p416
      %p419 = scmp.ne.s32.totalorder %s402, %s418
      %p420 = scmp.eq.s32.totalorder %s32, 0
      %p421 = por %p419, %p420
      %p422 = scmp.le.s32.totalorder 1, %s26
      %p423 = scmp.lt.s32.totalorder %s26, 3
      %p424 = pnand %p422, %p423
      %p425 = pneg %p424
      // Predicated region
      $region9: #{tpu_custom_call.1} parent=5 // pred_check
        _
      $region10: #{tpu_custom_call.1} parent=5 // pred_check_branch
        %427 = sbr.rel (%p424) target = $region12
      $region11: #{tpu_custom_call.1} parent=5 // pred_region
        %s428 = ssub.s32 %s26, 1
        // Predicated region
        $region13: #{tpu_custom_call.1} parent=11 // pred_check
          %p429 = pneg %p73
        $region14: #{tpu_custom_call.1} parent=11 // pred_check_branch
          %431 = sbr.rel (%p429) target = $region16
        $region15: #{tpu_custom_call.1} parent=11 // pred_region
          _
        $region16: #{tpu_custom_call.1} parent=11 // pred_fallthru
          _
        // Predicated region
        $region17: #{tpu_custom_call.1} parent=11 // pred_check
          %p432 = pneg %p94
        $region18: #{tpu_custom_call.1} parent=11 // pred_check_branch
          %434 = sbr.rel (%p432) target = $region20
        $region19: #{tpu_custom_call.1} parent=11 // pred_region
          _
        $region20: #{tpu_custom_call.1} parent=11 // pred_fallthru
          _
        // Predicated region
        $region21: #{tpu_custom_call.1} parent=11 // pred_check
          %p435 = pneg %p115
        $region22: #{tpu_custom_call.1} parent=11 // pred_check_branch
          %437 = sbr.rel (%p435) target = $region24
        $region23: #{tpu_custom_call.1} parent=11 // pred_region
          _
        $region24: #{tpu_custom_call.1} parent=11 // pred_fallthru
          _
        // Predicated region
        $region25: #{tpu_custom_call.1} parent=11 // pred_check
          %p438 = pneg %p136
        $region26: #{tpu_custom_call.1} parent=11 // pred_check_branch
          %440 = sbr.rel (%p438) target = $region28
        $region27: #{tpu_custom_call.1} parent=11 // pred_region
          _
        $region28: #{tpu_custom_call.1} parent=11 // pred_fallthru
          _
        // Predicated region
        $region29: #{tpu_custom_call.1} parent=11 // pred_check
          %p441 = pneg %p157
        $region30: #{tpu_custom_call.1} parent=11 // pred_check_branch
          %443 = sbr.rel (%p441) target = $region32
        $region31: #{tpu_custom_call.1} parent=11 // pred_region
          _
        $region32: #{tpu_custom_call.1} parent=11 // pred_fallthru
          _
        // Predicated region
        $region33: #{tpu_custom_call.1} parent=11 // pred_check
          %p444 = pneg %p178
        $region34: #{tpu_custom_call.1} parent=11 // pred_check_branch
          %446 = sbr.rel (%p444) target = $region36
        $region35: #{tpu_custom_call.1} parent=11 // pred_region
          _
        $region36: #{tpu_custom_call.1} parent=11 // pred_fallthru
          _
        // Predicated region
        $region37: #{tpu_custom_call.1} parent=11 // pred_check
          %p447 = pneg %p199
        $region38: #{tpu_custom_call.1} parent=11 // pred_check_branch
          %449 = sbr.rel (%p447) target = $region40
        $region39: #{tpu_custom_call.1} parent=11 // pred_region
          _
        $region40: #{tpu_custom_call.1} parent=11 // pred_fallthru
          _
        // Predicated region
        $region41: #{tpu_custom_call.1} parent=11 // pred_check
          %p450 = pneg %p220
        $region42: #{tpu_custom_call.1} parent=11 // pred_check_branch
          %452 = sbr.rel (%p450) target = $region44
        $region43: #{tpu_custom_call.1} parent=11 // pred_region
          _
        $region44: #{tpu_custom_call.1} parent=11 // pred_fallthru
          _
        // Predicated region
        $region45: #{tpu_custom_call.1} parent=11 // pred_check
          %p453 = pneg %p241
        $region46: #{tpu_custom_call.1} parent=11 // pred_check_branch
          %455 = sbr.rel (%p453) target = $region48
        $region47: #{tpu_custom_call.1} parent=11 // pred_region
          _
        $region48: #{tpu_custom_call.1} parent=11 // pred_fallthru
          _
        // Predicated region
        $region49: #{tpu_custom_call.1} parent=11 // pred_check
          %p456 = pneg %p262
        $region50: #{tpu_custom_call.1} parent=11 // pred_check_branch
          %458 = sbr.rel (%p456) target = $region52
        $region51: #{tpu_custom_call.1} parent=11 // pred_region
          _
        $region52: #{tpu_custom_call.1} parent=11 // pred_fallthru
          _
        // Predicated region
        $region53: #{tpu_custom_call.1} parent=11 // pred_check
          %p459 = pneg %p283
        $region54: #{tpu_custom_call.1} parent=11 // pred_check_branch
          %461 = sbr.rel (%p459) target = $region56
        $region55: #{tpu_custom_call.1} parent=11 // pred_region
          _
        $region56: #{tpu_custom_call.1} parent=11 // pred_fallthru
          _
        // Predicated region
        $region57: #{tpu_custom_call.1} parent=11 // pred_check
          %p462 = pneg %p304
        $region58: #{tpu_custom_call.1} parent=11 // pred_check_branch
          %464 = sbr.rel (%p462) target = $region60
        $region59: #{tpu_custom_call.1} parent=11 // pred_region
          _
        $region60: #{tpu_custom_call.1} parent=11 // pred_fallthru
          _
        // Predicated region
        $region61: #{tpu_custom_call.1} parent=11 // pred_check
          %p465 = pneg %p325
        $region62: #{tpu_custom_call.1} parent=11 // pred_check_branch
          %467 = sbr.rel (%p465) target = $region64
        $region63: #{tpu_custom_call.1} parent=11 // pred_region
          _
        $region64: #{tpu_custom_call.1} parent=11 // pred_fallthru
          _
        // Predicated region
        $region65: #{tpu_custom_call.1} parent=11 // pred_check
          %p468 = pneg %p346
        $region66: #{tpu_custom_call.1} parent=11 // pred_check_branch
          %470 = sbr.rel (%p468) target = $region68
        $region67: #{tpu_custom_call.1} parent=11 // pred_region
          _
        $region68: #{tpu_custom_call.1} parent=11 // pred_fallthru
          _
        // Predicated region
        $region69: #{tpu_custom_call.1} parent=11 // pred_check
          %p471 = pneg %p367
        $region70: #{tpu_custom_call.1} parent=11 // pred_check_branch
          %473 = sbr.rel (%p471) target = $region72
        $region71: #{tpu_custom_call.1} parent=11 // pred_region
          _
        $region72: #{tpu_custom_call.1} parent=11 // pred_fallthru
          _
        // Predicated region
        $region73: #{tpu_custom_call.1} parent=11 // pred_check
          %p474 = pneg %p388
        $region74: #{tpu_custom_call.1} parent=11 // pred_check_branch
          %476 = sbr.rel (%p474) target = $region76
        $region75: #{tpu_custom_call.1} parent=11 // pred_region
          _
        $region76: #{tpu_custom_call.1} parent=11 // pred_fallthru
          _
      $region12: #{tpu_custom_call.1} parent=5 // pred_fallthru
        _
      %p477 = scmp.lt.s32.totalorder %s26, 2
      // Predicated region
      $region77: #{tpu_custom_call.1} parent=5 // pred_check
        %p478 = pneg %p477
      $region78: #{tpu_custom_call.1} parent=5 // pred_check_branch
        %480 = sbr.rel (%p478) target = $region80
      $region79: #{tpu_custom_call.1} parent=5 // pred_region
        // Predicated region
        $region81: #{tpu_custom_call.1} parent=79 // pred_check
          %p481 = pneg %p46
        $region82: #{tpu_custom_call.1} parent=79 // pred_check_branch
          %483 = sbr.rel (%p481) target = $region84
        $region83: #{tpu_custom_call.1} parent=79 // pred_region
          %p484 = scmp.lt.s32.totalorder %s26, 1
          %s485 = scalar_select %p484, %s26, 1
          %s486 = smul.addr %s485, 32
          %s487 = smul.addr %s486, 4
          %s488 = scalar_lea.vmem %s0, %s487
        $region84: #{tpu_custom_call.1} parent=79 // pred_fallthru
          _
      $region80: #{tpu_custom_call.1} parent=5 // pred_fallthru
        _
      %p489 = scmp.le.s32.totalorder 1, %s26
      %p490 = scmp.lt.s32.totalorder %s26, 3
      %p491 = pnand %p489, %p490
      %p492 = pneg %p491
      // Predicated region
      $region85: #{tpu_custom_call.1} parent=5 // pred_check
        _
      $region86: #{tpu_custom_call.1} parent=5 // pred_check_branch
        %494 = sbr.rel (%p491) target = $region88
      $region87: #{tpu_custom_call.1} parent=5 // pred_region
        %s495 = ssub.s32 %s26, 1
        %p496 = scmp.lt.s32.totalorder %s31, 1
        %s497 = scalar_select %p496, %s31, 1
        %s498 = smul.addr %s497, 32
        %s499 = smul.addr %s498, 4
        %s500 = scalar_lea.vmem %s0, %s499
        %p501 = pneg %p52
        %p502 = pneg %p49
        %p503 = pneg %p73
        %p504 = pneg %p70
        %p505 = pneg %p94
        %p506 = pneg %p91
        %p507 = pneg %p115
        %p508 = pneg %p112
        %p509 = pneg %p136
        %p510 = pneg %p133
        %p511 = pneg %p157
        %p512 = pneg %p154
        %p513 = pneg %p178
        %p514 = pneg %p175
        %p515 = pneg %p199
        %p516 = pneg %p196
        %p517 = pneg %p220
        %p518 = pneg %p217
        %p519 = pneg %p241
        %p520 = pneg %p238
        %p521 = pneg %p262
        %p522 = pneg %p259
        %p523 = pneg %p283
        %p524 = pneg %p280
        %p525 = pneg %p304
        %p526 = pneg %p301
        %p527 = pneg %p325
        %p528 = pneg %p322
        %p529 = pneg %p346
        %p530 = pneg %p343
        %p531 = pneg %p367
        %p532 = pneg %p364
        %p533 = pneg %p388
        %p534 = pneg %p385
        %p535 = pneg %p414
        %p536 = pneg %p411
        %s537 = sand.u32 %s401, 1
        %s538 = scalar_lea.sflag [#allocation5], %s537
        %s539 = sand.u32 %s401, 1
        %s540 = smul.addr %s539, 256
        %s541 = scalar_lea.vmem [#allocation4], %s540
        %p542 = scmp.lt.s32.totalorder %s31, 1
        %s543 = scalar_select %p542, %s31, 1
        %s544 = smul.addr %s543, 32
        %s545 = smul.addr %s544, 4
        %s546 = scalar_lea.vmem %s0, %s545
        %s548 = scalar_lea.vmem %s1, %s31
        %v549 = vld [vmem:[%s548] sm:$0x1]
        %v550 = vmul.f32 %v549, 0.5
        %v551 = vtanh.pop %v550
        %v552 = vmul.f32 %v551, 0.5
        %v553 = vadd.f32 %v552, 0.5
        %v554 = vmul.f32 %v549, %v553
        %v555 = vld [vmem:[%s10] sm:$0xff]
        %v556 = vld [vmem:[%s10 + $0x8] sm:$0xff]
        %v557 = vld [vmem:[%s10 + $0x10] sm:$0xff]
        %v558 = vld [vmem:[%s10 + $0x18] sm:$0xff]
        %v559 = vld [vmem:[%s12] sm:$0x1]
        %vm560 = vcmask 261120
        %v562 = vsel %vm560, %v554, 0
        %564 = vmatprep.subr.mxu0 0.0
        %565 = vmatpush1.msra.mxu0 %v555
        %566 = vmatprep.subr.mxu0 0.0
        %567 = vmatpush1.msra.mxu0 %v556
        %568 = vmatprep.subr.mxu0 0.0
        %569 = vmatpush1.msra.mxu0 %v557
        %570 = vmatprep.subr.mxu0 0.0
        %571 = vmatpush1.msra.mxu0 %v558
        %572 = vmatprep.subr.mxu0 0.0
        %573 = vmatpush1.msra.mxu0 0.0
        %574 = vmatprep.subr.mxu0 0.0
        %575 = vmatpush1.msra.mxu0 0.0
        %576 = vmatprep.subr.mxu0 0.0
        %577 = vmatpush1.msra.mxu0 0.0
        %578 = vmatprep.subr.mxu0 0.0
        %579 = vmatpush1.msra.mxu0 0.0
        %580 = vmatprep.subr.mxu0 0.0
        %581 = vmatpush1.msra.mxu0 0.0
        %582 = vmatprep.subr.mxu0 0.0
        %583 = vmatpush1.msra.mxu0 0.0
        %584 = vmatprep.subr.mxu0 0.0
        %585 = vmatpush1.msra.mxu0 0.0
        %586 = vmatprep.subr.mxu0 0.0
        %587 = vmatpush1.msra.mxu0 0.0
        %588 = vmatprep.subr.mxu0 0.0
        %589 = vmatpush1.msra.mxu0 0.0
        %590 = vmatprep.subr.mxu0 0.0
        %591 = vmatpush1.msra.mxu0 0.0
        %592 = vmatprep.subr.mxu0 0.0
        %593 = vmatpush1.msra.mxu0 0.0
        %594 = vmatprep.subr.mxu0 0.0
        %595 = vmatpush1.msra.mxu0 0.0
        %596 = vmatprep.subr.mxu0 0.0
        %597 = vmatpush1.msra.mxu0 0.0
        %598 = vmatprep.subr.mxu0 0.0
        %599 = vmatpush1.msra.mxu0 0.0
        %600 = vmatprep.subr.mxu0 0.0
        %601 = vmatpush1.msra.mxu0 0.0
        %602 = vmatprep.subr.mxu0 0.0
        %603 = vmatpush1.msra.mxu0 0.0
        %604 = vmatprep.subr.mxu0 0.0
        %605 = vmatpush1.msra.mxu0 0.0
        %606 = vmatprep.subr.mxu0 0.0
        %607 = vmatpush1.msra.mxu0 0.0
        %608 = vmatprep.subr.mxu0 0.0
        %609 = vmatpush1.msra.mxu0 0.0
        %610 = vmatprep.subr.mxu0 0.0
        %611 = vmatpush1.msra.mxu0 0.0
        %612 = vmatprep.subr.mxu0 0.0
        %613 = vmatpush1.msra.mxu0 0.0
        %614 = vmatprep.subr.mxu0 0.0
        %615 = vmatpush1.msra.mxu0 0.0
        %616 = vmatprep.subr.mxu0 0.0
        %617 = vmatpush1.msra.mxu0 0.0
        %618 = vmatprep.subr.mxu0 0.0
        %619 = vmatpush1.msra.mxu0 0.0
        %620 = vmatprep.subr.mxu0 0.0
        %621 = vmatpush1.msra.mxu0 0.0
        %622 = vmatprep.subr.mxu0 0.0
        %623 = vmatpush1.msra.mxu0 0.0
        %624 = vmatprep.subr.mxu0 0.0
        %625 = vmatpush1.msra.mxu0 0.0
        %626 = vmatprep.subr.mxu0 0.0
        %627 = vmatpush1.msra.mxu0 0.0
        %628 = vmatprep.mubr.f32.mxu0 0.0
        %629 = vmatmul.mubr.f32.gmra.mrb[0].mxu0 %v562
        %v630 = vpop.f32.mrb[0].mxu0
        %v631 = vadd.f32 %v559, %v630
        %v632 = vpop.f32.mrb[0].mxu0
        %633 = vdwg.mxu0
        %v634 = vld [vmem:[%s11] sm:$0xff]
        %v635 = vld [vmem:[%s11 + $0x8] sm:$0xff]
        %v636 = vld [vmem:[%s11 + $0x10] sm:$0xff]
        %v637 = vld [vmem:[%s11 + $0x18] sm:$0xff]
        %v638 = vld [vmem:[%s13] sm:$0x1]
        %639 = vmatprep.subr.mxu0 0.0
        %640 = vmatpush1.msra.mxu0 %v634
        %641 = vmatprep.subr.mxu0 0.0
        %642 = vmatpush1.msra.mxu0 %v635
        %643 = vmatprep.subr.mxu0 0.0
        %644 = vmatpush1.msra.mxu0 %v636
        %645 = vmatprep.subr.mxu0 0.0
        %646 = vmatpush1.msra.mxu0 %v637
        %647 = vmatprep.subr.mxu0 0.0
        %648 = vmatpush1.msra.mxu0 0.0
        %649 = vmatprep.subr.mxu0 0.0
        %650 = vmatpush1.msra.mxu0 0.0
        %651 = vmatprep.subr.mxu0 0.0
        %652 = vmatpush1.msra.mxu0 0.0
        %653 = vmatprep.subr.mxu0 0.0
        %654 = vmatpush1.msra.mxu0 0.0
        %655 = vmatprep.subr.mxu0 0.0
        %656 = vmatpush1.msra.mxu0 0.0
        %657 = vmatprep.subr.mxu0 0.0
        %658 = vmatpush1.msra.mxu0 0.0
        %659 = vmatprep.subr.mxu0 0.0
        %660 = vmatpush1.msra.mxu0 0.0
        %661 = vmatprep.subr.mxu0 0.0
        %662 = vmatpush1.msra.mxu0 0.0
        %663 = vmatprep.subr.mxu0 0.0
        %664 = vmatpush1.msra.mxu0 0.0
        %665 = vmatprep.subr.mxu0 0.0
        %666 = vmatpush1.msra.mxu0 0.0
        %667 = vmatprep.subr.mxu0 0.0
        %668 = vmatpush1.msra.mxu0 0.0
        %669 = vmatprep.subr.mxu0 0.0
        %670 = vmatpush1.msra.mxu0 0.0
        %671 = vmatprep.subr.mxu0 0.0
        %672 = vmatpush1.msra.mxu0 0.0
        %673 = vmatprep.subr.mxu0 0.0
        %674 = vmatpush1.msra.mxu0 0.0
        %675 = vmatprep.subr.mxu0 0.0
        %676 = vmatpush1.msra.mxu0 0.0
        %677 = vmatprep.subr.mxu0 0.0
        %678 = vmatpush1.msra.mxu0 0.0
        %679 = vmatprep.subr.mxu0 0.0
        %680 = vmatpush1.msra.mxu0 0.0
        %681 = vmatprep.subr.mxu0 0.0
        %682 = vmatpush1.msra.mxu0 0.0
        %683 = vmatprep.subr.mxu0 0.0
        %684 = vmatpush1.msra.mxu0 0.0
        %685 = vmatprep.subr.mxu0 0.0
        %686 = vmatpush1.msra.mxu0 0.0
        %687 = vmatprep.subr.mxu0 0.0
        %688 = vmatpush1.msra.mxu0 0.0
        %689 = vmatprep.subr.mxu0 0.0
        %690 = vmatpush1.msra.mxu0 0.0
        %691 = vmatprep.subr.mxu0 0.0
        %692 = vmatpush1.msra.mxu0 0.0
        %693 = vmatprep.subr.mxu0 0.0
        %694 = vmatpush1.msra.mxu0 0.0
        %695 = vmatprep.subr.mxu0 0.0
        %696 = vmatpush1.msra.mxu0 0.0
        %697 = vmatprep.subr.mxu0 0.0
        %698 = vmatpush1.msra.mxu0 0.0
        %699 = vmatprep.subr.mxu0 0.0
        %700 = vmatpush1.msra.mxu0 0.0
        %701 = vmatprep.subr.mxu0 0.0
        %702 = vmatpush1.msra.mxu0 0.0
        %703 = vmatprep.mubr.f32.mxu0 0.0
        %704 = vmatmul.mubr.f32.gmra.mrb[0].mxu0 %v562
        %v705 = vpop.f32.mrb[0].mxu0
        %v706 = vadd.f32 %v638, %v705
        %v707 = vpop.f32.mrb[0].mxu0
        %708 = vdwg.mxu0
        %vm709 = vcmask 97280
        %710 = vst.msk [vmem:[#allocation2] sm:$0xff] %vm709, 0
        %s711 = scalar_lea.vmem [#allocation2], 136
        %712 = vst.msk [vmem:[%s711] sm:$0xff] %vm709, 0
        %s713 = scalar_lea.vmem [#allocation2], 8
        %vm714 = vcmask 24576
        %vm715 = vsmask.f32 256
        %vm716 = vmand %vm714, %vm715
        %v717 = vld [vmem:[%s713] sm:$0x1]
        %v718 = vsel %vm716, 0, %v717
        %719 = vst [vmem:[%s713] sm:$0x1] %v718
        %v720 = vld [vmem:[%s713 + $0x8] sm:$0x1]
        %v721 = vsel %vm716, 0, %v720
        %722 = vst [vmem:[%s713 + $0x8] sm:$0x1] %v721
        %v723 = vld [vmem:[%s713 + $0x10] sm:$0x1]
        %v724 = vsel %vm716, 0, %v723
        %725 = vst [vmem:[%s713 + $0x10] sm:$0x1] %v724
        %v726 = vld [vmem:[%s713 + $0x18] sm:$0x1]
        %v727 = vsel %vm716, 0, %v726
        %728 = vst [vmem:[%s713 + $0x18] sm:$0x1] %v727
        %v729 = vld [vmem:[%s713 + $0x20] sm:$0x1]
        %v730 = vsel %vm716, 0, %v729
        %731 = vst [vmem:[%s713 + $0x20] sm:$0x1] %v730
        %v732 = vld [vmem:[%s713 + $0x28] sm:$0x1]
        %v733 = vsel %vm716, 0, %v732
        %734 = vst [vmem:[%s713 + $0x28] sm:$0x1] %v733
        %v735 = vld [vmem:[%s713 + $0x30] sm:$0x1]
        %v736 = vsel %vm716, 0, %v735
        %737 = vst [vmem:[%s713 + $0x30] sm:$0x1] %v736
        %v738 = vld [vmem:[%s713 + $0x38] sm:$0x1]
        %v739 = vsel %vm716, 0, %v738
        %740 = vst [vmem:[%s713 + $0x38] sm:$0x1] %v739
        %v741 = vld [vmem:[%s713 + $0x40] sm:$0x1]
        %v742 = vsel %vm716, 0, %v741
        %743 = vst [vmem:[%s713 + $0x40] sm:$0x1] %v742
        %v744 = vld [vmem:[%s713 + $0x48] sm:$0x1]
        %v745 = vsel %vm716, 0, %v744
        %746 = vst [vmem:[%s713 + $0x48] sm:$0x1] %v745
        %v747 = vld [vmem:[%s713 + $0x50] sm:$0x1]
        %v748 = vsel %vm716, 0, %v747
        %749 = vst [vmem:[%s713 + $0x50] sm:$0x1] %v748
        %v750 = vld [vmem:[%s713 + $0x58] sm:$0x1]
        %v751 = vsel %vm716, 0, %v750
        %752 = vst [vmem:[%s713 + $0x58] sm:$0x1] %v751
        %v753 = vld [vmem:[%s713 + $0x60] sm:$0x1]
        %v754 = vsel %vm716, 0, %v753
        %755 = vst [vmem:[%s713 + $0x60] sm:$0x1] %v754
        %v756 = vld [vmem:[%s713 + $0x68] sm:$0x1]
        %v757 = vsel %vm716, 0, %v756
        %758 = vst [vmem:[%s713 + $0x68] sm:$0x1] %v757
        %v759 = vld [vmem:[%s713 + $0x70] sm:$0x1]
        %v760 = vsel %vm716, 0, %v759
        %761 = vst [vmem:[%s713 + $0x70] sm:$0x1] %v760
        %v762 = vld [vmem:[%s713 + $0x78] sm:$0x1]
        %v763 = vsel %vm716, 0, %v762
        %764 = vst [vmem:[%s713 + $0x78] sm:$0x1] %v763
        %vm765 = vcmask 97351
        %vm766 = vsmask.f32 7966
        %vm767 = vmand %vm765, %vm766
        %v768 = vld [vmem:[%s713] sm:$0x80]
        %v769 = vsel %vm767, 0, %v768
        %770 = vst [vmem:[%s713] sm:$0x80] %v769
        %v771 = vld [vmem:[%s713 + $0x8] sm:$0x80]
        %v772 = vsel %vm767, 0, %v771
        %773 = vst [vmem:[%s713 + $0x8] sm:$0x80] %v772
        %v774 = vld [vmem:[%s713 + $0x10] sm:$0x80]
        %v775 = vsel %vm767, 0, %v774
        %776 = vst [vmem:[%s713 + $0x10] sm:$0x80] %v775
        %v777 = vld [vmem:[%s713 + $0x18] sm:$0x80]
        %v778 = vsel %vm767, 0, %v777
        %779 = vst [vmem:[%s713 + $0x18] sm:$0x80] %v778
        %v780 = vld [vmem:[%s713 + $0x20] sm:$0x80]
        %v781 = vsel %vm767, 0, %v780
        %782 = vst [vmem:[%s713 + $0x20] sm:$0x80] %v781
        %v783 = vld [vmem:[%s713 + $0x28] sm:$0x80]
        %v784 = vsel %vm767, 0, %v783
        %785 = vst [vmem:[%s713 + $0x28] sm:$0x80] %v784
        %v786 = vld [vmem:[%s713 + $0x30] sm:$0x80]
        %v787 = vsel %vm767, 0, %v786
        %788 = vst [vmem:[%s713 + $0x30] sm:$0x80] %v787
        %v789 = vld [vmem:[%s713 + $0x38] sm:$0x80]
        %v790 = vsel %vm767, 0, %v789
        %791 = vst [vmem:[%s713 + $0x38] sm:$0x80] %v790
        %v792 = vld [vmem:[%s713 + $0x40] sm:$0x80]
        %v793 = vsel %vm767, 0, %v792
        %794 = vst [vmem:[%s713 + $0x40] sm:$0x80] %v793
        %v795 = vld [vmem:[%s713 + $0x48] sm:$0x80]
        %v796 = vsel %vm767, 0, %v795
        %797 = vst [vmem:[%s713 + $0x48] sm:$0x80] %v796
        %v798 = vld [vmem:[%s713 + $0x50] sm:$0x80]
        %v799 = vsel %vm767, 0, %v798
        %800 = vst [vmem:[%s713 + $0x50] sm:$0x80] %v799
        %v801 = vld [vmem:[%s713 + $0x58] sm:$0x80]
        %v802 = vsel %vm767, 0, %v801
        %803 = vst [vmem:[%s713 + $0x58] sm:$0x80] %v802
        %v804 = vld [vmem:[%s713 + $0x60] sm:$0x80]
        %v805 = vsel %vm767, 0, %v804
        %806 = vst [vmem:[%s713 + $0x60] sm:$0x80] %v805
        %v807 = vld [vmem:[%s713 + $0x68] sm:$0x80]
        %v808 = vsel %vm767, 0, %v807
        %809 = vst [vmem:[%s713 + $0x68] sm:$0x80] %v808
        %v810 = vld [vmem:[%s713 + $0x70] sm:$0x80]
        %v811 = vsel %vm767, 0, %v810
        %812 = vst [vmem:[%s713 + $0x70] sm:$0x80] %v811
        %v813 = vld [vmem:[%s713 + $0x78] sm:$0x80]
        %v814 = vsel %vm767, 0, %v813
        %815 = vst [vmem:[%s713 + $0x78] sm:$0x80] %v814
        %v816 = vld [vmem:[%s546] sm:$0xf]
        %v817 = vld [vmem:[%s546 + $0x4] sm:$0xf]
        %v818 = vld [vmem:[%s546 + $0x8] sm:$0xf]
        %v819 = vld [vmem:[%s546 + $0xc] sm:$0xf]
        %v820 = vld [vmem:[%s546 + $0x10] sm:$0xf]
        %v821 = vld [vmem:[%s546 + $0x14] sm:$0xf]
        %v822 = vld [vmem:[%s546 + $0x18] sm:$0xf]
        %v823 = vld [vmem:[%s546 + $0x1c] sm:$0xf]
        %v824 = vld [vmem:[%s546 + $0x20] sm:$0xf]
        %v825 = vld [vmem:[%s546 + $0x24] sm:$0xf]
        %v826 = vld [vmem:[%s546 + $0x28] sm:$0xf]
        %v827 = vld [vmem:[%s546 + $0x2c] sm:$0xf]
        %v828 = vld [vmem:[%s546 + $0x30] sm:$0xf]
        %v829 = vld [vmem:[%s546 + $0x34] sm:$0xf]
        %v830 = vld [vmem:[%s546 + $0x38] sm:$0xf]
        %v831 = vld [vmem:[%s546 + $0x3c] sm:$0xf]
        %v832 = vld [vmem:[%s546 + $0x40] sm:$0xf]
        %v833 = vld [vmem:[%s546 + $0x44] sm:$0xf]
        %v834 = vld [vmem:[%s546 + $0x48] sm:$0xf]
        %v835 = vld [vmem:[%s546 + $0x4c] sm:$0xf]
        %v836 = vld [vmem:[%s546 + $0x50] sm:$0xf]
        %v837 = vld [vmem:[%s546 + $0x54] sm:$0xf]
        %v838 = vld [vmem:[%s546 + $0x58] sm:$0xf]
        %v839 = vld [vmem:[%s546 + $0x5c] sm:$0xf]
        %v840 = vld [vmem:[%s546 + $0x60] sm:$0xf]
        %v841 = vld [vmem:[%s546 + $0x64] sm:$0xf]
        %v842 = vld [vmem:[%s546 + $0x68] sm:$0xf]
        %v843 = vld [vmem:[%s546 + $0x6c] sm:$0xf]
        %v844 = vld [vmem:[%s546 + $0x70] sm:$0xf]
        %v845 = vld [vmem:[%s546 + $0x74] sm:$0xf]
        %v846 = vld [vmem:[%s546 + $0x78] sm:$0xf]
        %v847 = vld [vmem:[%s546 + $0x7c] sm:$0xf]
        %v880 = vunpack.c.l.b16 %v816
        %v881 = vunpack.c.l.b16 %v817
        %v882 = vunpack.c.l.b16 %v818
        %v883 = vunpack.c.l.b16 %v819
        %v884 = vunpack.c.l.b16 %v820
        %v885 = vunpack.c.l.b16 %v821
        %v886 = vunpack.c.l.b16 %v822
        %v887 = vunpack.c.l.b16 %v823
        %v888 = vunpack.c.l.b16 %v824
        %v889 = vunpack.c.l.b16 %v825
        %v890 = vunpack.c.l.b16 %v826
        %v891 = vunpack.c.l.b16 %v827
        %v892 = vunpack.c.l.b16 %v828
        %v893 = vunpack.c.l.b16 %v829
        %v894 = vunpack.c.l.b16 %v830
        %v895 = vunpack.c.l.b16 %v831
        %v896 = vunpack.c.l.b16 %v832
        %v897 = vunpack.c.l.b16 %v833
        %v898 = vunpack.c.l.b16 %v834
        %v899 = vunpack.c.l.b16 %v835
        %v900 = vunpack.c.l.b16 %v836
        %v901 = vunpack.c.l.b16 %v837
        %v902 = vunpack.c.l.b16 %v838
        %v903 = vunpack.c.l.b16 %v839
        %v904 = vunpack.c.l.b16 %v840
        %v905 = vunpack.c.l.b16 %v841
        %v906 = vunpack.c.l.b16 %v842
        %v907 = vunpack.c.l.b16 %v843
        %v908 = vunpack.c.l.b16 %v844
        %v909 = vunpack.c.l.b16 %v845
        %v910 = vunpack.c.l.b16 %v846
        %v911 = vunpack.c.l.b16 %v847
        %v912 = vpack.c.b16 %v881, %v880
        %v913 = vpack.c.b16 %v883, %v882
        %v914 = vpack.c.b16 %v885, %v884
        %v915 = vpack.c.b16 %v887, %v886
        %v916 = vpack.c.b16 %v889, %v888
        %v917 = vpack.c.b16 %v891, %v890
        %v918 = vpack.c.b16 %v893, %v892
        %v919 = vpack.c.b16 %v895, %v894
        %v920 = vpack.c.b16 %v897, %v896
        %v921 = vpack.c.b16 %v899, %v898
        %v922 = vpack.c.b16 %v901, %v900
        %v923 = vpack.c.b16 %v903, %v902
        %v924 = vpack.c.b16 %v905, %v904
        %v925 = vpack.c.b16 %v907, %v906
        %v926 = vpack.c.b16 %v909, %v908
        %v927 = vpack.c.b16 %v911, %v910
        %v929 = vshrl.u32 %v912, 16
        %v931 = vrot.slane %v929, 7
        %v932 = vshll.u32 %v912, 16
        %v934 = vor.u32 %v931, %v932
        %v936 = vshrl.u32 %v913, 16
        %v938 = vrot.slane %v936, 7
        %v939 = vshll.u32 %v913, 16
        %v941 = vor.u32 %v938, %v939
        %v943 = vshrl.u32 %v914, 16
        %v945 = vrot.slane %v943, 7
        %v946 = vshll.u32 %v914, 16
        %v948 = vor.u32 %v945, %v946
        %v950 = vshrl.u32 %v915, 16
        %v952 = vrot.slane %v950, 7
        %v953 = vshll.u32 %v915, 16
        %v955 = vor.u32 %v952, %v953
        %v957 = vshrl.u32 %v916, 16
        %v959 = vrot.slane %v957, 7
        %v960 = vshll.u32 %v916, 16
        %v962 = vor.u32 %v959, %v960
        %v964 = vshrl.u32 %v917, 16
        %v966 = vrot.slane %v964, 7
        %v967 = vshll.u32 %v917, 16
        %v969 = vor.u32 %v966, %v967
        %v971 = vshrl.u32 %v918, 16
        %v973 = vrot.slane %v971, 7
        %v974 = vshll.u32 %v918, 16
        %v976 = vor.u32 %v973, %v974
        %v978 = vshrl.u32 %v919, 16
        %v980 = vrot.slane %v978, 7
        %v981 = vshll.u32 %v919, 16
        %v983 = vor.u32 %v980, %v981
        %v985 = vshrl.u32 %v920, 16
        %v987 = vrot.slane %v985, 7
        %v988 = vshll.u32 %v920, 16
        %v990 = vor.u32 %v987, %v988
        %v992 = vshrl.u32 %v921, 16
        %v994 = vrot.slane %v992, 7
        %v995 = vshll.u32 %v921, 16
        %v997 = vor.u32 %v994, %v995
        %v999 = vshrl.u32 %v922, 16
        %v1001 = vrot.slane %v999, 7
        %v1002 = vshll.u32 %v922, 16
        %v1004 = vor.u32 %v1001, %v1002
        %v1006 = vshrl.u32 %v923, 16
        %v1008 = vrot.slane %v1006, 7
        %v1009 = vshll.u32 %v923, 16
        %v1011 = vor.u32 %v1008, %v1009
        %v1013 = vshrl.u32 %v924, 16
        %v1015 = vrot.slane %v1013, 7
        %v1016 = vshll.u32 %v924, 16
        %v1018 = vor.u32 %v1015, %v1016
        %v1020 = vshrl.u32 %v925, 16
        %v1022 = vrot.slane %v1020, 7
        %v1023 = vshll.u32 %v925, 16
        %v1025 = vor.u32 %v1022, %v1023
        %v1027 = vshrl.u32 %v926, 16
        %v1029 = vrot.slane %v1027, 7
        %v1030 = vshll.u32 %v926, 16
        %v1032 = vor.u32 %v1029, %v1030
        %v1034 = vshrl.u32 %v927, 16
        %v1036 = vrot.slane %v1034, 7
        %v1037 = vshll.u32 %v927, 16
        %v1039 = vor.u32 %v1036, %v1037
        %vm1056 = vcmask 31744
        %vm1057 = vsmask.f32 7938
        %vm1058 = vmand %vm1056, %vm1057
        %v1059 = vld [vmem:[%s713] sm:$0xff]
        %v1060 = vsel %vm1058, %v934, %v1059
        %1061 = vst [vmem:[%s713] sm:$0xff] %v1060
        %v1062 = vld [vmem:[%s713 + $0x8] sm:$0xff]
        %v1063 = vsel %vm1058, %v941, %v1062
        %1064 = vst [vmem:[%s713 + $0x8] sm:$0xff] %v1063
        %v1065 = vld [vmem:[%s713 + $0x10] sm:$0xff]
        %v1066 = vsel %vm1058, %v948, %v1065
        %1067 = vst [vmem:[%s713 + $0x10] sm:$0xff] %v1066
        %v1068 = vld [vmem:[%s713 + $0x18] sm:$0xff]
        %v1069 = vsel %vm1058, %v955, %v1068
        %1070 = vst [vmem:[%s713 + $0x18] sm:$0xff] %v1069
        %v1071 = vld [vmem:[%s713 + $0x20] sm:$0xff]
        %v1072 = vsel %vm1058, %v962, %v1071
        %1073 = vst [vmem:[%s713 + $0x20] sm:$0xff] %v1072
        %v1074 = vld [vmem:[%s713 + $0x28] sm:$0xff]
        %v1075 = vsel %vm1058, %v969, %v1074
        %1076 = vst [vmem:[%s713 + $0x28] sm:$0xff] %v1075
        %v1077 = vld [vmem:[%s713 + $0x30] sm:$0xff]
        %v1078 = vsel %vm1058, %v976, %v1077
        %1079 = vst [vmem:[%s713 + $0x30] sm:$0xff] %v1078
        %v1080 = vld [vmem:[%s713 + $0x38] sm:$0xff]
        %v1081 = vsel %vm1058, %v983, %v1080
        %1082 = vst [vmem:[%s713 + $0x38] sm:$0xff] %v1081
        %v1083 = vld [vmem:[%s713 + $0x40] sm:$0xff]
        %v1084 = vsel %vm1058, %v990, %v1083
        %1085 = vst [vmem:[%s713 + $0x40] sm:$0xff] %v1084
        %v1086 = vld [vmem:[%s713 + $0x48] sm:$0xff]
        %v1087 = vsel %vm1058, %v997, %v1086
        %1088 = vst [vmem:[%s713 + $0x48] sm:$0xff] %v1087
        %v1089 = vld [vmem:[%s713 + $0x50] sm:$0xff]
        %v1090 = vsel %vm1058, %v1004, %v1089
        %1091 = vst [vmem:[%s713 + $0x50] sm:$0xff] %v1090
        %v1092 = vld [vmem:[%s713 + $0x58] sm:$0xff]
        %v1093 = vsel %vm1058, %v1011, %v1092
        %1094 = vst [vmem:[%s713 + $0x58] sm:$0xff] %v1093
        %v1095 = vld [vmem:[%s713 + $0x60] sm:$0xff]
        %v1096 = vsel %vm1058, %v1018, %v1095
        %1097 = vst [vmem:[%s713 + $0x60] sm:$0xff] %v1096
        %v1098 = vld [vmem:[%s713 + $0x68] sm:$0xff]
        %v1099 = vsel %vm1058, %v1025, %v1098
        %1100 = vst [vmem:[%s713 + $0x68] sm:$0xff] %v1099
        %v1101 = vld [vmem:[%s713 + $0x70] sm:$0xff]
        %v1102 = vsel %vm1058, %v1032, %v1101
        %1103 = vst [vmem:[%s713 + $0x70] sm:$0xff] %v1102
        %v1104 = vld [vmem:[%s713 + $0x78] sm:$0xff]
        %v1105 = vsel %vm1058, %v1039, %v1104
        %1106 = vst [vmem:[%s713 + $0x78] sm:$0xff] %v1105
        %v1107 = vld [vmem:[%s546] sm:$0xf]
        %v1108 = vld [vmem:[%s546 + $0x4] sm:$0xf]
        %v1109 = vld [vmem:[%s546 + $0x8] sm:$0xf]
        %v1110 = vld [vmem:[%s546 + $0xc] sm:$0xf]
        %v1111 = vld [vmem:[%s546 + $0x10] sm:$0xf]
        %v1112 = vld [vmem:[%s546 + $0x14] sm:$0xf]
        %v1113 = vld [vmem:[%s546 + $0x18] sm:$0xf]
        %v1114 = vld [vmem:[%s546 + $0x1c] sm:$0xf]
        %v1115 = vld [vmem:[%s546 + $0x20] sm:$0xf]
        %v1116 = vld [vmem:[%s546 + $0x24] sm:$0xf]
        %v1117 = vld [vmem:[%s546 + $0x28] sm:$0xf]
        %v1118 = vld [vmem:[%s546 + $0x2c] sm:$0xf]
        %v1119 = vld [vmem:[%s546 + $0x30] sm:$0xf]
        %v1120 = vld [vmem:[%s546 + $0x34] sm:$0xf]
        %v1121 = vld [vmem:[%s546 + $0x38] sm:$0xf]
        %v1122 = vld [vmem:[%s546 + $0x3c] sm:$0xf]
        %v1123 = vld [vmem:[%s546 + $0x40] sm:$0xf]
        %v1124 = vld [vmem:[%s546 + $0x44] sm:$0xf]
        %v1125 = vld [vmem:[%s546 + $0x48] sm:$0xf]
        %v1126 = vld [vmem:[%s546 + $0x4c] sm:$0xf]
        %v1127 = vld [vmem:[%s546 + $0x50] sm:$0xf]
        %v1128 = vld [vmem:[%s546 + $0x54] sm:$0xf]
        %v1129 = vld [vmem:[%s546 + $0x58] sm:$0xf]
        %v1130 = vld [vmem:[%s546 + $0x5c] sm:$0xf]
        %v1131 = vld [vmem:[%s546 + $0x60] sm:$0xf]
        %v1132 = vld [vmem:[%s546 + $0x64] sm:$0xf]
        %v1133 = vld [vmem:[%s546 + $0x68] sm:$0xf]
        %v1134 = vld [vmem:[%s546 + $0x6c] sm:$0xf]
        %v1135 = vld [vmem:[%s546 + $0x70] sm:$0xf]
        %v1136 = vld [vmem:[%s546 + $0x74] sm:$0xf]
        %v1137 = vld [vmem:[%s546 + $0x78] sm:$0xf]
        %v1138 = vld [vmem:[%s546 + $0x7c] sm:$0xf]
        %v1171 = vunpack.c.l.b16 %v1107
        %v1172 = vunpack.c.l.b16 %v1108
        %v1173 = vunpack.c.l.b16 %v1109
        %v1174 = vunpack.c.l.b16 %v1110
        %v1175 = vunpack.c.l.b16 %v1111
        %v1176 = vunpack.c.l.b16 %v1112
        %v1177 = vunpack.c.l.b16 %v1113
        %v1178 = vunpack.c.l.b16 %v1114
        %v1179 = vunpack.c.l.b16 %v1115
        %v1180 = vunpack.c.l.b16 %v1116
        %v1181 = vunpack.c.l.b16 %v1117
        %v1182 = vunpack.c.l.b16 %v1118
        %v1183 = vunpack.c.l.b16 %v1119
        %v1184 = vunpack.c.l.b16 %v1120
        %v1185 = vunpack.c.l.b16 %v1121
        %v1186 = vunpack.c.l.b16 %v1122
        %v1187 = vunpack.c.l.b16 %v1123
        %v1188 = vunpack.c.l.b16 %v1124
        %v1189 = vunpack.c.l.b16 %v1125
        %v1190 = vunpack.c.l.b16 %v1126
        %v1191 = vunpack.c.l.b16 %v1127
        %v1192 = vunpack.c.l.b16 %v1128
        %v1193 = vunpack.c.l.b16 %v1129
        %v1194 = vunpack.c.l.b16 %v1130
        %v1195 = vunpack.c.l.b16 %v1131
        %v1196 = vunpack.c.l.b16 %v1132
        %v1197 = vunpack.c.l.b16 %v1133
        %v1198 = vunpack.c.l.b16 %v1134
        %v1199 = vunpack.c.l.b16 %v1135
        %v1200 = vunpack.c.l.b16 %v1136
        %v1201 = vunpack.c.l.b16 %v1137
        %v1202 = vunpack.c.l.b16 %v1138
        %v1203 = vpack.c.b16 %v1172, %v1171
        %v1204 = vpack.c.b16 %v1174, %v1173
        %v1205 = vpack.c.b16 %v1176, %v1175
        %v1206 = vpack.c.b16 %v1178, %v1177
        %v1207 = vpack.c.b16 %v1180, %v1179
        %v1208 = vpack.c.b16 %v1182, %v1181
        %v1209 = vpack.c.b16 %v1184, %v1183
        %v1210 = vpack.c.b16 %v1186, %v1185
        %v1211 = vpack.c.b16 %v1188, %v1187
        %v1212 = vpack.c.b16 %v1190, %v1189
        %v1213 = vpack.c.b16 %v1192, %v1191
        %v1214 = vpack.c.b16 %v1194, %v1193
        %v1215 = vpack.c.b16 %v1196, %v1195
        %v1216 = vpack.c.b16 %v1198, %v1197
        %v1217 = vpack.c.b16 %v1200, %v1199
        %v1218 = vpack.c.b16 %v1202, %v1201
        %1219 = vrot.lane.b32.xlu0 %v1203, 4
        %v1220 = vpop.permute.xlu0 %1219
        %1221 = vrot.lane.b32.xlu0 %v1204, 4
        %v1222 = vpop.permute.xlu0 %1221
        %1223 = vrot.lane.b32.xlu0 %v1205, 4
        %v1224 = vpop.permute.xlu0 %1223
        %1225 = vrot.lane.b32.xlu0 %v1206, 4
        %v1226 = vpop.permute.xlu0 %1225
        %1227 = vrot.lane.b32.xlu0 %v1207, 4
        %v1228 = vpop.permute.xlu0 %1227
        %1229 = vrot.lane.b32.xlu0 %v1208, 4
        %v1230 = vpop.permute.xlu0 %1229
        %1231 = vrot.lane.b32.xlu0 %v1209, 4
        %v1232 = vpop.permute.xlu0 %1231
        %1233 = vrot.lane.b32.xlu0 %v1210, 4
        %v1234 = vpop.permute.xlu0 %1233
        %1235 = vrot.lane.b32.xlu0 %v1211, 4
        %v1236 = vpop.permute.xlu0 %1235
        %1237 = vrot.lane.b32.xlu0 %v1212, 4
        %v1238 = vpop.permute.xlu0 %1237
        %1239 = vrot.lane.b32.xlu0 %v1213, 4
        %v1240 = vpop.permute.xlu0 %1239
        %1241 = vrot.lane.b32.xlu0 %v1214, 4
        %v1242 = vpop.permute.xlu0 %1241
        %1243 = vrot.lane.b32.xlu0 %v1215, 4
        %v1244 = vpop.permute.xlu0 %1243
        %1245 = vrot.lane.b32.xlu0 %v1216, 4
        %v1246 = vpop.permute.xlu0 %1245
        %1247 = vrot.lane.b32.xlu0 %v1217, 4
        %v1248 = vpop.permute.xlu0 %1247
        %1249 = vrot.lane.b32.xlu0 %v1218, 4
        %v1250 = vpop.permute.xlu0 %1249
        %vm1267 = vcmask 64544
        %1268 = vst.msk [vmem:[%s713] sm:$0xff] %vm1267, %v1220
        %1269 = vst.msk [vmem:[%s713 + $0x8] sm:$0xff] %vm1267, %v1222
        %1270 = vst.msk [vmem:[%s713 + $0x10] sm:$0xff] %vm1267, %v1224
        %1271 = vst.msk [vmem:[%s713 + $0x18] sm:$0xff] %vm1267, %v1226
        %1272 = vst.msk [vmem:[%s713 + $0x20] sm:$0xff] %vm1267, %v1228
        %1273 = vst.msk [vmem:[%s713 + $0x28] sm:$0xff] %vm1267, %v1230
        %1274 = vst.msk [vmem:[%s713 + $0x30] sm:$0xff] %vm1267, %v1232
        %1275 = vst.msk [vmem:[%s713 + $0x38] sm:$0xff] %vm1267, %v1234
        %1276 = vst.msk [vmem:[%s713 + $0x40] sm:$0xff] %vm1267, %v1236
        %1277 = vst.msk [vmem:[%s713 + $0x48] sm:$0xff] %vm1267, %v1238
        %1278 = vst.msk [vmem:[%s713 + $0x50] sm:$0xff] %vm1267, %v1240
        %1279 = vst.msk [vmem:[%s713 + $0x58] sm:$0xff] %vm1267, %v1242
        %1280 = vst.msk [vmem:[%s713 + $0x60] sm:$0xff] %vm1267, %v1244
        %1281 = vst.msk [vmem:[%s713 + $0x68] sm:$0xff] %vm1267, %v1246
        %1282 = vst.msk [vmem:[%s713 + $0x70] sm:$0xff] %vm1267, %v1248
        %1283 = vst.msk [vmem:[%s713 + $0x78] sm:$0xff] %vm1267, %v1250
        %v1284 = vld [vmem:[%s546] sm:$0xf]
        %v1285 = vld [vmem:[%s546 + $0x4] sm:$0xf]
        %v1286 = vld [vmem:[%s546 + $0x8] sm:$0xf]
        %v1287 = vld [vmem:[%s546 + $0xc] sm:$0xf]
        %v1288 = vld [vmem:[%s546 + $0x10] sm:$0xf]
        %v1289 = vld [vmem:[%s546 + $0x14] sm:$0xf]
        %v1290 = vld [vmem:[%s546 + $0x18] sm:$0xf]
        %v1291 = vld [vmem:[%s546 + $0x1c] sm:$0xf]
        %v1292 = vld [vmem:[%s546 + $0x20] sm:$0xf]
        %v1293 = vld [vmem:[%s546 + $0x24] sm:$0xf]
        %v1294 = vld [vmem:[%s546 + $0x28] sm:$0xf]
        %v1295 = vld [vmem:[%s546 + $0x2c] sm:$0xf]
        %v1296 = vld [vmem:[%s546 + $0x30] sm:$0xf]
        %v1297 = vld [vmem:[%s546 + $0x34] sm:$0xf]
        %v1298 = vld [vmem:[%s546 + $0x38] sm:$0xf]
        %v1299 = vld [vmem:[%s546 + $0x3c] sm:$0xf]
        %v1300 = vld [vmem:[%s546 + $0x40] sm:$0xf]
        %v1301 = vld [vmem:[%s546 + $0x44] sm:$0xf]
        %v1302 = vld [vmem:[%s546 + $0x48] sm:$0xf]
        %v1303 = vld [vmem:[%s546 + $0x4c] sm:$0xf]
        %v1304 = vld [vmem:[%s546 + $0x50] sm:$0xf]
        %v1305 = vld [vmem:[%s546 + $0x54] sm:$0xf]
        %v1306 = vld [vmem:[%s546 + $0x58] sm:$0xf]
        %v1307 = vld [vmem:[%s546 + $0x5c] sm:$0xf]
        %v1308 = vld [vmem:[%s546 + $0x60] sm:$0xf]
        %v1309 = vld [vmem:[%s546 + $0x64] sm:$0xf]
        %v1310 = vld [vmem:[%s546 + $0x68] sm:$0xf]
        %v1311 = vld [vmem:[%s546 + $0x6c] sm:$0xf]
        %v1312 = vld [vmem:[%s546 + $0x70] sm:$0xf]
        %v1313 = vld [vmem:[%s546 + $0x74] sm:$0xf]
        %v1314 = vld [vmem:[%s546 + $0x78] sm:$0xf]
        %v1315 = vld [vmem:[%s546 + $0x7c] sm:$0xf]
        %v1348 = vunpack.c.l.b16 %v1284
        %v1349 = vunpack.c.l.b16 %v1285
        %v1350 = vunpack.c.l.b16 %v1286
        %v1351 = vunpack.c.l.b16 %v1287
        %v1352 = vunpack.c.l.b16 %v1288
        %v1353 = vunpack.c.l.b16 %v1289
        %v1354 = vunpack.c.l.b16 %v1290
        %v1355 = vunpack.c.l.b16 %v1291
        %v1356 = vunpack.c.l.b16 %v1292
        %v1357 = vunpack.c.l.b16 %v1293
        %v1358 = vunpack.c.l.b16 %v1294
        %v1359 = vunpack.c.l.b16 %v1295
        %v1360 = vunpack.c.l.b16 %v1296
        %v1361 = vunpack.c.l.b16 %v1297
        %v1362 = vunpack.c.l.b16 %v1298
        %v1363 = vunpack.c.l.b16 %v1299
        %v1364 = vunpack.c.l.b16 %v1300
        %v1365 = vunpack.c.l.b16 %v1301
        %v1366 = vunpack.c.l.b16 %v1302
        %v1367 = vunpack.c.l.b16 %v1303
        %v1368 = vunpack.c.l.b16 %v1304
        %v1369 = vunpack.c.l.b16 %v1305
        %v1370 = vunpack.c.l.b16 %v1306
        %v1371 = vunpack.c.l.b16 %v1307
        %v1372 = vunpack.c.l.b16 %v1308
        %v1373 = vunpack.c.l.b16 %v1309
        %v1374 = vunpack.c.l.b16 %v1310
        %v1375 = vunpack.c.l.b16 %v1311
        %v1376 = vunpack.c.l.b16 %v1312
        %v1377 = vunpack.c.l.b16 %v1313
        %v1378 = vunpack.c.l.b16 %v1314
        %v1379 = vunpack.c.l.b16 %v1315
        %v1380 = vpack.c.b16 %v1349, %v1348
        %v1381 = vpack.c.b16 %v1351, %v1350
        %v1382 = vpack.c.b16 %v1353, %v1352
        %v1383 = vpack.c.b16 %v1355, %v1354
        %v1384 = vpack.c.b16 %v1357, %v1356
        %v1385 = vpack.c.b16 %v1359, %v1358
        %v1386 = vpack.c.b16 %v1361, %v1360
        %v1387 = vpack.c.b16 %v1363, %v1362
        %v1388 = vpack.c.b16 %v1365, %v1364
        %v1389 = vpack.c.b16 %v1367, %v1366
        %v1390 = vpack.c.b16 %v1369, %v1368
        %v1391 = vpack.c.b16 %v1371, %v1370
        %v1392 = vpack.c.b16 %v1373, %v1372
        %v1393 = vpack.c.b16 %v1375, %v1374
        %v1394 = vpack.c.b16 %v1377, %v1376
        %v1395 = vpack.c.b16 %v1379, %v1378
        %v1397 = vshrl.u32 %v1380, 16
        %v1399 = vshll.u32 %v1380, 16
        %v1401 = vrot.slane %v1399, 1
        %v1402 = vor.u32 %v1397, %v1401
        %v1404 = vshrl.u32 %v1381, 16
        %v1406 = vshll.u32 %v1381, 16
        %v1408 = vrot.slane %v1406, 1
        %v1409 = vor.u32 %v1404, %v1408
        %v1411 = vshrl.u32 %v1382, 16
        %v1413 = vshll.u32 %v1382, 16
        %v1415 = vrot.slane %v1413, 1
        %v1416 = vor.u32 %v1411, %v1415
        %v1418 = vshrl.u32 %v1383, 16
        %v1420 = vshll.u32 %v1383, 16
        %v1422 = vrot.slane %v1420, 1
        %v1423 = vor.u32 %v1418, %v1422
        %v1425 = vshrl.u32 %v1384, 16
        %v1427 = vshll.u32 %v1384, 16
        %v1429 = vrot.slane %v1427, 1
        %v1430 = vor.u32 %v1425, %v1429
        %v1432 = vshrl.u32 %v1385, 16
        %v1434 = vshll.u32 %v1385, 16
        %v1436 = vrot.slane %v1434, 1
        %v1437 = vor.u32 %v1432, %v1436
        %v1439 = vshrl.u32 %v1386, 16
        %v1441 = vshll.u32 %v1386, 16
        %v1443 = vrot.slane %v1441, 1
        %v1444 = vor.u32 %v1439, %v1443
        %v1446 = vshrl.u32 %v1387, 16
        %v1448 = vshll.u32 %v1387, 16
        %v1450 = vrot.slane %v1448, 1
        %v1451 = vor.u32 %v1446, %v1450
        %v1453 = vshrl.u32 %v1388, 16
        %v1455 = vshll.u32 %v1388, 16
        %v1457 = vrot.slane %v1455, 1
        %v1458 = vor.u32 %v1453, %v1457
        %v1460 = vshrl.u32 %v1389, 16
        %v1462 = vshll.u32 %v1389, 16
        %v1464 = vrot.slane %v1462, 1
        %v1465 = vor.u32 %v1460, %v1464
        %v1467 = vshrl.u32 %v1390, 16
        %v1469 = vshll.u32 %v1390, 16
        %v1471 = vrot.slane %v1469, 1
        %v1472 = vor.u32 %v1467, %v1471
        %v1474 = vshrl.u32 %v1391, 16
        %v1476 = vshll.u32 %v1391, 16
        %v1478 = vrot.slane %v1476, 1
        %v1479 = vor.u32 %v1474, %v1478
        %v1481 = vshrl.u32 %v1392, 16
        %v1483 = vshll.u32 %v1392, 16
        %v1485 = vrot.slane %v1483, 1
        %v1486 = vor.u32 %v1481, %v1485
        %v1488 = vshrl.u32 %v1393, 16
        %v1490 = vshll.u32 %v1393, 16
        %v1492 = vrot.slane %v1490, 1
        %v1493 = vor.u32 %v1488, %v1492
        %v1495 = vshrl.u32 %v1394, 16
        %v1497 = vshll.u32 %v1394, 16
        %v1499 = vrot.slane %v1497, 1
        %v1500 = vor.u32 %v1495, %v1499
        %v1502 = vshrl.u32 %v1395, 16
        %v1504 = vshll.u32 %v1395, 16
        %v1506 = vrot.slane %v1504, 1
        %v1507 = vor.u32 %v1502, %v1506
        %1508 = vrot.lane.b32.xlu0 %v1402, 8
        %v1509 = vpop.permute.xlu0 %1508
        %1510 = vrot.lane.b32.xlu0 %v1409, 8
        %v1511 = vpop.permute.xlu0 %1510
        %1512 = vrot.lane.b32.xlu0 %v1416, 8
        %v1513 = vpop.permute.xlu0 %1512
        %1514 = vrot.lane.b32.xlu0 %v1423, 8
        %v1515 = vpop.permute.xlu0 %1514
        %1516 = vrot.lane.b32.xlu0 %v1430, 8
        %v1517 = vpop.permute.xlu0 %1516
        %1518 = vrot.lane.b32.xlu0 %v1437, 8
        %v1519 = vpop.permute.xlu0 %1518
        %1520 = vrot.lane.b32.xlu0 %v1444, 8
        %v1521 = vpop.permute.xlu0 %1520
        %1522 = vrot.lane.b32.xlu0 %v1451, 8
        %v1523 = vpop.permute.xlu0 %1522
        %1524 = vrot.lane.b32.xlu0 %v1458, 8
        %v1525 = vpop.permute.xlu0 %1524
        %1526 = vrot.lane.b32.xlu0 %v1465, 8
        %v1527 = vpop.permute.xlu0 %1526
        %1528 = vrot.lane.b32.xlu0 %v1472, 8
        %v1529 = vpop.permute.xlu0 %1528
        %1530 = vrot.lane.b32.xlu0 %v1479, 8
        %v1531 = vpop.permute.xlu0 %1530
        %1532 = vrot.lane.b32.xlu0 %v1486, 8
        %v1533 = vpop.permute.xlu0 %1532
        %1534 = vrot.lane.b32.xlu0 %v1493, 8
        %v1535 = vpop.permute.xlu0 %1534
        %1536 = vrot.lane.b32.xlu0 %v1500, 8
        %v1537 = vpop.permute.xlu0 %1536
        %1538 = vrot.lane.b32.xlu0 %v1507, 8
        %v1539 = vpop.permute.xlu0 %1538
        %vm1556 = vcmask 97344
        %vm1557 = vsmask.f32 7424
        %vm1558 = vmand %vm1556, %vm1557
        %v1559 = vld [vmem:[%s713] sm:$0xff]
        %v1560 = vsel %vm1558, %v1509, %v1559
        %1561 = vst [vmem:[%s713] sm:$0xff] %v1560
        %v1562 = vld [vmem:[%s713 + $0x8] sm:$0xff]
        %v1563 = vsel %vm1558, %v1511, %v1562
        %1564 = vst [vmem:[%s713 + $0x8] sm:$0xff] %v1563
        %v1565 = vld [vmem:[%s713 + $0x10] sm:$0xff]
        %v1566 = vsel %vm1558, %v1513, %v1565
        %1567 = vst [vmem:[%s713 + $0x10] sm:$0xff] %v1566
        %v1568 = vld [vmem:[%s713 + $0x18] sm:$0xff]
        %v1569 = vsel %vm1558, %v1515, %v1568
        %1570 = vst [vmem:[%s713 + $0x18] sm:$0xff] %v1569
        %v1571 = vld [vmem:[%s713 + $0x20] sm:$0xff]
        %v1572 = vsel %vm1558, %v1517, %v1571
        %1573 = vst [vmem:[%s713 + $0x20] sm:$0xff] %v1572
        %v1574 = vld [vmem:[%s713 + $0x28] sm:$0xff]
        %v1575 = vsel %vm1558, %v1519, %v1574
        %1576 = vst [vmem:[%s713 + $0x28] sm:$0xff] %v1575
        %v1577 = vld [vmem:[%s713 + $0x30] sm:$0xff]
        %v1578 = vsel %vm1558, %v1521, %v1577
        %1579 = vst [vmem:[%s713 + $0x30] sm:$0xff] %v1578
        %v1580 = vld [vmem:[%s713 + $0x38] sm:$0xff]
        %v1581 = vsel %vm1558, %v1523, %v1580
        %1582 = vst [vmem:[%s713 + $0x38] sm:$0xff] %v1581
        %v1583 = vld [vmem:[%s713 + $0x40] sm:$0xff]
        %v1584 = vsel %vm1558, %v1525, %v1583
        %1585 = vst [vmem:[%s713 + $0x40] sm:$0xff] %v1584
        %v1586 = vld [vmem:[%s713 + $0x48] sm:$0xff]
        %v1587 = vsel %vm1558, %v1527, %v1586
        %1588 = vst [vmem:[%s713 + $0x48] sm:$0xff] %v1587
        %v1589 = vld [vmem:[%s713 + $0x50] sm:$0xff]
        %v1590 = vsel %vm1558, %v1529, %v1589
        %1591 = vst [vmem:[%s713 + $0x50] sm:$0xff] %v1590
        %v1592 = vld [vmem:[%s713 + $0x58] sm:$0xff]
        %v1593 = vsel %vm1558, %v1531, %v1592
        %1594 = vst [vmem:[%s713 + $0x58] sm:$0xff] %v1593
        %v1595 = vld [vmem:[%s713 + $0x60] sm:$0xff]
        %v1596 = vsel %vm1558, %v1533, %v1595
        %1597 = vst [vmem:[%s713 + $0x60] sm:$0xff] %v1596
        %v1598 = vld [vmem:[%s713 + $0x68] sm:$0xff]
        %v1599 = vsel %vm1558, %v1535, %v1598
        %1600 = vst [vmem:[%s713 + $0x68] sm:$0xff] %v1599
        %v1601 = vld [vmem:[%s713 + $0x70] sm:$0xff]
        %v1602 = vsel %vm1558, %v1537, %v1601
        %1603 = vst [vmem:[%s713 + $0x70] sm:$0xff] %v1602
        %v1604 = vld [vmem:[%s713 + $0x78] sm:$0xff]
        %v1605 = vsel %vm1558, %v1539, %v1604
        %1606 = vst [vmem:[%s713 + $0x78] sm:$0xff] %v1605
        %v1607 = vld [vmem:[#allocation2] sm:$0xff]
        %v1608 = vld [vmem:[#allocation2 + $0x8] sm:$0xff]
        %v1609 = vld [vmem:[#allocation2 + $0x10] sm:$0xff]
        %v1610 = vld [vmem:[#allocation2 + $0x18] sm:$0xff]
        %v1611 = vld [vmem:[#allocation2 + $0x20] sm:$0xff]
        %v1612 = vld [vmem:[#allocation2 + $0x28] sm:$0xff]
        %v1613 = vld [vmem:[#allocation2 + $0x30] sm:$0xff]
        %v1614 = vld [vmem:[#allocation2 + $0x38] sm:$0xff]
        %v1615 = vld [vmem:[#allocation2 + $0x40] sm:$0xff]
        %v1616 = vld [vmem:[#allocation2 + $0x48] sm:$0xff]
        %v1617 = vld [vmem:[#allocation2 + $0x50] sm:$0xff]
        %v1618 = vld [vmem:[#allocation2 + $0x58] sm:$0xff]
        %v1619 = vld [vmem:[#allocation2 + $0x60] sm:$0xff]
        %v1620 = vld [vmem:[#allocation2 + $0x68] sm:$0xff]
        %v1621 = vld [vmem:[#allocation2 + $0x70] sm:$0xff]
        %v1622 = vld [vmem:[#allocation2 + $0x78] sm:$0xff]
        %v1623 = vld [vmem:[%s2] sm:$0xf]
        %v1624 = vld [vmem:[%s2 + $0x4] sm:$0x3]
        %v1625 = vld [vmem:[%s713] sm:$0xff]
        %v1626 = vld [vmem:[%s713 + $0x8] sm:$0xff]
        %v1627 = vld [vmem:[%s713 + $0x10] sm:$0xff]
        %v1628 = vld [vmem:[%s713 + $0x18] sm:$0xff]
        %v1629 = vld [vmem:[%s713 + $0x20] sm:$0xff]
        %v1630 = vld [vmem:[%s713 + $0x28] sm:$0xff]
        %v1631 = vld [vmem:[%s713 + $0x30] sm:$0xff]
        %v1632 = vld [vmem:[%s713 + $0x38] sm:$0xff]
        %v1633 = vld [vmem:[%s713 + $0x40] sm:$0xff]
        %v1634 = vld [vmem:[%s713 + $0x48] sm:$0xff]
        %v1635 = vld [vmem:[%s713 + $0x50] sm:$0xff]
        %v1636 = vld [vmem:[%s713 + $0x58] sm:$0xff]
        %v1637 = vld [vmem:[%s713 + $0x60] sm:$0xff]
        %v1638 = vld [vmem:[%s713 + $0x68] sm:$0xff]
        %v1639 = vld [vmem:[%s713 + $0x70] sm:$0xff]
        %v1640 = vld [vmem:[%s713 + $0x78] sm:$0xff]
        %s1641 = scalar_lea.vmem %s2, 8
        %v1642 = vld [vmem:[%s1641] sm:$0xf]
        %v1643 = vld [vmem:[%s1641 + $0x4] sm:$0x3]
        %v1646 = vunpack.c.l.b16 %v1642
        %v1647 = vunpack.c.l.b16 %v1643
        %v1648 = vpack.c.b16 %v1647, %v1646
        %v1650 = vsel %vm709, %v1625, 0
        %v1653 = vsel %vm709, %v1626, 0
        %v1656 = vsel %vm709, %v1627, 0
        %v1659 = vsel %vm709, %v1628, 0
        %v1662 = vsel %vm709, %v1629, 0
        %v1665 = vsel %vm709, %v1630, 0
        %v1668 = vsel %vm709, %v1631, 0
        %v1671 = vsel %vm709, %v1632, 0
        %v1674 = vsel %vm709, %v1633, 0
        %v1677 = vsel %vm709, %v1634, 0
        %v1680 = vsel %vm709, %v1635, 0
        %v1683 = vsel %vm709, %v1636, 0
        %v1686 = vsel %vm709, %v1637, 0
        %v1689 = vsel %vm709, %v1638, 0
        %v1692 = vsel %vm709, %v1639, 0
        %v1695 = vsel %vm709, %v1640, 0
        %vm1697 = vcmask 1045504
        %v1699 = vsel %vm1697, %v1648, 0
        %1701 = vmatprep.subr.bf16.mxu0 0
        %1702 = vmatpush1.bf16.msra.mxu0 %v1699
        %1703 = vmatprep.subr.bf16.mxu0 0
        %1704 = vmatpush1.bf16.msra.mxu0 0
        %1705 = vmatprep.subr.bf16.mxu0 0
        %1706 = vmatpush1.bf16.msra.mxu0 0
        %1707 = vmatprep.subr.bf16.mxu0 0
        %1708 = vmatpush1.bf16.msra.mxu0 0
        %1709 = vmatprep.subr.bf16.mxu0 0
        %1710 = vmatpush1.bf16.msra.mxu0 0
        %1711 = vmatprep.subr.bf16.mxu0 0
        %1712 = vmatpush1.bf16.msra.mxu0 0
        %1713 = vmatprep.subr.bf16.mxu0 0
        %1714 = vmatpush1.bf16.msra.mxu0 0
        %1715 = vmatprep.subr.bf16.mxu0 0
        %1716 = vmatpush1.bf16.msra.mxu0 0
        %1717 = vmatprep.subr.bf16.mxu0 0
        %1718 = vmatpush1.bf16.msra.mxu0 0
        %1719 = vmatprep.subr.bf16.mxu0 0
        %1720 = vmatpush1.bf16.msra.mxu0 0
        %1721 = vmatprep.subr.bf16.mxu0 0
        %1722 = vmatpush1.bf16.msra.mxu0 0
        %1723 = vmatprep.subr.bf16.mxu0 0
        %1724 = vmatpush1.bf16.msra.mxu0 0
        %1725 = vmatprep.subr.bf16.mxu0 0
        %1726 = vmatpush1.bf16.msra.mxu0 0
        %1727 = vmatprep.subr.bf16.mxu0 0
        %1728 = vmatpush1.bf16.msra.mxu0 0
        %1729 = vmatprep.subr.bf16.mxu0 0
        %1730 = vmatpush1.bf16.msra.mxu0 0
        %1731 = vmatprep.subr.bf16.mxu0 0
        %1732 = vmatpush1.bf16.msra.mxu0 0
        %1733 = vmatprep.mubr.bf16.mxu0 0
        %1734 = vmatmul.mubr.bf16.gmra.mrb[0].mxu0 %v1650
        %v1735 = vpop.f32.mrb[0].mxu0
        %v1736 = vadd.f32 0.0, %v1735
        %v1737 = vpop.f32.mrb[0].mxu0
        %v1738 = vpop.f32.mrb[0].mxu0
        %v1739 = vadd.f32 0.0, %v1738
        %v1740 = vpop.f32.mrb[0].mxu0
        %1741 = vmatprep.mubr.bf16.mxu0 0
        %1742 = vmatmul.mubr.bf16.gmra.mrb[0].mxu0 %v1653
        %v1743 = vpop.f32.mrb[0].mxu0
        %v1744 = vadd.f32 0.0, %v1743
        %v1745 = vpop.f32.mrb[0].mxu0
        %v1746 = vpop.f32.mrb[0].mxu0
        %v1747 = vadd.f32 0.0, %v1746
        %v1748 = vpop.f32.mrb[0].mxu0
        %1749 = vmatprep.mubr.bf16.mxu0 0
        %1750 = vmatmul.mubr.bf16.gmra.mrb[0].mxu0 %v1656
        %v1751 = vpop.f32.mrb[0].mxu0
        %v1752 = vadd.f32 0.0, %v1751
        %v1753 = vpop.f32.mrb[0].mxu0
        %v1754 = vpop.f32.mrb[0].mxu0
        %v1755 = vadd.f32 0.0, %v1754
        %v1756 = vpop.f32.mrb[0].mxu0
        %1757 = vmatprep.mubr.bf16.mxu0 0
        %1758 = vmatmul.mubr.bf16.gmra.mrb[0].mxu0 %v1659
        %v1759 = vpop.f32.mrb[0].mxu0
        %v1760 = vadd.f32 0.0, %v1759
        %v1761 = vpop.f32.mrb[0].mxu0
        %v1762 = vpop.f32.mrb[0].mxu0
        %v1763 = vadd.f32 0.0, %v1762
        %v1764 = vpop.f32.mrb[0].mxu0
        %1765 = vmatprep.mubr.bf16.mxu0 0
        %1766 = vmatmul.mubr.bf16.gmra.mrb[0].mxu0 %v1662
        %v1767 = vpop.f32.mrb[0].mxu0
        %v1768 = vadd.f32 0.0, %v1767
        %v1769 = vpop.f32.mrb[0].mxu0
        %v1770 = vpop.f32.mrb[0].mxu0
        %v1771 = vadd.f32 0.0, %v1770
        %v1772 = vpop.f32.mrb[0].mxu0
        %1773 = vmatprep.mubr.bf16.mxu0 0
        %1774 = vmatmul.mubr.bf16.gmra.mrb[0].mxu0 %v1665
        %v1775 = vpop.f32.mrb[0].mxu0
        %v1776 = vadd.f32 0.0, %v1775
        %v1777 = vpop.f32.mrb[0].mxu0
        %v1778 = vpop.f32.mrb[0].mxu0
        %v1779 = vadd.f32 0.0, %v1778
        %v1780 = vpop.f32.mrb[0].mxu0
        %1781 = vmatprep.mubr.bf16.mxu0 0
        %1782 = vmatmul.mubr.bf16.gmra.mrb[0].mxu0 %v1668
        %v1783 = vpop.f32.mrb[0].mxu0
        %v1784 = vadd.f32 0.0, %v1783
        %v1785 = vpop.f32.mrb[0].mxu0
        %v1786 = vpop.f32.mrb[0].mxu0
        %v1787 = vadd.f32 0.0, %v1786
        %v1788 = vpop.f32.mrb[0].mxu0
        %1789 = vmatprep.mubr.bf16.mxu0 0
        %1790 = vmatmul.mubr.bf16.gmra.mrb[0].mxu0 %v1671
        %v1791 = vpop.f32.mrb[0].mxu0
        %v1792 = vadd.f32 0.0, %v1791
        %v1793 = vpop.f32.mrb[0].mxu0
        %v1794 = vpop.f32.mrb[0].mxu0
        %v1795 = vadd.f32 0.0, %v1794
        %v1796 = vpop.f32.mrb[0].mxu0
        %1797 = vmatprep.mubr.bf16.mxu0 0
        %1798 = vmatmul.mubr.bf16.gmra.mrb[0].mxu0 %v1674
        %v1799 = vpop.f32.mrb[0].mxu0
        %v1800 = vadd.f32 0.0, %v1799
        %v1801 = vpop.f32.mrb[0].mxu0
        %v1802 = vpop.f32.mrb[0].mxu0
        %v1803 = vadd.f32 0.0, %v1802
        %v1804 = vpop.f32.mrb[0].mxu0
        %1805 = vmatprep.mubr.bf16.mxu0 0
        %1806 = vmatmul.mubr.bf16.gmra.mrb[0].mxu0 %v1677
        %v1807 = vpop.f32.mrb[0].mxu0
        %v1808 = vadd.f32 0.0, %v1807
        %v1809 = vpop.f32.mrb[0].mxu0
        %v1810 = vpop.f32.mrb[0].mxu0
        %v1811 = vadd.f32 0.0, %v1810
        %v1812 = vpop.f32.mrb[0].mxu0
        %1813 = vmatprep.mubr.bf16.mxu0 0
        %1814 = vmatmul.mubr.bf16.gmra.mrb[0].mxu0 %v1680
        %v1815 = vpop.f32.mrb[0].mxu0
        %v1816 = vadd.f32 0.0, %v1815
        %v1817 = vpop.f32.mrb[0].mxu0
        %v1818 = vpop.f32.mrb[0].mxu0
        %v1819 = vadd.f32 0.0, %v1818
        %v1820 = vpop.f32.mrb[0].mxu0
        %1821 = vmatprep.mubr.bf16.mxu0 0
        %1822 = vmatmul.mubr.bf16.gmra.mrb[0].mxu0 %v1683
        %v1823 = vpop.f32.mrb[0].mxu0
        %v1824 = vadd.f32 0.0, %v1823
        %v1825 = vpop.f32.mrb[0].mxu0
        %v1826 = vpop.f32.mrb[0].mxu0
        %v1827 = vadd.f32 0.0, %v1826
        %v1828 = vpop.f32.mrb[0].mxu0
        %1829 = vmatprep.mubr.bf16.mxu0 0
        %1830 = vmatmul.mubr.bf16.gmra.mrb[0].mxu0 %v1686
        %v1831 = vpop.f32.mrb[0].mxu0
        %v1832 = vadd.f32 0.0, %v1831
        %v1833 = vpop.f32.mrb[0].mxu0
        %v1834 = vpop.f32.mrb[0].mxu0
        %v1835 = vadd.f32 0.0, %v1834
        %v1836 = vpop.f32.mrb[0].mxu0
        %1837 = vmatprep.mubr.bf16.mxu0 0
        %1838 = vmatmul.mubr.bf16.gmra.mrb[0].mxu0 %v1689
        %v1839 = vpop.f32.mrb[0].mxu0
        %v1840 = vadd.f32 0.0, %v1839
        %v1841 = vpop.f32.mrb[0].mxu0
        %v1842 = vpop.f32.mrb[0].mxu0
        %v1843 = vadd.f32 0.0, %v1842
        %v1844 = vpop.f32.mrb[0].mxu0
        %1845 = vmatprep.mubr.bf16.mxu0 0
        %1846 = vmatmul.mubr.bf16.gmra.mrb[0].mxu0 %v1692
        %v1847 = vpop.f32.mrb[0].mxu0
        %v1848 = vadd.f32 0.0, %v1847
        %v1849 = vpop.f32.mrb[0].mxu0
        %v1850 = vpop.f32.mrb[0].mxu0
        %v1851 = vadd.f32 0.0, %v1850
        %v1852 = vpop.f32.mrb[0].mxu0
        %1853 = vmatprep.mubr.bf16.mxu0 0
        %1854 = vmatmul.mubr.bf16.gmra.mrb[0].mxu0 %v1695
        %v1855 = vpop.f32.mrb[0].mxu0
        %v1856 = vadd.f32 0.0, %v1855
        %v1857 = vpop.f32.mrb[0].mxu0
        %v1858 = vpop.f32.mrb[0].mxu0
        %v1859 = vadd.f32 0.0, %v1858
        %v1860 = vpop.f32.mrb[0].mxu0
        %1861 = vdwg.mxu0
        %v1864 = vunpack.c.l.b16 %v1623
        %v1865 = vunpack.c.l.b16 %v1624
        %v1866 = vpack.c.b16 %v1865, %v1864
        %v1868 = vsel %vm709, %v1607, 0
        %v1871 = vsel %vm709, %v1608, 0
        %v1874 = vsel %vm709, %v1609, 0
        %v1877 = vsel %vm709, %v1610, 0
        %v1880 = vsel %vm709, %v1611, 0
        %v1883 = vsel %vm709, %v1612, 0
        %v1886 = vsel %vm709, %v1613, 0
        %v1889 = vsel %vm709, %v1614, 0
        %v1892 = vsel %vm709, %v1615, 0
        %v1895 = vsel %vm709, %v1616, 0
        %v1898 = vsel %vm709, %v1617, 0
        %v1901 = vsel %vm709, %v1618, 0
        %v1904 = vsel %vm709, %v1619, 0
        %v1907 = vsel %vm709, %v1620, 0
        %v1910 = vsel %vm709, %v1621, 0
        %v1913 = vsel %vm709, %v1622, 0
        %v1916 = vsel %vm1697, %v1866, 0
        %1918 = vmatprep.subr.bf16.mxu0 0
        %1919 = vmatpush1.bf16.msra.mxu0 %v1916
        %1920 = vmatprep.subr.bf16.mxu0 0
        %1921 = vmatpush1.bf16.msra.mxu0 0
        %1922 = vmatprep.subr.bf16.mxu0 0
        %1923 = vmatpush1.bf16.msra.mxu0 0
        %1924 = vmatprep.subr.bf16.mxu0 0
        %1925 = vmatpush1.bf16.msra.mxu0 0
        %1926 = vmatprep.subr.bf16.mxu0 0
        %1927 = vmatpush1.bf16.msra.mxu0 0
        %1928 = vmatprep.subr.bf16.mxu0 0
        %1929 = vmatpush1.bf16.msra.mxu0 0
        %1930 = vmatprep.subr.bf16.mxu0 0
        %1931 = vmatpush1.bf16.msra.mxu0 0
        %1932 = vmatprep.subr.bf16.mxu0 0
        %1933 = vmatpush1.bf16.msra.mxu0 0
        %1934 = vmatprep.subr.bf16.mxu0 0
        %1935 = vmatpush1.bf16.msra.mxu0 0
        %1936 = vmatprep.subr.bf16.mxu0 0
        %1937 = vmatpush1.bf16.msra.mxu0 0
        %1938 = vmatprep.subr.bf16.mxu0 0
        %1939 = vmatpush1.bf16.msra.mxu0 0
        %1940 = vmatprep.subr.bf16.mxu0 0
        %1941 = vmatpush1.bf16.msra.mxu0 0
        %1942 = vmatprep.subr.bf16.mxu0 0
        %1943 = vmatpush1.bf16.msra.mxu0 0
        %1944 = vmatprep.subr.bf16.mxu0 0
        %1945 = vmatpush1.bf16.msra.mxu0 0
        %1946 = vmatprep.subr.bf16.mxu0 0
        %1947 = vmatpush1.bf16.msra.mxu0 0
        %1948 = vmatprep.subr.bf16.mxu0 0
        %1949 = vmatpush1.bf16.msra.mxu0 0
        %1950 = vmatprep.mubr.bf16.mxu0 0
        %1951 = vmatmul.mubr.bf16.gmra.mrb[0].mxu0 %v1868
        %v1952 = vpop.f32.mrb[0].mxu0
        %v1953 = vadd.f32 %v1736, %v1952
        %v1954 = vpop.f32.mrb[0].mxu0
        %v1955 = vpop.f32.mrb[0].mxu0
        %v1956 = vadd.f32 %v1739, %v1955
        %v1957 = vpop.f32.mrb[0].mxu0
        %1958 = vmatprep.mubr.bf16.mxu0 0
        %1959 = vmatmul.mubr.bf16.gmra.mrb[0].mxu0 %v1871
        %v1960 = vpop.f32.mrb[0].mxu0
        %v1961 = vadd.f32 %v1744, %v1960
        %v1962 = vpop.f32.mrb[0].mxu0
        %v1963 = vpop.f32.mrb[0].mxu0
        %v1964 = vadd.f32 %v1747, %v1963
        %v1965 = vpop.f32.mrb[0].mxu0
        %1966 = vmatprep.mubr.bf16.mxu0 0
        %1967 = vmatmul.mubr.bf16.gmra.mrb[0].mxu0 %v1874
        %v1968 = vpop.f32.mrb[0].mxu0
        %v1969 = vadd.f32 %v1752, %v1968
        %v1970 = vpop.f32.mrb[0].mxu0
        %v1971 = vpop.f32.mrb[0].mxu0
        %v1972 = vadd.f32 %v1755, %v1971
        %v1973 = vpop.f32.mrb[0].mxu0
        %1974 = vmatprep.mubr.bf16.mxu0 0
        %1975 = vmatmul.mubr.bf16.gmra.mrb[0].mxu0 %v1877
        %v1976 = vpop.f32.mrb[0].mxu0
        %v1977 = vadd.f32 %v1760, %v1976
        %v1978 = vpop.f32.mrb[0].mxu0
        %v1979 = vpop.f32.mrb[0].mxu0
        %v1980 = vadd.f32 %v1763, %v1979
        %v1981 = vpop.f32.mrb[0].mxu0
        %1982 = vmatprep.mubr.bf16.mxu0 0
        %1983 = vmatmul.mubr.bf16.gmra.mrb[0].mxu0 %v1880
        %v1984 = vpop.f32.mrb[0].mxu0
        %v1985 = vadd.f32 %v1768, %v1984
        %v1986 = vpop.f32.mrb[0].mxu0
        %v1987 = vpop.f32.mrb[0].mxu0
        %v1988 = vadd.f32 %v1771, %v1987
        %v1989 = vpop.f32.mrb[0].mxu0
        %1990 = vmatprep.mubr.bf16.mxu0 0
        %1991 = vmatmul.mubr.bf16.gmra.mrb[0].mxu0 %v1883
        %v1992 = vpop.f32.mrb[0].mxu0
        %v1993 = vadd.f32 %v1776, %v1992
        %v1994 = vpop.f32.mrb[0].mxu0
        %v1995 = vpop.f32.mrb[0].mxu0
        %v1996 = vadd.f32 %v1779, %v1995
        %v1997 = vpop.f32.mrb[0].mxu0
        %1998 = vmatprep.mubr.bf16.mxu0 0
        %1999 = vmatmul.mubr.bf16.gmra.mrb[0].mxu0 %v1886
        %v2000 = vpop.f32.mrb[0].mxu0
        %v2001 = vadd.f32 %v1784, %v2000
        %v2002 = vpop.f32.mrb[0].mxu0
        %v2003 = vpop.f32.mrb[0].mxu0
        %v2004 = vadd.f32 %v1787, %v2003
        %v2005 = vpop.f32.mrb[0].mxu0
        %2006 = vmatprep.mubr.bf16.mxu0 0
        %2007 = vmatmul.mubr.bf16.gmra.mrb[0].mxu0 %v1889
        %v2008 = vpop.f32.mrb[0].mxu0
        %v2009 = vadd.f32 %v1792, %v2008
        %v2010 = vpop.f32.mrb[0].mxu0
        %v2011 = vpop.f32.mrb[0].mxu0
        %v2012 = vadd.f32 %v1795, %v2011
        %v2013 = vpop.f32.mrb[0].mxu0
        %2014 = vmatprep.mubr.bf16.mxu0 0
        %2015 = vmatmul.mubr.bf16.gmra.mrb[0].mxu0 %v1892
        %v2016 = vpop.f32.mrb[0].mxu0
        %v2017 = vadd.f32 %v1800, %v2016
        %v2018 = vpop.f32.mrb[0].mxu0
        %v2019 = vpop.f32.mrb[0].mxu0
        %v2020 = vadd.f32 %v1803, %v2019
        %v2021 = vpop.f32.mrb[0].mxu0
        %2022 = vmatprep.mubr.bf16.mxu0 0
        %2023 = vmatmul.mubr.bf16.gmra.mrb[0].mxu0 %v1895
        %v2024 = vpop.f32.mrb[0].mxu0
        %v2025 = vadd.f32 %v1808, %v2024
        %v2026 = vpop.f32.mrb[0].mxu0
        %v2027 = vpop.f32.mrb[0].mxu0
        %v2028 = vadd.f32 %v1811, %v2027
        %v2029 = vpop.f32.mrb[0].mxu0
        %2030 = vmatprep.mubr.bf16.mxu0 0
        %2031 = vmatmul.mubr.bf16.gmra.mrb[0].mxu0 %v1898
        %v2032 = vpop.f32.mrb[0].mxu0
        %v2033 = vadd.f32 %v1816, %v2032
        %v2034 = vpop.f32.mrb[0].mxu0
        %v2035 = vpop.f32.mrb[0].mxu0
        %v2036 = vadd.f32 %v1819, %v2035
        %v2037 = vpop.f32.mrb[0].mxu0
        %2038 = vmatprep.mubr.bf16.mxu0 0
        %2039 = vmatmul.mubr.bf16.gmra.mrb[0].mxu0 %v1901
        %v2040 = vpop.f32.mrb[0].mxu0
        %v2041 = vadd.f32 %v1824, %v2040
        %v2042 = vpop.f32.mrb[0].mxu0
        %v2043 = vpop.f32.mrb[0].mxu0
        %v2044 = vadd.f32 %v1827, %v2043
        %v2045 = vpop.f32.mrb[0].mxu0
        %2046 = vmatprep.mubr.bf16.mxu0 0
        %2047 = vmatmul.mubr.bf16.gmra.mrb[0].mxu0 %v1904
        %v2048 = vpop.f32.mrb[0].mxu0
        %v2049 = vadd.f32 %v1832, %v2048
        %v2050 = vpop.f32.mrb[0].mxu0
        %v2051 = vpop.f32.mrb[0].mxu0
        %v2052 = vadd.f32 %v1835, %v2051
        %v2053 = vpop.f32.mrb[0].mxu0
        %2054 = vmatprep.mubr.bf16.mxu0 0
        %2055 = vmatmul.mubr.bf16.gmra.mrb[0].mxu0 %v1907
        %v2056 = vpop.f32.mrb[0].mxu0
        %v2057 = vadd.f32 %v1840, %v2056
        %v2058 = vpop.f32.mrb[0].mxu0
        %v2059 = vpop.f32.mrb[0].mxu0
        %v2060 = vadd.f32 %v1843, %v2059
        %v2061 = vpop.f32.mrb[0].mxu0
        %2062 = vmatprep.mubr.bf16.mxu0 0
        %2063 = vmatmul.mubr.bf16.gmra.mrb[0].mxu0 %v1910
        %v2064 = vpop.f32.mrb[0].mxu0
        %v2065 = vadd.f32 %v1848, %v2064
        %v2066 = vpop.f32.mrb[0].mxu0
        %v2067 = vpop.f32.mrb[0].mxu0
        %v2068 = vadd.f32 %v1851, %v2067
        %v2069 = vpop.f32.mrb[0].mxu0
        %2070 = vmatprep.mubr.bf16.mxu0 0
        %2071 = vmatmul.mubr.bf16.gmra.mrb[0].mxu0 %v1913
        %v2072 = vpop.f32.mrb[0].mxu0
        %v2073 = vadd.f32 %v1856, %v2072
        %v2074 = vpop.f32.mrb[0].mxu0
        %v2075 = vpop.f32.mrb[0].mxu0
        %v2076 = vadd.f32 %v1859, %v2075
        %v2077 = vpop.f32.mrb[0].mxu0
        %2078 = vdwg.mxu0
        %s2079 = scalar_lea.vmem [#allocation2], 16
        %v2080 = vld [vmem:[%s2079] sm:$0xff]
        %v2081 = vld [vmem:[%s2079 + $0x8] sm:$0xff]
        %v2082 = vld [vmem:[%s2079 + $0x10] sm:$0xff]
        %v2083 = vld [vmem:[%s2079 + $0x18] sm:$0xff]
        %v2084 = vld [vmem:[%s2079 + $0x20] sm:$0xff]
        %v2085 = vld [vmem:[%s2079 + $0x28] sm:$0xff]
        %v2086 = vld [vmem:[%s2079 + $0x30] sm:$0xff]
        %v2087 = vld [vmem:[%s2079 + $0x38] sm:$0xff]
        %v2088 = vld [vmem:[%s2079 + $0x40] sm:$0xff]
        %v2089 = vld [vmem:[%s2079 + $0x48] sm:$0xff]
        %v2090 = vld [vmem:[%s2079 + $0x50] sm:$0xff]
        %v2091 = vld [vmem:[%s2079 + $0x58] sm:$0xff]
        %v2092 = vld [vmem:[%s2079 + $0x60] sm:$0xff]
        %v2093 = vld [vmem:[%s2079 + $0x68] sm:$0xff]
        %v2094 = vld [vmem:[%s2079 + $0x70] sm:$0xff]
        %v2095 = vld [vmem:[%s2079 + $0x78] sm:$0xff]
        %s2096 = scalar_lea.vmem %s2, 16
        %v2097 = vld [vmem:[%s2096] sm:$0xf]
        %v2098 = vld [vmem:[%s2096 + $0x4] sm:$0x3]
        %v2101 = vunpack.c.l.b16 %v2097
        %v2102 = vunpack.c.l.b16 %v2098
        %v2103 = vpack.c.b16 %v2102, %v2101
        %v2105 = vsel %vm709, %v2080, 0
        %v2108 = vsel %vm709, %v2081, 0
        %v2111 = vsel %vm709, %v2082, 0
        %v2114 = vsel %vm709, %v2083, 0
        %v2117 = vsel %vm709, %v2084, 0
        %v2120 = vsel %vm709, %v2085, 0
        %v2123 = vsel %vm709, %v2086, 0
        %v2126 = vsel %vm709, %v2087, 0
        %v2129 = vsel %vm709, %v2088, 0
        %v2132 = vsel %vm709, %v2089, 0
        %v2135 = vsel %vm709, %v2090, 0
        %v2138 = vsel %vm709, %v2091, 0
        %v2141 = vsel %vm709, %v2092, 0
        %v2144 = vsel %vm709, %v2093, 0
        %v2147 = vsel %vm709, %v2094, 0
        %v2150 = vsel %vm709, %v2095, 0
        %v2153 = vsel %vm1697, %v2103, 0
        %2155 = vmatprep.subr.bf16.mxu0 0
        %2156 = vmatpush1.bf16.msra.mxu0 %v2153
        %2157 = vmatprep.subr.bf16.mxu0 0
        %2158 = vmatpush1.bf16.msra.mxu0 0
        %2159 = vmatprep.subr.bf16.mxu0 0
        %2160 = vmatpush1.bf16.msra.mxu0 0
        %2161 = vmatprep.subr.bf16.mxu0 0
        %2162 = vmatpush1.bf16.msra.mxu0 0
        %2163 = vmatprep.subr.bf16.mxu0 0
        %2164 = vmatpush1.bf16.msra.mxu0 0
        %2165 = vmatprep.subr.bf16.mxu0 0
        %2166 = vmatpush1.bf16.msra.mxu0 0
        %2167 = vmatprep.subr.bf16.mxu0 0
        %2168 = vmatpush1.bf16.msra.mxu0 0
        %2169 = vmatprep.subr.bf16.mxu0 0
        %2170 = vmatpush1.bf16.msra.mxu0 0
        %2171 = vmatprep.subr.bf16.mxu0 0
        %2172 = vmatpush1.bf16.msra.mxu0 0
        %2173 = vmatprep.subr.bf16.mxu0 0
        %2174 = vmatpush1.bf16.msra.mxu0 0
        %2175 = vmatprep.subr.bf16.mxu0 0
        %2176 = vmatpush1.bf16.msra.mxu0 0
        %2177 = vmatprep.subr.bf16.mxu0 0
        %2178 = vmatpush1.bf16.msra.mxu0 0
        %2179 = vmatprep.subr.bf16.mxu0 0
        %2180 = vmatpush1.bf16.msra.mxu0 0
        %2181 = vmatprep.subr.bf16.mxu0 0
        %2182 = vmatpush1.bf16.msra.mxu0 0
        %2183 = vmatprep.subr.bf16.mxu0 0
        %2184 = vmatpush1.bf16.msra.mxu0 0
        %2185 = vmatprep.subr.bf16.mxu0 0
        %2186 = vmatpush1.bf16.msra.mxu0 0
        %2187 = vmatprep.mubr.bf16.mxu0 0
        %2188 = vmatmul.mubr.bf16.gmra.mrb[0].mxu0 %v2105
        %v2189 = vpop.f32.mrb[0].mxu0
        %v2190 = vadd.f32 0.0, %v2189
        %v2191 = vpop.f32.mrb[0].mxu0
        %v2192 = vpop.f32.mrb[0].mxu0
        %v2193 = vadd.f32 0.0, %v2192
        %v2194 = vpop.f32.mrb[0].mxu0
        %2195 = vmatprep.mubr.bf16.mxu0 0
        %2196 = vmatmul.mubr.bf16.gmra.mrb[0].mxu0 %v2108
        %v2197 = vpop.f32.mrb[0].mxu0
        %v2198 = vadd.f32 0.0, %v2197
        %v2199 = vpop.f32.mrb[0].mxu0
        %v2200 = vpop.f32.mrb[0].mxu0
        %v2201 = vadd.f32 0.0, %v2200
        %v2202 = vpop.f32.mrb[0].mxu0
        %2203 = vmatprep.mubr.bf16.mxu0 0
        %2204 = vmatmul.mubr.bf16.gmra.mrb[0].mxu0 %v2111
        %v2205 = vpop.f32.mrb[0].mxu0
        %v2206 = vadd.f32 0.0, %v2205
        %v2207 = vpop.f32.mrb[0].mxu0
        %v2208 = vpop.f32.mrb[0].mxu0
        %v2209 = vadd.f32 0.0, %v2208
        %v2210 = vpop.f32.mrb[0].mxu0
        %2211 = vmatprep.mubr.bf16.mxu0 0
        %2212 = vmatmul.mubr.bf16.gmra.mrb[0].mxu0 %v2114
        %v2213 = vpop.f32.mrb[0].mxu0
        %v2214 = vadd.f32 0.0, %v2213
        %v2215 = vpop.f32.mrb[0].mxu0
        %v2216 = vpop.f32.mrb[0].mxu0
        %v2217 = vadd.f32 0.0, %v2216
        %v2218 = vpop.f32.mrb[0].mxu0
        %2219 = vmatprep.mubr.bf16.mxu0 0
        %2220 = vmatmul.mubr.bf16.gmra.mrb[0].mxu0 %v2117
        %v2221 = vpop.f32.mrb[0].mxu0
        %v2222 = vadd.f32 0.0, %v2221
        %v2223 = vpop.f32.mrb[0].mxu0
        %v2224 = vpop.f32.mrb[0].mxu0
        %v2225 = vadd.f32 0.0, %v2224
        %v2226 = vpop.f32.mrb[0].mxu0
        %2227 = vmatprep.mubr.bf16.mxu0 0
        %2228 = vmatmul.mubr.bf16.gmra.mrb[0].mxu0 %v2120
        %v2229 = vpop.f32.mrb[0].mxu0
        %v2230 = vadd.f32 0.0, %v2229
        %v2231 = vpop.f32.mrb[0].mxu0
        %v2232 = vpop.f32.mrb[0].mxu0
        %v2233 = vadd.f32 0.0, %v2232
        %v2234 = vpop.f32.mrb[0].mxu0
        %2235 = vmatprep.mubr.bf16.mxu0 0
        %2236 = vmatmul.mubr.bf16.gmra.mrb[0].mxu0 %v2123
        %v2237 = vpop.f32.mrb[0].mxu0
        %v2238 = vadd.f32 0.0, %v2237
        %v2239 = vpop.f32.mrb[0].mxu0
        %v2240 = vpop.f32.mrb[0].mxu0
        %v2241 = vadd.f32 0.0, %v2240
        %v2242 = vpop.f32.mrb[0].mxu0
        %2243 = vmatprep.mubr.bf16.mxu0 0
        %2244 = vmatmul.mubr.bf16.gmra.mrb[0].mxu0 %v2126
        %v2245 = vpop.f32.mrb[0].mxu0
        %v2246 = vadd.f32 0.0, %v2245
        %v2247 = vpop.f32.mrb[0].mxu0
        %v2248 = vpop.f32.mrb[0].mxu0
        %v2249 = vadd.f32 0.0, %v2248
        %v2250 = vpop.f32.mrb[0].mxu0
        %2251 = vmatprep.mubr.bf16.mxu0 0
        %2252 = vmatmul.mubr.bf16.gmra.mrb[0].mxu0 %v2129
        %v2253 = vpop.f32.mrb[0].mxu0
        %v2254 = vadd.f32 0.0, %v2253
        %v2255 = vpop.f32.mrb[0].mxu0
        %v2256 = vpop.f32.mrb[0].mxu0
        %v2257 = vadd.f32 0.0, %v2256
        %v2258 = vpop.f32.mrb[0].mxu0
        %2259 = vmatprep.mubr.bf16.mxu0 0
        %2260 = vmatmul.mubr.bf16.gmra.mrb[0].mxu0 %v2132
        %v2261 = vpop.f32.mrb[0].mxu0
        %v2262 = vadd.f32 0.0, %v2261
        %v2263 = vpop.f32.mrb[0].mxu0
        %v2264 = vpop.f32.mrb[0].mxu0
        %v2265 = vadd.f32 0.0, %v2264
        %v2266 = vpop.f32.mrb[0].mxu0
        %2267 = vmatprep.mubr.bf16.mxu0 0
        %2268 = vmatmul.mubr.bf16.gmra.mrb[0].mxu0 %v2135
        %v2269 = vpop.f32.mrb[0].mxu0
        %v2270 = vadd.f32 0.0, %v2269
        %v2271 = vpop.f32.mrb[0].mxu0
        %v2272 = vpop.f32.mrb[0].mxu0
        %v2273 = vadd.f32 0.0, %v2272
        %v2274 = vpop.f32.mrb[0].mxu0
        %2275 = vmatprep.mubr.bf16.mxu0 0
        %2276 = vmatmul.mubr.bf16.gmra.mrb[0].mxu0 %v2138
        %v2277 = vpop.f32.mrb[0].mxu0
        %v2278 = vadd.f32 0.0, %v2277
        %v2279 = vpop.f32.mrb[0].mxu0
        %v2280 = vpop.f32.mrb[0].mxu0
        %v2281 = vadd.f32 0.0, %v2280
        %v2282 = vpop.f32.mrb[0].mxu0
        %2283 = vmatprep.mubr.bf16.mxu0 0
        %2284 = vmatmul.mubr.bf16.gmra.mrb[0].mxu0 %v2141
        %v2285 = vpop.f32.mrb[0].mxu0
        %v2286 = vadd.f32 0.0, %v2285
        %v2287 = vpop.f32.mrb[0].mxu0
        %v2288 = vpop.f32.mrb[0].mxu0
        %v2289 = vadd.f32 0.0, %v2288
        %v2290 = vpop.f32.mrb[0].mxu0
        %2291 = vmatprep.mubr.bf16.mxu0 0
        %2292 = vmatmul.mubr.bf16.gmra.mrb[0].mxu0 %v2144
        %v2293 = vpop.f32.mrb[0].mxu0
        %v2294 = vadd.f32 0.0, %v2293
        %v2295 = vpop.f32.mrb[0].mxu0
        %v2296 = vpop.f32.mrb[0].mxu0
        %v2297 = vadd.f32 0.0, %v2296
        %v2298 = vpop.f32.mrb[0].mxu0
        %2299 = vmatprep.mubr.bf16.mxu0 0
        %2300 = vmatmul.mubr.bf16.gmra.mrb[0].mxu0 %v2147
        %v2301 = vpop.f32.mrb[0].mxu0
        %v2302 = vadd.f32 0.0, %v2301
        %v2303 = vpop.f32.mrb[0].mxu0
        %v2304 = vpop.f32.mrb[0].mxu0
        %v2305 = vadd.f32 0.0, %v2304
        %v2306 = vpop.f32.mrb[0].mxu0
        %2307 = vmatprep.mubr.bf16.mxu0 0
        %2308 = vmatmul.mubr.bf16.gmra.mrb[0].mxu0 %v2150
        %v2309 = vpop.f32.mrb[0].mxu0
        %v2310 = vadd.f32 0.0, %v2309
        %v2311 = vpop.f32.mrb[0].mxu0
        %v2312 = vpop.f32.mrb[0].mxu0
        %v2313 = vadd.f32 0.0, %v2312
        %v2314 = vpop.f32.mrb[0].mxu0
        %2315 = vdwg.mxu0
        %v2316 = vadd.f32 %v1953, %v2190
        %v2317 = vadd.f32 %v1956, %v2193
        %v2318 = vadd.f32 %v1961, %v2198
        %v2319 = vadd.f32 %v1964, %v2201
        %v2320 = vadd.f32 %v1969, %v2206
        %v2321 = vadd.f32 %v1972, %v2209
        %v2322 = vadd.f32 %v1977, %v2214
        %v2323 = vadd.f32 %v1980, %v2217
        %v2324 = vadd.f32 %v1985, %v2222
        %v2325 = vadd.f32 %v1988, %v2225
        %v2326 = vadd.f32 %v1993, %v2230
        %v2327 = vadd.f32 %v1996, %v2233
        %v2328 = vadd.f32 %v2001, %v2238
        %v2329 = vadd.f32 %v2004, %v2241
        %v2330 = vadd.f32 %v2009, %v2246
        %v2331 = vadd.f32 %v2012, %v2249
        %v2332 = vadd.f32 %v2017, %v2254
        %v2333 = vadd.f32 %v2020, %v2257
        %v2334 = vadd.f32 %v2025, %v2262
        %v2335 = vadd.f32 %v2028, %v2265
        %v2336 = vadd.f32 %v2033, %v2270
        %v2337 = vadd.f32 %v2036, %v2273
        %v2338 = vadd.f32 %v2041, %v2278
        %v2339 = vadd.f32 %v2044, %v2281
        %v2340 = vadd.f32 %v2049, %v2286
        %v2341 = vadd.f32 %v2052, %v2289
        %v2342 = vadd.f32 %v2057, %v2294
        %v2343 = vadd.f32 %v2060, %v2297
        %v2344 = vadd.f32 %v2065, %v2302
        %v2345 = vadd.f32 %v2068, %v2305
        %v2346 = vadd.f32 %v2073, %v2310
        %v2347 = vadd.f32 %v2076, %v2313
        %v2348 = vld [vmem:[%s3] sm:$0x1]
        %v2350 = vlaneseq
        %v2351 = vshrl.u32 %v2350, 7
        %v2352 = vsub.s32 0, %v2351
        %v2353 = vrot.slane %v2348, %v2352
        %v2355 = vadd.f32 %v2316, %v2353
        %v2356 = vadd.f32 %v2317, %v2353
        %v2357 = vadd.f32 %v2318, %v2353
        %v2358 = vadd.f32 %v2319, %v2353
        %v2359 = vadd.f32 %v2320, %v2353
        %v2360 = vadd.f32 %v2321, %v2353
        %v2361 = vadd.f32 %v2322, %v2353
        %v2362 = vadd.f32 %v2323, %v2353
        %v2363 = vadd.f32 %v2324, %v2353
        %v2364 = vadd.f32 %v2325, %v2353
        %v2365 = vadd.f32 %v2326, %v2353
        %v2366 = vadd.f32 %v2327, %v2353
        %v2367 = vadd.f32 %v2328, %v2353
        %v2368 = vadd.f32 %v2329, %v2353
        %v2369 = vadd.f32 %v2330, %v2353
        %v2370 = vadd.f32 %v2331, %v2353
        %v2371 = vadd.f32 %v2332, %v2353
        %v2372 = vadd.f32 %v2333, %v2353
        %v2373 = vadd.f32 %v2334, %v2353
        %v2374 = vadd.f32 %v2335, %v2353
        %v2375 = vadd.f32 %v2336, %v2353
        %v2376 = vadd.f32 %v2337, %v2353
        %v2377 = vadd.f32 %v2338, %v2353
        %v2378 = vadd.f32 %v2339, %v2353
        %v2379 = vadd.f32 %v2340, %v2353
        %v2380 = vadd.f32 %v2341, %v2353
        %v2381 = vadd.f32 %v2342, %v2353
        %v2382 = vadd.f32 %v2343, %v2353
        %v2383 = vadd.f32 %v2344, %v2353
        %v2384 = vadd.f32 %v2345, %v2353
        %v2385 = vadd.f32 %v2346, %v2353
        %v2386 = vadd.f32 %v2347, %v2353
        %v2387 = vld [vmem:[%s16] sm:$0xff]
        %v2388 = vld [vmem:[%s16 + $0x8] sm:$0xff]
        %vm2389 = vcmask 130048
        %v2390 = vsel %vm2389, %v2355, 0.0
        %v2391 = vsel %vm2389, %v2356, 0.0
        %v2392 = vadd.f32 %v2390, %v2391
        %v2393 = vsel %vm2389, %v2357, 0.0
        %v2394 = vadd.f32 %v2392, %v2393
        %v2395 = vsel %vm2389, %v2358, 0.0
        %v2396 = vadd.f32 %v2394, %v2395
        %v2397 = vsel %vm2389, %v2359, 0.0
        %v2398 = vadd.f32 %v2396, %v2397
        %v2399 = vsel %vm2389, %v2360, 0.0
        %v2400 = vadd.f32 %v2398, %v2399
        %v2401 = vsel %vm2389, %v2361, 0.0
        %v2402 = vadd.f32 %v2400, %v2401
        %v2403 = vsel %vm2389, %v2362, 0.0
        %v2404 = vadd.f32 %v2402, %v2403
        %v2405 = vsel %vm2389, %v2363, 0.0
        %v2406 = vadd.f32 %v2404, %v2405
        %v2407 = vsel %vm2389, %v2364, 0.0
        %v2408 = vadd.f32 %v2406, %v2407
        %v2409 = vsel %vm2389, %v2365, 0.0
        %v2410 = vadd.f32 %v2408, %v2409
        %v2411 = vsel %vm2389, %v2366, 0.0
        %v2412 = vadd.f32 %v2410, %v2411
        %v2413 = vsel %vm2389, %v2367, 0.0
        %v2414 = vadd.f32 %v2412, %v2413
        %v2415 = vsel %vm2389, %v2368, 0.0
        %v2416 = vadd.f32 %v2414, %v2415
        %v2417 = vsel %vm2389, %v2369, 0.0
        %v2418 = vadd.f32 %v2416, %v2417
        %v2419 = vsel %vm2389, %v2370, 0.0
        %v2420 = vadd.f32 %v2418, %v2419
        %v2421 = vsel %vm2389, %v2371, 0.0
        %v2422 = vadd.f32 %v2420, %v2421
        %v2423 = vsel %vm2389, %v2372, 0.0
        %v2424 = vadd.f32 %v2422, %v2423
        %v2425 = vsel %vm2389, %v2373, 0.0
        %v2426 = vadd.f32 %v2424, %v2425
        %v2427 = vsel %vm2389, %v2374, 0.0
        %v2428 = vadd.f32 %v2426, %v2427
        %v2429 = vsel %vm2389, %v2375, 0.0
        %v2430 = vadd.f32 %v2428, %v2429
        %v2431 = vsel %vm2389, %v2376, 0.0
        %v2432 = vadd.f32 %v2430, %v2431
        %v2433 = vsel %vm2389, %v2377, 0.0
        %v2434 = vadd.f32 %v2432, %v2433
        %v2435 = vsel %vm2389, %v2378, 0.0
        %v2436 = vadd.f32 %v2434, %v2435
        %v2437 = vsel %vm2389, %v2379, 0.0
        %v2438 = vadd.f32 %v2436, %v2437
        %v2439 = vsel %vm2389, %v2380, 0.0
        %v2440 = vadd.f32 %v2438, %v2439
        %v2441 = vsel %vm2389, %v2381, 0.0
        %v2442 = vadd.f32 %v2440, %v2441
        %v2443 = vsel %vm2389, %v2382, 0.0
        %v2444 = vadd.f32 %v2442, %v2443
        %v2445 = vsel %vm2389, %v2383, 0.0
        %v2446 = vadd.f32 %v2444, %v2445
        %v2447 = vsel %vm2389, %v2384, 0.0
        %v2448 = vadd.f32 %v2446, %v2447
        %v2449 = vsel %vm2389, %v2385, 0.0
        %v2450 = vadd.f32 %v2448, %v2449
        %v2451 = vsel %vm2389, %v2386, 0.0
        %v2452 = vadd.f32 %v2450, %v2451
        %v2453 = vrot.slane %v2452, 4
        %v2454 = vadd.f32 %v2452, %v2453
        %v2455 = vrot.slane %v2454, 2
        %v2456 = vadd.f32 %v2454, %v2455
        %v2457 = vrot.slane %v2456, 1
        %v2458 = vadd.f32 %v2456, %v2457
        %v2460 = vsel %vm2389, %v2458, 0
        %2462 = vmatprep.subr.mxu0 0.0
        %2463 = vmatpush1.msra.mxu0 %v2387
        %2464 = vmatprep.subr.mxu0 0.0
        %2465 = vmatpush1.msra.mxu0 %v2388
        %2466 = vmatprep.subr.mxu0 0.0
        %2467 = vmatpush1.msra.mxu0 0.0
        %2468 = vmatprep.subr.mxu0 0.0
        %2469 = vmatpush1.msra.mxu0 0.0
        %2470 = vmatprep.subr.mxu0 0.0
        %2471 = vmatpush1.msra.mxu0 0.0
        %2472 = vmatprep.subr.mxu0 0.0
        %2473 = vmatpush1.msra.mxu0 0.0
        %2474 = vmatprep.subr.mxu0 0.0
        %2475 = vmatpush1.msra.mxu0 0.0
        %2476 = vmatprep.subr.mxu0 0.0
        %2477 = vmatpush1.msra.mxu0 0.0
        %2478 = vmatprep.subr.mxu0 0.0
        %2479 = vmatpush1.msra.mxu0 0.0
        %2480 = vmatprep.subr.mxu0 0.0
        %2481 = vmatpush1.msra.mxu0 0.0
        %2482 = vmatprep.subr.mxu0 0.0
        %2483 = vmatpush1.msra.mxu0 0.0
        %2484 = vmatprep.subr.mxu0 0.0
        %2485 = vmatpush1.msra.mxu0 0.0
        %2486 = vmatprep.subr.mxu0 0.0
        %2487 = vmatpush1.msra.mxu0 0.0
        %2488 = vmatprep.subr.mxu0 0.0
        %2489 = vmatpush1.msra.mxu0 0.0
        %2490 = vmatprep.subr.mxu0 0.0
        %2491 = vmatpush1.msra.mxu0 0.0
        %2492 = vmatprep.subr.mxu0 0.0
        %2493 = vmatpush1.msra.mxu0 0.0
        %2494 = vmatprep.subr.mxu0 0.0
        %2495 = vmatpush1.msra.mxu0 0.0
        %2496 = vmatprep.subr.mxu0 0.0
        %2497 = vmatpush1.msra.mxu0 0.0
        %2498 = vmatprep.subr.mxu0 0.0
        %2499 = vmatpush1.msra.mxu0 0.0
        %2500 = vmatprep.subr.mxu0 0.0
        %2501 = vmatpush1.msra.mxu0 0.0
        %2502 = vmatprep.subr.mxu0 0.0
        %2503 = vmatpush1.msra.mxu0 0.0
        %2504 = vmatprep.subr.mxu0 0.0
        %2505 = vmatpush1.msra.mxu0 0.0
        %2506 = vmatprep.subr.mxu0 0.0
        %2507 = vmatpush1.msra.mxu0 0.0
        %2508 = vmatprep.subr.mxu0 0.0
        %2509 = vmatpush1.msra.mxu0 0.0
        %2510 = vmatprep.subr.mxu0 0.0
        %2511 = vmatpush1.msra.mxu0 0.0
        %2512 = vmatprep.subr.mxu0 0.0
        %2513 = vmatpush1.msra.mxu0 0.0
        %2514 = vmatprep.subr.mxu0 0.0
        %2515 = vmatpush1.msra.mxu0 0.0
        %2516 = vmatprep.subr.mxu0 0.0
        %2517 = vmatpush1.msra.mxu0 0.0
        %2518 = vmatprep.subr.mxu0 0.0
        %2519 = vmatpush1.msra.mxu0 0.0
        %2520 = vmatprep.subr.mxu0 0.0
        %2521 = vmatpush1.msra.mxu0 0.0
        %2522 = vmatprep.subr.mxu0 0.0
        %2523 = vmatpush1.msra.mxu0 0.0
        %2524 = vmatprep.subr.mxu0 0.0
        %2525 = vmatpush1.msra.mxu0 0.0
        %2526 = vmatprep.mubr.f32.mxu0 0.0
        %2527 = vmatmul.mubr.f32.gmra.mrb[0].mxu0 %v2460
        %v2528 = vpop.f32.mrb[0].mxu0
        %v2529 = vadd.f32 0.0, %v2528
        %v2530 = vpop.f32.mrb[0].mxu0
        %2531 = vdwg.mxu0
        %v2532 = vmul.f32 %v2355, %v2355
        %v2533 = vmul.f32 %v2356, %v2356
        %v2534 = vmul.f32 %v2357, %v2357
        %v2535 = vmul.f32 %v2358, %v2358
        %v2536 = vmul.f32 %v2359, %v2359
        %v2537 = vmul.f32 %v2360, %v2360
        %v2538 = vmul.f32 %v2361, %v2361
        %v2539 = vmul.f32 %v2362, %v2362
        %v2540 = vmul.f32 %v2363, %v2363
        %v2541 = vmul.f32 %v2364, %v2364
        %v2542 = vmul.f32 %v2365, %v2365
        %v2543 = vmul.f32 %v2366, %v2366
        %v2544 = vmul.f32 %v2367, %v2367
        %v2545 = vmul.f32 %v2368, %v2368
        %v2546 = vmul.f32 %v2369, %v2369
        %v2547 = vmul.f32 %v2370, %v2370
        %v2548 = vmul.f32 %v2371, %v2371
        %v2549 = vmul.f32 %v2372, %v2372
        %v2550 = vmul.f32 %v2373, %v2373
        %v2551 = vmul.f32 %v2374, %v2374
        %v2552 = vmul.f32 %v2375, %v2375
        %v2553 = vmul.f32 %v2376, %v2376
        %v2554 = vmul.f32 %v2377, %v2377
        %v2555 = vmul.f32 %v2378, %v2378
        %v2556 = vmul.f32 %v2379, %v2379
        %v2557 = vmul.f32 %v2380, %v2380
        %v2558 = vmul.f32 %v2381, %v2381
        %v2559 = vmul.f32 %v2382, %v2382
        %v2560 = vmul.f32 %v2383, %v2383
        %v2561 = vmul.f32 %v2384, %v2384
        %v2562 = vmul.f32 %v2385, %v2385
        %v2563 = vmul.f32 %v2386, %v2386
        %v2564 = vsel %vm2389, %v2532, 0.0
        %v2565 = vsel %vm2389, %v2533, 0.0
        %v2566 = vadd.f32 %v2564, %v2565
        %v2567 = vsel %vm2389, %v2534, 0.0
        %v2568 = vadd.f32 %v2566, %v2567
        %v2569 = vsel %vm2389, %v2535, 0.0
        %v2570 = vadd.f32 %v2568, %v2569
        %v2571 = vsel %vm2389, %v2536, 0.0
        %v2572 = vadd.f32 %v2570, %v2571
        %v2573 = vsel %vm2389, %v2537, 0.0
        %v2574 = vadd.f32 %v2572, %v2573
        %v2575 = vsel %vm2389, %v2538, 0.0
        %v2576 = vadd.f32 %v2574, %v2575
        %v2577 = vsel %vm2389, %v2539, 0.0
        %v2578 = vadd.f32 %v2576, %v2577
        %v2579 = vsel %vm2389, %v2540, 0.0
        %v2580 = vadd.f32 %v2578, %v2579
        %v2581 = vsel %vm2389, %v2541, 0.0
        %v2582 = vadd.f32 %v2580, %v2581
        %v2583 = vsel %vm2389, %v2542, 0.0
        %v2584 = vadd.f32 %v2582, %v2583
        %v2585 = vsel %vm2389, %v2543, 0.0
        %v2586 = vadd.f32 %v2584, %v2585
        %v2587 = vsel %vm2389, %v2544, 0.0
        %v2588 = vadd.f32 %v2586, %v2587
        %v2589 = vsel %vm2389, %v2545, 0.0
        %v2590 = vadd.f32 %v2588, %v2589
        %v2591 = vsel %vm2389, %v2546, 0.0
        %v2592 = vadd.f32 %v2590, %v2591
        %v2593 = vsel %vm2389, %v2547, 0.0
        %v2594 = vadd.f32 %v2592, %v2593
        %v2595 = vsel %vm2389, %v2548, 0.0
        %v2596 = vadd.f32 %v2594, %v2595
        %v2597 = vsel %vm2389, %v2549, 0.0
        %v2598 = vadd.f32 %v2596, %v2597
        %v2599 = vsel %vm2389, %v2550, 0.0
        %v2600 = vadd.f32 %v2598, %v2599
        %v2601 = vsel %vm2389, %v2551, 0.0
        %v2602 = vadd.f32 %v2600, %v2601
        %v2603 = vsel %vm2389, %v2552, 0.0
        %v2604 = vadd.f32 %v2602, %v2603
        %v2605 = vsel %vm2389, %v2553, 0.0
        %v2606 = vadd.f32 %v2604, %v2605
        %v2607 = vsel %vm2389, %v2554, 0.0
        %v2608 = vadd.f32 %v2606, %v2607
        %v2609 = vsel %vm2389, %v2555, 0.0
        %v2610 = vadd.f32 %v2608, %v2609
        %v2611 = vsel %vm2389, %v2556, 0.0
        %v2612 = vadd.f32 %v2610, %v2611
        %v2613 = vsel %vm2389, %v2557, 0.0
        %v2614 = vadd.f32 %v2612, %v2613
        %v2615 = vsel %vm2389, %v2558, 0.0
        %v2616 = vadd.f32 %v2614, %v2615
        %v2617 = vsel %vm2389, %v2559, 0.0
        %v2618 = vadd.f32 %v2616, %v2617
        %v2619 = vsel %vm2389, %v2560, 0.0
        %v2620 = vadd.f32 %v2618, %v2619
        %v2621 = vsel %vm2389, %v2561, 0.0
        %v2622 = vadd.f32 %v2620, %v2621
        %v2623 = vsel %vm2389, %v2562, 0.0
        %v2624 = vadd.f32 %v2622, %v2623
        %v2625 = vsel %vm2389, %v2563, 0.0
        %v2626 = vadd.f32 %v2624, %v2625
        %v2627 = vrot.slane %v2626, 4
        %v2628 = vadd.f32 %v2626, %v2627
        %v2629 = vrot.slane %v2628, 2
        %v2630 = vadd.f32 %v2628, %v2629
        %v2631 = vrot.slane %v2630, 1
        %v2632 = vadd.f32 %v2630, %v2631
        %v2634 = vsel %vm2389, %v2632, 0
        %2636 = vmatprep.subr.mxu0 0.0
        %2637 = vmatpush1.msra.mxu0 %v2387
        %2638 = vmatprep.subr.mxu0 0.0
        %2639 = vmatpush1.msra.mxu0 %v2388
        %2640 = vmatprep.subr.mxu0 0.0
        %2641 = vmatpush1.msra.mxu0 0.0
        %2642 = vmatprep.subr.mxu0 0.0
        %2643 = vmatpush1.msra.mxu0 0.0
        %2644 = vmatprep.subr.mxu0 0.0
        %2645 = vmatpush1.msra.mxu0 0.0
        %2646 = vmatprep.subr.mxu0 0.0
        %2647 = vmatpush1.msra.mxu0 0.0
        %2648 = vmatprep.subr.mxu0 0.0
        %2649 = vmatpush1.msra.mxu0 0.0
        %2650 = vmatprep.subr.mxu0 0.0
        %2651 = vmatpush1.msra.mxu0 0.0
        %2652 = vmatprep.subr.mxu0 0.0
        %2653 = vmatpush1.msra.mxu0 0.0
        %2654 = vmatprep.subr.mxu0 0.0
        %2655 = vmatpush1.msra.mxu0 0.0
        %2656 = vmatprep.subr.mxu0 0.0
        %2657 = vmatpush1.msra.mxu0 0.0
        %2658 = vmatprep.subr.mxu0 0.0
        %2659 = vmatpush1.msra.mxu0 0.0
        %2660 = vmatprep.subr.mxu0 0.0
        %2661 = vmatpush1.msra.mxu0 0.0
        %2662 = vmatprep.subr.mxu0 0.0
        %2663 = vmatpush1.msra.mxu0 0.0
        %2664 = vmatprep.subr.mxu0 0.0
        %2665 = vmatpush1.msra.mxu0 0.0
        %2666 = vmatprep.subr.mxu0 0.0
        %2667 = vmatpush1.msra.mxu0 0.0
        %2668 = vmatprep.subr.mxu0 0.0
        %2669 = vmatpush1.msra.mxu0 0.0
        %2670 = vmatprep.subr.mxu0 0.0
        %2671 = vmatpush1.msra.mxu0 0.0
        %2672 = vmatprep.subr.mxu0 0.0
        %2673 = vmatpush1.msra.mxu0 0.0
        %2674 = vmatprep.subr.mxu0 0.0
        %2675 = vmatpush1.msra.mxu0 0.0
        %2676 = vmatprep.subr.mxu0 0.0
        %2677 = vmatpush1.msra.mxu0 0.0
        %2678 = vmatprep.subr.mxu0 0.0
        %2679 = vmatpush1.msra.mxu0 0.0
        %2680 = vmatprep.subr.mxu0 0.0
        %2681 = vmatpush1.msra.mxu0 0.0
        %2682 = vmatprep.subr.mxu0 0.0
        %2683 = vmatpush1.msra.mxu0 0.0
        %2684 = vmatprep.subr.mxu0 0.0
        %2685 = vmatpush1.msra.mxu0 0.0
        %2686 = vmatprep.subr.mxu0 0.0
        %2687 = vmatpush1.msra.mxu0 0.0
        %2688 = vmatprep.subr.mxu0 0.0
        %2689 = vmatpush1.msra.mxu0 0.0
        %2690 = vmatprep.subr.mxu0 0.0
        %2691 = vmatpush1.msra.mxu0 0.0
        %2692 = vmatprep.subr.mxu0 0.0
        %2693 = vmatpush1.msra.mxu0 0.0
        %2694 = vmatprep.subr.mxu0 0.0
        %2695 = vmatpush1.msra.mxu0 0.0
        %2696 = vmatprep.subr.mxu0 0.0
        %2697 = vmatpush1.msra.mxu0 0.0
        %2698 = vmatprep.subr.mxu0 0.0
        %2699 = vmatpush1.msra.mxu0 0.0
        %2700 = vmatprep.mubr.f32.mxu0 0.0
        %2701 = vmatmul.mubr.f32.gmra.mrb[0].mxu0 %v2634
        %v2702 = vpop.f32.mrb[0].mxu0
        %v2703 = vadd.f32 0.0, %v2702
        %v2704 = vpop.f32.mrb[0].mxu0
        %2705 = vdwg.mxu0
        %v2706 = vmul.f32 %v2529, %v2529
        %v2707 = vsub.f32 %v2703, %v2706
        %v2708 = vmax.f32 %v2707, 0.0
        %v2709 = vadd.f32 %v2708, 1e-05
        %v2710 = vrsqrt.pop %v2709
        %v2711 = vlaneseq
        %v2712 = vshrl.u32 %v2711, 7
        %v2713 = vsub.s32 0, %v2712
        %v2714 = vrot.slane %v2529, %v2713
        %v2715 = vsub.f32 %v2355, %v2714
        %v2716 = vsub.f32 %v2356, %v2714
        %v2717 = vsub.f32 %v2357, %v2714
        %v2718 = vsub.f32 %v2358, %v2714
        %v2719 = vsub.f32 %v2359, %v2714
        %v2720 = vsub.f32 %v2360, %v2714
        %v2721 = vsub.f32 %v2361, %v2714
        %v2722 = vsub.f32 %v2362, %v2714
        %v2723 = vsub.f32 %v2363, %v2714
        %v2724 = vsub.f32 %v2364, %v2714
        %v2725 = vsub.f32 %v2365, %v2714
        %v2726 = vsub.f32 %v2366, %v2714
        %v2727 = vsub.f32 %v2367, %v2714
        %v2728 = vsub.f32 %v2368, %v2714
        %v2729 = vsub.f32 %v2369, %v2714
        %v2730 = vsub.f32 %v2370, %v2714
        %v2731 = vsub.f32 %v2371, %v2714
        %v2732 = vsub.f32 %v2372, %v2714
        %v2733 = vsub.f32 %v2373, %v2714
        %v2734 = vsub.f32 %v2374, %v2714
        %v2735 = vsub.f32 %v2375, %v2714
        %v2736 = vsub.f32 %v2376, %v2714
        %v2737 = vsub.f32 %v2377, %v2714
        %v2738 = vsub.f32 %v2378, %v2714
        %v2739 = vsub.f32 %v2379, %v2714
        %v2740 = vsub.f32 %v2380, %v2714
        %v2741 = vsub.f32 %v2381, %v2714
        %v2742 = vsub.f32 %v2382, %v2714
        %v2743 = vsub.f32 %v2383, %v2714
        %v2744 = vsub.f32 %v2384, %v2714
        %v2745 = vsub.f32 %v2385, %v2714
        %v2746 = vsub.f32 %v2386, %v2714
        %v2747 = vld [vmem:[%s4] sm:$0x1]
        %v2748 = vmul.f32 %v2710, %v2747
        %v2749 = vlaneseq
        %v2750 = vshrl.u32 %v2749, 7
        %v2751 = vsub.s32 0, %v2750
        %v2752 = vrot.slane %v2748, %v2751
        %v2753 = vmul.f32 %v2715, %v2752
        %v2754 = vmul.f32 %v2716, %v2752
        %v2755 = vmul.f32 %v2717, %v2752
        %v2756 = vmul.f32 %v2718, %v2752
        %v2757 = vmul.f32 %v2719, %v2752
        %v2758 = vmul.f32 %v2720, %v2752
        %v2759 = vmul.f32 %v2721, %v2752
        %v2760 = vmul.f32 %v2722, %v2752
        %v2761 = vmul.f32 %v2723, %v2752
        %v2762 = vmul.f32 %v2724, %v2752
        %v2763 = vmul.f32 %v2725, %v2752
        %v2764 = vmul.f32 %v2726, %v2752
        %v2765 = vmul.f32 %v2727, %v2752
        %v2766 = vmul.f32 %v2728, %v2752
        %v2767 = vmul.f32 %v2729, %v2752
        %v2768 = vmul.f32 %v2730, %v2752
        %v2769 = vmul.f32 %v2731, %v2752
        %v2770 = vmul.f32 %v2732, %v2752
        %v2771 = vmul.f32 %v2733, %v2752
        %v2772 = vmul.f32 %v2734, %v2752
        %v2773 = vmul.f32 %v2735, %v2752
        %v2774 = vmul.f32 %v2736, %v2752
        %v2775 = vmul.f32 %v2737, %v2752
        %v2776 = vmul.f32 %v2738, %v2752
        %v2777 = vmul.f32 %v2739, %v2752
        %v2778 = vmul.f32 %v2740, %v2752
        %v2779 = vmul.f32 %v2741, %v2752
        %v2780 = vmul.f32 %v2742, %v2752
        %v2781 = vmul.f32 %v2743, %v2752
        %v2782 = vmul.f32 %v2744, %v2752
        %v2783 = vmul.f32 %v2745, %v2752
        %v2784 = vmul.f32 %v2746, %v2752
        %v2785 = vld [vmem:[%s5] sm:$0x1]
        %v2787 = vlaneseq
        %v2788 = vshrl.u32 %v2787, 7
        %v2789 = vsub.s32 0, %v2788
        %v2790 = vrot.slane %v2785, %v2789
        %v2792 = vadd.f32 %v2753, %v2790
        %v2793 = vadd.f32 %v2754, %v2790
        %v2794 = vadd.f32 %v2755, %v2790
        %v2795 = vadd.f32 %v2756, %v2790
        %v2796 = vadd.f32 %v2757, %v2790
        %v2797 = vadd.f32 %v2758, %v2790
        %v2798 = vadd.f32 %v2759, %v2790
        %v2799 = vadd.f32 %v2760, %v2790
        %v2800 = vadd.f32 %v2761, %v2790
        %v2801 = vadd.f32 %v2762, %v2790
        %v2802 = vadd.f32 %v2763, %v2790
        %v2803 = vadd.f32 %v2764, %v2790
        %v2804 = vadd.f32 %v2765, %v2790
        %v2805 = vadd.f32 %v2766, %v2790
        %v2806 = vadd.f32 %v2767, %v2790
        %v2807 = vadd.f32 %v2768, %v2790
        %v2808 = vadd.f32 %v2769, %v2790
        %v2809 = vadd.f32 %v2770, %v2790
        %v2810 = vadd.f32 %v2771, %v2790
        %v2811 = vadd.f32 %v2772, %v2790
        %v2812 = vadd.f32 %v2773, %v2790
        %v2813 = vadd.f32 %v2774, %v2790
        %v2814 = vadd.f32 %v2775, %v2790
        %v2815 = vadd.f32 %v2776, %v2790
        %v2816 = vadd.f32 %v2777, %v2790
        %v2817 = vadd.f32 %v2778, %v2790
        %v2818 = vadd.f32 %v2779, %v2790
        %v2819 = vadd.f32 %v2780, %v2790
        %v2820 = vadd.f32 %v2781, %v2790
        %v2821 = vadd.f32 %v2782, %v2790
        %v2822 = vadd.f32 %v2783, %v2790
        %v2823 = vadd.f32 %v2784, %v2790
        %v2824 = vadd.f32 %v631, 1.0
        %v2825 = vlaneseq
        %v2826 = vshrl.u32 %v2825, 7
        %v2827 = vsub.s32 0, %v2826
        %v2828 = vrot.slane %v2824, %v2827
        %v2829 = vmul.f32 %v2792, %v2828
        %v2830 = vmul.f32 %v2793, %v2828
        %v2831 = vmul.f32 %v2794, %v2828
        %v2832 = vmul.f32 %v2795, %v2828
        %v2833 = vmul.f32 %v2796, %v2828
        %v2834 = vmul.f32 %v2797, %v2828
        %v2835 = vmul.f32 %v2798, %v2828
        %v2836 = vmul.f32 %v2799, %v2828
        %v2837 = vmul.f32 %v2800, %v2828
        %v2838 = vmul.f32 %v2801, %v2828
        %v2839 = vmul.f32 %v2802, %v2828
        %v2840 = vmul.f32 %v2803, %v2828
        %v2841 = vmul.f32 %v2804, %v2828
        %v2842 = vmul.f32 %v2805, %v2828
        %v2843 = vmul.f32 %v2806, %v2828
        %v2844 = vmul.f32 %v2807, %v2828
        %v2845 = vmul.f32 %v2808, %v2828
        %v2846 = vmul.f32 %v2809, %v2828
        %v2847 = vmul.f32 %v2810, %v2828
        %v2848 = vmul.f32 %v2811, %v2828
        %v2849 = vmul.f32 %v2812, %v2828
        %v2850 = vmul.f32 %v2813, %v2828
        %v2851 = vmul.f32 %v2814, %v2828
        %v2852 = vmul.f32 %v2815, %v2828
        %v2853 = vmul.f32 %v2816, %v2828
        %v2854 = vmul.f32 %v2817, %v2828
        %v2855 = vmul.f32 %v2818, %v2828
        %v2856 = vmul.f32 %v2819, %v2828
        %v2857 = vmul.f32 %v2820, %v2828
        %v2858 = vmul.f32 %v2821, %v2828
        %v2859 = vmul.f32 %v2822, %v2828
        %v2860 = vmul.f32 %v2823, %v2828
        %v2861 = vlaneseq
        %v2862 = vshrl.u32 %v2861, 7
        %v2863 = vsub.s32 0, %v2862
        %v2864 = vrot.slane %v706, %v2863
        %v2865 = vadd.f32 %v2829, %v2864
        %v2866 = vadd.f32 %v2830, %v2864
        %v2867 = vadd.f32 %v2831, %v2864
        %v2868 = vadd.f32 %v2832, %v2864
        %v2869 = vadd.f32 %v2833, %v2864
        %v2870 = vadd.f32 %v2834, %v2864
        %v2871 = vadd.f32 %v2835, %v2864
        %v2872 = vadd.f32 %v2836, %v2864
        %v2873 = vadd.f32 %v2837, %v2864
        %v2874 = vadd.f32 %v2838, %v2864
        %v2875 = vadd.f32 %v2839, %v2864
        %v2876 = vadd.f32 %v2840, %v2864
        %v2877 = vadd.f32 %v2841, %v2864
        %v2878 = vadd.f32 %v2842, %v2864
        %v2879 = vadd.f32 %v2843, %v2864
        %v2880 = vadd.f32 %v2844, %v2864
        %v2881 = vadd.f32 %v2845, %v2864
        %v2882 = vadd.f32 %v2846, %v2864
        %v2883 = vadd.f32 %v2847, %v2864
        %v2884 = vadd.f32 %v2848, %v2864
        %v2885 = vadd.f32 %v2849, %v2864
        %v2886 = vadd.f32 %v2850, %v2864
        %v2887 = vadd.f32 %v2851, %v2864
        %v2888 = vadd.f32 %v2852, %v2864
        %v2889 = vadd.f32 %v2853, %v2864
        %v2890 = vadd.f32 %v2854, %v2864
        %v2891 = vadd.f32 %v2855, %v2864
        %v2892 = vadd.f32 %v2856, %v2864
        %v2893 = vadd.f32 %v2857, %v2864
        %v2894 = vadd.f32 %v2858, %v2864
        %v2895 = vadd.f32 %v2859, %v2864
        %v2896 = vadd.f32 %v2860, %v2864
        %v2897 = vmul.f32 %v2865, 0.5
        %v2898 = vmul.f32 %v2866, 0.5
        %v2899 = vmul.f32 %v2867, 0.5
        %v2900 = vmul.f32 %v2868, 0.5
        %v2901 = vmul.f32 %v2869, 0.5
        %v2902 = vmul.f32 %v2870, 0.5
        %v2903 = vmul.f32 %v2871, 0.5
        %v2904 = vmul.f32 %v2872, 0.5
        %v2905 = vmul.f32 %v2873, 0.5
        %v2906 = vmul.f32 %v2874, 0.5
        %v2907 = vmul.f32 %v2875, 0.5
        %v2908 = vmul.f32 %v2876, 0.5
        %v2909 = vmul.f32 %v2877, 0.5
        %v2910 = vmul.f32 %v2878, 0.5
        %v2911 = vmul.f32 %v2879, 0.5
        %v2912 = vmul.f32 %v2880, 0.5
        %v2913 = vmul.f32 %v2881, 0.5
        %v2914 = vmul.f32 %v2882, 0.5
        %v2915 = vmul.f32 %v2883, 0.5
        %v2916 = vmul.f32 %v2884, 0.5
        %v2917 = vmul.f32 %v2885, 0.5
        %v2918 = vmul.f32 %v2886, 0.5
        %v2919 = vmul.f32 %v2887, 0.5
        %v2920 = vmul.f32 %v2888, 0.5
        %v2921 = vmul.f32 %v2889, 0.5
        %v2922 = vmul.f32 %v2890, 0.5
        %v2923 = vmul.f32 %v2891, 0.5
        %v2924 = vmul.f32 %v2892, 0.5
        %v2925 = vmul.f32 %v2893, 0.5
        %v2926 = vmul.f32 %v2894, 0.5
        %v2927 = vmul.f32 %v2895, 0.5
        %v2928 = vmul.f32 %v2896, 0.5
        %v2929 = vtanh.pop %v2897
        %v2930 = vtanh.pop %v2898
        %v2931 = vtanh.pop %v2899
        %v2932 = vtanh.pop %v2900
        %v2933 = vtanh.pop %v2901
        %v2934 = vtanh.pop %v2902
        %v2935 = vtanh.pop %v2903
        %v2936 = vtanh.pop %v2904
        %v2937 = vtanh.pop %v2905
        %v2938 = vtanh.pop %v2906
        %v2939 = vtanh.pop %v2907
        %v2940 = vtanh.pop %v2908
        %v2941 = vtanh.pop %v2909
        %v2942 = vtanh.pop %v2910
        %v2943 = vtanh.pop %v2911
        %v2944 = vtanh.pop %v2912
        %v2945 = vtanh.pop %v2913
        %v2946 = vtanh.pop %v2914
        %v2947 = vtanh.pop %v2915
        %v2948 = vtanh.pop %v2916
        %v2949 = vtanh.pop %v2917
        %v2950 = vtanh.pop %v2918
        %v2951 = vtanh.pop %v2919
        %v2952 = vtanh.pop %v2920
        %v2953 = vtanh.pop %v2921
        %v2954 = vtanh.pop %v2922
        %v2955 = vtanh.pop %v2923
        %v2956 = vtanh.pop %v2924
        %v2957 = vtanh.pop %v2925
        %v2958 = vtanh.pop %v2926
        %v2959 = vtanh.pop %v2927
        %v2960 = vtanh.pop %v2928
        %v2961 = vmul.f32 %v2929, 0.5
        %v2962 = vmul.f32 %v2930, 0.5
        %v2963 = vmul.f32 %v2931, 0.5
        %v2964 = vmul.f32 %v2932, 0.5
        %v2965 = vmul.f32 %v2933, 0.5
        %v2966 = vmul.f32 %v2934, 0.5
        %v2967 = vmul.f32 %v2935, 0.5
        %v2968 = vmul.f32 %v2936, 0.5
        %v2969 = vmul.f32 %v2937, 0.5
        %v2970 = vmul.f32 %v2938, 0.5
        %v2971 = vmul.f32 %v2939, 0.5
        %v2972 = vmul.f32 %v2940, 0.5
        %v2973 = vmul.f32 %v2941, 0.5
        %v2974 = vmul.f32 %v2942, 0.5
        %v2975 = vmul.f32 %v2943, 0.5
        %v2976 = vmul.f32 %v2944, 0.5
        %v2977 = vmul.f32 %v2945, 0.5
        %v2978 = vmul.f32 %v2946, 0.5
        %v2979 = vmul.f32 %v2947, 0.5
        %v2980 = vmul.f32 %v2948, 0.5
        %v2981 = vmul.f32 %v2949, 0.5
        %v2982 = vmul.f32 %v2950, 0.5
        %v2983 = vmul.f32 %v2951, 0.5
        %v2984 = vmul.f32 %v2952, 0.5
        %v2985 = vmul.f32 %v2953, 0.5
        %v2986 = vmul.f32 %v2954, 0.5
        %v2987 = vmul.f32 %v2955, 0.5
        %v2988 = vmul.f32 %v2956, 0.5
        %v2989 = vmul.f32 %v2957, 0.5
        %v2990 = vmul.f32 %v2958, 0.5
        %v2991 = vmul.f32 %v2959, 0.5
        %v2992 = vmul.f32 %v2960, 0.5
        %v2993 = vadd.f32 %v2961, 0.5
        %v2994 = vadd.f32 %v2962, 0.5
        %v2995 = vadd.f32 %v2963, 0.5
        %v2996 = vadd.f32 %v2964, 0.5
        %v2997 = vadd.f32 %v2965, 0.5
        %v2998 = vadd.f32 %v2966, 0.5
        %v2999 = vadd.f32 %v2967, 0.5
        %v3000 = vadd.f32 %v2968, 0.5
        %v3001 = vadd.f32 %v2969, 0.5
        %v3002 = vadd.f32 %v2970, 0.5
        %v3003 = vadd.f32 %v2971, 0.5
        %v3004 = vadd.f32 %v2972, 0.5
        %v3005 = vadd.f32 %v2973, 0.5
        %v3006 = vadd.f32 %v2974, 0.5
        %v3007 = vadd.f32 %v2975, 0.5
        %v3008 = vadd.f32 %v2976, 0.5
        %v3009 = vadd.f32 %v2977, 0.5
        %v3010 = vadd.f32 %v2978, 0.5
        %v3011 = vadd.f32 %v2979, 0.5
        %v3012 = vadd.f32 %v2980, 0.5
        %v3013 = vadd.f32 %v2981, 0.5
        %v3014 = vadd.f32 %v2982, 0.5
        %v3015 = vadd.f32 %v2983, 0.5
        %v3016 = vadd.f32 %v2984, 0.5
        %v3017 = vadd.f32 %v2985, 0.5
        %v3018 = vadd.f32 %v2986, 0.5
        %v3019 = vadd.f32 %v2987, 0.5
        %v3020 = vadd.f32 %v2988, 0.5
        %v3021 = vadd.f32 %v2989, 0.5
        %v3022 = vadd.f32 %v2990, 0.5
        %v3023 = vadd.f32 %v2991, 0.5
        %v3024 = vadd.f32 %v2992, 0.5
        %v3025 = vmul.f32 %v2865, %v2993
        %v3026 = vmul.f32 %v2866, %v2994
        %v3027 = vmul.f32 %v2867, %v2995
        %v3028 = vmul.f32 %v2868, %v2996
        %v3029 = vmul.f32 %v2869, %v2997
        %v3030 = vmul.f32 %v2870, %v2998
        %v3031 = vmul.f32 %v2871, %v2999
        %v3032 = vmul.f32 %v2872, %v3000
        %v3033 = vmul.f32 %v2873, %v3001
        %v3034 = vmul.f32 %v2874, %v3002
        %v3035 = vmul.f32 %v2875, %v3003
        %v3036 = vmul.f32 %v2876, %v3004
        %v3037 = vmul.f32 %v2877, %v3005
        %v3038 = vmul.f32 %v2878, %v3006
        %v3039 = vmul.f32 %v2879, %v3007
        %v3040 = vmul.f32 %v2880, %v3008
        %v3041 = vmul.f32 %v2881, %v3009
        %v3042 = vmul.f32 %v2882, %v3010
        %v3043 = vmul.f32 %v2883, %v3011
        %v3044 = vmul.f32 %v2884, %v3012
        %v3045 = vmul.f32 %v2885, %v3013
        %v3046 = vmul.f32 %v2886, %v3014
        %v3047 = vmul.f32 %v2887, %v3015
        %v3048 = vmul.f32 %v2888, %v3016
        %v3049 = vmul.f32 %v2889, %v3017
        %v3050 = vmul.f32 %v2890, %v3018
        %v3051 = vmul.f32 %v2891, %v3019
        %v3052 = vmul.f32 %v2892, %v3020
        %v3053 = vmul.f32 %v2893, %v3021
        %v3054 = vmul.f32 %v2894, %v3022
        %v3055 = vmul.f32 %v2895, %v3023
        %v3056 = vmul.f32 %v2896, %v3024
        %v3057 = vpack.c.bf16 %v3026, %v3025
        %v3058 = vpack.c.bf16 %v3028, %v3027
        %v3059 = vpack.c.bf16 %v3030, %v3029
        %v3060 = vpack.c.bf16 %v3032, %v3031
        %v3061 = vpack.c.bf16 %v3034, %v3033
        %v3062 = vpack.c.bf16 %v3036, %v3035
        %v3063 = vpack.c.bf16 %v3038, %v3037
        %v3064 = vpack.c.bf16 %v3040, %v3039
        %v3065 = vpack.c.bf16 %v3042, %v3041
        %v3066 = vpack.c.bf16 %v3044, %v3043
        %v3067 = vpack.c.bf16 %v3046, %v3045
        %v3068 = vpack.c.bf16 %v3048, %v3047
        %v3069 = vpack.c.bf16 %v3050, %v3049
        %v3070 = vpack.c.bf16 %v3052, %v3051
        %v3071 = vpack.c.bf16 %v3054, %v3053
        %v3072 = vpack.c.bf16 %v3056, %v3055
        %vm3073 = vcmask 392192
        %3074 = vst.msk [vmem:[#allocation3] sm:$0xff] %vm3073, 0
        %s3075 = scalar_lea.vmem [#allocation3], 136
        %3076 = vst.msk [vmem:[%s3075] sm:$0xff] %vm3073, 0
        %s3077 = scalar_lea.vmem [#allocation3], 8
        %vm3078 = vcmask 122880
        %vm3079 = vmand %vm3078, %vm715
        %v3080 = vld [vmem:[%s3077] sm:$0x1]
        %v3081 = vsel %vm3079, 0, %v3080
        %3082 = vst [vmem:[%s3077] sm:$0x1] %v3081
        %v3083 = vld [vmem:[%s3077 + $0x8] sm:$0x1]
        %v3084 = vsel %vm3079, 0, %v3083
        %3085 = vst [vmem:[%s3077 + $0x8] sm:$0x1] %v3084
        %v3086 = vld [vmem:[%s3077 + $0x10] sm:$0x1]
        %v3087 = vsel %vm3079, 0, %v3086
        %3088 = vst [vmem:[%s3077 + $0x10] sm:$0x1] %v3087
        %v3089 = vld [vmem:[%s3077 + $0x18] sm:$0x1]
        %v3090 = vsel %vm3079, 0, %v3089
        %3091 = vst [vmem:[%s3077 + $0x18] sm:$0x1] %v3090
        %v3092 = vld [vmem:[%s3077 + $0x20] sm:$0x1]
        %v3093 = vsel %vm3079, 0, %v3092
        %3094 = vst [vmem:[%s3077 + $0x20] sm:$0x1] %v3093
        %v3095 = vld [vmem:[%s3077 + $0x28] sm:$0x1]
        %v3096 = vsel %vm3079, 0, %v3095
        %3097 = vst [vmem:[%s3077 + $0x28] sm:$0x1] %v3096
        %v3098 = vld [vmem:[%s3077 + $0x30] sm:$0x1]
        %v3099 = vsel %vm3079, 0, %v3098
        %3100 = vst [vmem:[%s3077 + $0x30] sm:$0x1] %v3099
        %v3101 = vld [vmem:[%s3077 + $0x38] sm:$0x1]
        %v3102 = vsel %vm3079, 0, %v3101
        %3103 = vst [vmem:[%s3077 + $0x38] sm:$0x1] %v3102
        %v3104 = vld [vmem:[%s3077 + $0x40] sm:$0x1]
        %v3105 = vsel %vm3079, 0, %v3104
        %3106 = vst [vmem:[%s3077 + $0x40] sm:$0x1] %v3105
        %v3107 = vld [vmem:[%s3077 + $0x48] sm:$0x1]
        %v3108 = vsel %vm3079, 0, %v3107
        %3109 = vst [vmem:[%s3077 + $0x48] sm:$0x1] %v3108
        %v3110 = vld [vmem:[%s3077 + $0x50] sm:$0x1]
        %v3111 = vsel %vm3079, 0, %v3110
        %3112 = vst [vmem:[%s3077 + $0x50] sm:$0x1] %v3111
        %v3113 = vld [vmem:[%s3077 + $0x58] sm:$0x1]
        %v3114 = vsel %vm3079, 0, %v3113
        %3115 = vst [vmem:[%s3077 + $0x58] sm:$0x1] %v3114
        %v3116 = vld [vmem:[%s3077 + $0x60] sm:$0x1]
        %v3117 = vsel %vm3079, 0, %v3116
        %3118 = vst [vmem:[%s3077 + $0x60] sm:$0x1] %v3117
        %v3119 = vld [vmem:[%s3077 + $0x68] sm:$0x1]
        %v3120 = vsel %vm3079, 0, %v3119
        %3121 = vst [vmem:[%s3077 + $0x68] sm:$0x1] %v3120
        %v3122 = vld [vmem:[%s3077 + $0x70] sm:$0x1]
        %v3123 = vsel %vm3079, 0, %v3122
        %3124 = vst [vmem:[%s3077 + $0x70] sm:$0x1] %v3123
        %v3125 = vld [vmem:[%s3077 + $0x78] sm:$0x1]
        %v3126 = vsel %vm3079, 0, %v3125
        %3127 = vst [vmem:[%s3077 + $0x78] sm:$0x1] %v3126
        %vm3128 = vcmask 392455
        %vm3129 = vmand %vm3128, %vm766
        %v3130 = vld [vmem:[%s3077] sm:$0x80]
        %v3131 = vsel %vm3129, 0, %v3130
        %3132 = vst [vmem:[%s3077] sm:$0x80] %v3131
        %v3133 = vld [vmem:[%s3077 + $0x8] sm:$0x80]
        %v3134 = vsel %vm3129, 0, %v3133
        %3135 = vst [vmem:[%s3077 + $0x8] sm:$0x80] %v3134
        %v3136 = vld [vmem:[%s3077 + $0x10] sm:$0x80]
        %v3137 = vsel %vm3129, 0, %v3136
        %3138 = vst [vmem:[%s3077 + $0x10] sm:$0x80] %v3137
        %v3139 = vld [vmem:[%s3077 + $0x18] sm:$0x80]
        %v3140 = vsel %vm3129, 0, %v3139
        %3141 = vst [vmem:[%s3077 + $0x18] sm:$0x80] %v3140
        %v3142 = vld [vmem:[%s3077 + $0x20] sm:$0x80]
        %v3143 = vsel %vm3129, 0, %v3142
        %3144 = vst [vmem:[%s3077 + $0x20] sm:$0x80] %v3143
        %v3145 = vld [vmem:[%s3077 + $0x28] sm:$0x80]
        %v3146 = vsel %vm3129, 0, %v3145
        %3147 = vst [vmem:[%s3077 + $0x28] sm:$0x80] %v3146
        %v3148 = vld [vmem:[%s3077 + $0x30] sm:$0x80]
        %v3149 = vsel %vm3129, 0, %v3148
        %3150 = vst [vmem:[%s3077 + $0x30] sm:$0x80] %v3149
        %v3151 = vld [vmem:[%s3077 + $0x38] sm:$0x80]
        %v3152 = vsel %vm3129, 0, %v3151
        %3153 = vst [vmem:[%s3077 + $0x38] sm:$0x80] %v3152
        %v3154 = vld [vmem:[%s3077 + $0x40] sm:$0x80]
        %v3155 = vsel %vm3129, 0, %v3154
        %3156 = vst [vmem:[%s3077 + $0x40] sm:$0x80] %v3155
        %v3157 = vld [vmem:[%s3077 + $0x48] sm:$0x80]
        %v3158 = vsel %vm3129, 0, %v3157
        %3159 = vst [vmem:[%s3077 + $0x48] sm:$0x80] %v3158
        %v3160 = vld [vmem:[%s3077 + $0x50] sm:$0x80]
        %v3161 = vsel %vm3129, 0, %v3160
        %3162 = vst [vmem:[%s3077 + $0x50] sm:$0x80] %v3161
        %v3163 = vld [vmem:[%s3077 + $0x58] sm:$0x80]
        %v3164 = vsel %vm3129, 0, %v3163
        %3165 = vst [vmem:[%s3077 + $0x58] sm:$0x80] %v3164
        %v3166 = vld [vmem:[%s3077 + $0x60] sm:$0x80]
        %v3167 = vsel %vm3129, 0, %v3166
        %3168 = vst [vmem:[%s3077 + $0x60] sm:$0x80] %v3167
        %v3169 = vld [vmem:[%s3077 + $0x68] sm:$0x80]
        %v3170 = vsel %vm3129, 0, %v3169
        %3171 = vst [vmem:[%s3077 + $0x68] sm:$0x80] %v3170
        %v3172 = vld [vmem:[%s3077 + $0x70] sm:$0x80]
        %v3173 = vsel %vm3129, 0, %v3172
        %3174 = vst [vmem:[%s3077 + $0x70] sm:$0x80] %v3173
        %v3175 = vld [vmem:[%s3077 + $0x78] sm:$0x80]
        %v3176 = vsel %vm3129, 0, %v3175
        %3177 = vst [vmem:[%s3077 + $0x78] sm:$0x80] %v3176
        %v3179 = vshrl.u32 %v3057, 16
        %v3181 = vrot.slane %v3179, 7
        %v3182 = vshll.u32 %v3057, 16
        %v3184 = vor.u32 %v3181, %v3182
        %v3186 = vshrl.u32 %v3058, 16
        %v3188 = vrot.slane %v3186, 7
        %v3189 = vshll.u32 %v3058, 16
        %v3191 = vor.u32 %v3188, %v3189
        %v3193 = vshrl.u32 %v3059, 16
        %v3195 = vrot.slane %v3193, 7
        %v3196 = vshll.u32 %v3059, 16
        %v3198 = vor.u32 %v3195, %v3196
        %v3200 = vshrl.u32 %v3060, 16
        %v3202 = vrot.slane %v3200, 7
        %v3203 = vshll.u32 %v3060, 16
        %v3205 = vor.u32 %v3202, %v3203
        %v3207 = vshrl.u32 %v3061, 16
        %v3209 = vrot.slane %v3207, 7
        %v3210 = vshll.u32 %v3061, 16
        %v3212 = vor.u32 %v3209, %v3210
        %v3214 = vshrl.u32 %v3062, 16
        %v3216 = vrot.slane %v3214, 7
        %v3217 = vshll.u32 %v3062, 16
        %v3219 = vor.u32 %v3216, %v3217
        %v3221 = vshrl.u32 %v3063, 16
        %v3223 = vrot.slane %v3221, 7
        %v3224 = vshll.u32 %v3063, 16
        %v3226 = vor.u32 %v3223, %v3224
        %v3228 = vshrl.u32 %v3064, 16
        %v3230 = vrot.slane %v3228, 7
        %v3231 = vshll.u32 %v3064, 16
        %v3233 = vor.u32 %v3230, %v3231
        %v3235 = vshrl.u32 %v3065, 16
        %v3237 = vrot.slane %v3235, 7
        %v3238 = vshll.u32 %v3065, 16
        %v3240 = vor.u32 %v3237, %v3238
        %v3242 = vshrl.u32 %v3066, 16
        %v3244 = vrot.slane %v3242, 7
        %v3245 = vshll.u32 %v3066, 16
        %v3247 = vor.u32 %v3244, %v3245
        %v3249 = vshrl.u32 %v3067, 16
        %v3251 = vrot.slane %v3249, 7
        %v3252 = vshll.u32 %v3067, 16
        %v3254 = vor.u32 %v3251, %v3252
        %v3256 = vshrl.u32 %v3068, 16
        %v3258 = vrot.slane %v3256, 7
        %v3259 = vshll.u32 %v3068, 16
        %v3261 = vor.u32 %v3258, %v3259
        %v3263 = vshrl.u32 %v3069, 16
        %v3265 = vrot.slane %v3263, 7
        %v3266 = vshll.u32 %v3069, 16
        %v3268 = vor.u32 %v3265, %v3266
        %v3270 = vshrl.u32 %v3070, 16
        %v3272 = vrot.slane %v3270, 7
        %v3273 = vshll.u32 %v3070, 16
        %v3275 = vor.u32 %v3272, %v3273
        %v3277 = vshrl.u32 %v3071, 16
        %v3279 = vrot.slane %v3277, 7
        %v3280 = vshll.u32 %v3071, 16
        %v3282 = vor.u32 %v3279, %v3280
        %v3284 = vshrl.u32 %v3072, 16
        %v3286 = vrot.slane %v3284, 7
        %v3287 = vshll.u32 %v3072, 16
        %v3289 = vor.u32 %v3286, %v3287
        %vm3306 = vcmask 130048
        %vm3307 = vmand %vm3306, %vm1057
        %v3308 = vld [vmem:[%s3077] sm:$0xff]
        %v3309 = vsel %vm3307, %v3184, %v3308
        %3310 = vst [vmem:[%s3077] sm:$0xff] %v3309
        %v3311 = vld [vmem:[%s3077 + $0x8] sm:$0xff]
        %v3312 = vsel %vm3307, %v3191, %v3311
        %3313 = vst [vmem:[%s3077 + $0x8] sm:$0xff] %v3312
        %v3314 = vld [vmem:[%s3077 + $0x10] sm:$0xff]
        %v3315 = vsel %vm3307, %v3198, %v3314
        %3316 = vst [vmem:[%s3077 + $0x10] sm:$0xff] %v3315
        %v3317 = vld [vmem:[%s3077 + $0x18] sm:$0xff]
        %v3318 = vsel %vm3307, %v3205, %v3317
        %3319 = vst [vmem:[%s3077 + $0x18] sm:$0xff] %v3318
        %v3320 = vld [vmem:[%s3077 + $0x20] sm:$0xff]
        %v3321 = vsel %vm3307, %v3212, %v3320
        %3322 = vst [vmem:[%s3077 + $0x20] sm:$0xff] %v3321
        %v3323 = vld [vmem:[%s3077 + $0x28] sm:$0xff]
        %v3324 = vsel %vm3307, %v3219, %v3323
        %3325 = vst [vmem:[%s3077 + $0x28] sm:$0xff] %v3324
        %v3326 = vld [vmem:[%s3077 + $0x30] sm:$0xff]
        %v3327 = vsel %vm3307, %v3226, %v3326
        %3328 = vst [vmem:[%s3077 + $0x30] sm:$0xff] %v3327
        %v3329 = vld [vmem:[%s3077 + $0x38] sm:$0xff]
        %v3330 = vsel %vm3307, %v3233, %v3329
        %3331 = vst [vmem:[%s3077 + $0x38] sm:$0xff] %v3330
        %v3332 = vld [vmem:[%s3077 + $0x40] sm:$0xff]
        %v3333 = vsel %vm3307, %v3240, %v3332
        %3334 = vst [vmem:[%s3077 + $0x40] sm:$0xff] %v3333
        %v3335 = vld [vmem:[%s3077 + $0x48] sm:$0xff]
        %v3336 = vsel %vm3307, %v3247, %v3335
        %3337 = vst [vmem:[%s3077 + $0x48] sm:$0xff] %v3336
        %v3338 = vld [vmem:[%s3077 + $0x50] sm:$0xff]
        %v3339 = vsel %vm3307, %v3254, %v3338
        %3340 = vst [vmem:[%s3077 + $0x50] sm:$0xff] %v3339
        %v3341 = vld [vmem:[%s3077 + $0x58] sm:$0xff]
        %v3342 = vsel %vm3307, %v3261, %v3341
        %3343 = vst [vmem:[%s3077 + $0x58] sm:$0xff] %v3342
        %v3344 = vld [vmem:[%s3077 + $0x60] sm:$0xff]
        %v3345 = vsel %vm3307, %v3268, %v3344
        %3346 = vst [vmem:[%s3077 + $0x60] sm:$0xff] %v3345
        %v3347 = vld [vmem:[%s3077 + $0x68] sm:$0xff]
        %v3348 = vsel %vm3307, %v3275, %v3347
        %3349 = vst [vmem:[%s3077 + $0x68] sm:$0xff] %v3348
        %v3350 = vld [vmem:[%s3077 + $0x70] sm:$0xff]
        %v3351 = vsel %vm3307, %v3282, %v3350
        %3352 = vst [vmem:[%s3077 + $0x70] sm:$0xff] %v3351
        %v3353 = vld [vmem:[%s3077 + $0x78] sm:$0xff]
        %v3354 = vsel %vm3307, %v3289, %v3353
        %3355 = vst [vmem:[%s3077 + $0x78] sm:$0xff] %v3354
        %3372 = vrot.lane.b32.xlu0 %v3057, 16
        %v3373 = vpop.permute.xlu0 %3372
        %3374 = vrot.lane.b32.xlu0 %v3058, 16
        %v3375 = vpop.permute.xlu0 %3374
        %3376 = vrot.lane.b32.xlu0 %v3059, 16
        %v3377 = vpop.permute.xlu0 %3376
        %3378 = vrot.lane.b32.xlu0 %v3060, 16
        %v3379 = vpop.permute.xlu0 %3378
        %3380 = vrot.lane.b32.xlu0 %v3061, 16
        %v3381 = vpop.permute.xlu0 %3380
        %3382 = vrot.lane.b32.xlu0 %v3062, 16
        %v3383 = vpop.permute.xlu0 %3382
        %3384 = vrot.lane.b32.xlu0 %v3063, 16
        %v3385 = vpop.permute.xlu0 %3384
        %3386 = vrot.lane.b32.xlu0 %v3064, 16
        %v3387 = vpop.permute.xlu0 %3386
        %3388 = vrot.lane.b32.xlu0 %v3065, 16
        %v3389 = vpop.permute.xlu0 %3388
        %3390 = vrot.lane.b32.xlu0 %v3066, 16
        %v3391 = vpop.permute.xlu0 %3390
        %3392 = vrot.lane.b32.xlu0 %v3067, 16
        %v3393 = vpop.permute.xlu0 %3392
        %3394 = vrot.lane.b32.xlu0 %v3068, 16
        %v3395 = vpop.permute.xlu0 %3394
        %3396 = vrot.lane.b32.xlu0 %v3069, 16
        %v3397 = vpop.permute.xlu0 %3396
        %3398 = vrot.lane.b32.xlu0 %v3070, 16
        %v3399 = vpop.permute.xlu0 %3398
        %3400 = vrot.lane.b32.xlu0 %v3071, 16
        %v3401 = vpop.permute.xlu0 %3400
        %3402 = vrot.lane.b32.xlu0 %v3072, 16
        %v3403 = vpop.permute.xlu0 %3402
        %vm3420 = vcmask 261248
        %3421 = vst.msk [vmem:[%s3077] sm:$0xff] %vm3420, %v3373
        %3422 = vst.msk [vmem:[%s3077 + $0x8] sm:$0xff] %vm3420, %v3375
        %3423 = vst.msk [vmem:[%s3077 + $0x10] sm:$0xff] %vm3420, %v3377
        %3424 = vst.msk [vmem:[%s3077 + $0x18] sm:$0xff] %vm3420, %v3379
        %3425 = vst.msk [vmem:[%s3077 + $0x20] sm:$0xff] %vm3420, %v3381
        %3426 = vst.msk [vmem:[%s3077 + $0x28] sm:$0xff] %vm3420, %v3383
        %3427 = vst.msk [vmem:[%s3077 + $0x30] sm:$0xff] %vm3420, %v3385
        %3428 = vst.msk [vmem:[%s3077 + $0x38] sm:$0xff] %vm3420, %v3387
        %3429 = vst.msk [vmem:[%s3077 + $0x40] sm:$0xff] %vm3420, %v3389
        %3430 = vst.msk [vmem:[%s3077 + $0x48] sm:$0xff] %vm3420, %v3391
        %3431 = vst.msk [vmem:[%s3077 + $0x50] sm:$0xff] %vm3420, %v3393
        %3432 = vst.msk [vmem:[%s3077 + $0x58] sm:$0xff] %vm3420, %v3395
        %3433 = vst.msk [vmem:[%s3077 + $0x60] sm:$0xff] %vm3420, %v3397
        %3434 = vst.msk [vmem:[%s3077 + $0x68] sm:$0xff] %vm3420, %v3399
        %3435 = vst.msk [vmem:[%s3077 + $0x70] sm:$0xff] %vm3420, %v3401
        %3436 = vst.msk [vmem:[%s3077 + $0x78] sm:$0xff] %vm3420, %v3403
        %v3437 = vrot.slane %v3182, 1
        %v3438 = vor.u32 %v3179, %v3437
        %v3439 = vrot.slane %v3189, 1
        %v3440 = vor.u32 %v3186, %v3439
        %v3441 = vrot.slane %v3196, 1
        %v3442 = vor.u32 %v3193, %v3441
        %v3443 = vrot.slane %v3203, 1
        %v3444 = vor.u32 %v3200, %v3443
        %v3445 = vrot.slane %v3210, 1
        %v3446 = vor.u32 %v3207, %v3445
        %v3447 = vrot.slane %v3217, 1
        %v3448 = vor.u32 %v3214, %v3447
        %v3449 = vrot.slane %v3224, 1
        %v3450 = vor.u32 %v3221, %v3449
        %v3451 = vrot.slane %v3231, 1
        %v3452 = vor.u32 %v3228, %v3451
        %v3453 = vrot.slane %v3238, 1
        %v3454 = vor.u32 %v3235, %v3453
        %v3455 = vrot.slane %v3245, 1
        %v3456 = vor.u32 %v3242, %v3455
        %v3457 = vrot.slane %v3252, 1
        %v3458 = vor.u32 %v3249, %v3457
        %v3459 = vrot.slane %v3259, 1
        %v3460 = vor.u32 %v3256, %v3459
        %v3461 = vrot.slane %v3266, 1
        %v3462 = vor.u32 %v3263, %v3461
        %v3463 = vrot.slane %v3273, 1
        %v3464 = vor.u32 %v3270, %v3463
        %v3465 = vrot.slane %v3280, 1
        %v3466 = vor.u32 %v3277, %v3465
        %v3467 = vrot.slane %v3287, 1
        %v3468 = vor.u32 %v3284, %v3467
        %3469 = vrot.lane.b32.xlu0 %v3438, 32
        %v3470 = vpop.permute.xlu0 %3469
        %3471 = vrot.lane.b32.xlu0 %v3440, 32
        %v3472 = vpop.permute.xlu0 %3471
        %3473 = vrot.lane.b32.xlu0 %v3442, 32
        %v3474 = vpop.permute.xlu0 %3473
        %3475 = vrot.lane.b32.xlu0 %v3444, 32
        %v3476 = vpop.permute.xlu0 %3475
        %3477 = vrot.lane.b32.xlu0 %v3446, 32
        %v3478 = vpop.permute.xlu0 %3477
        %3479 = vrot.lane.b32.xlu0 %v3448, 32
        %v3480 = vpop.permute.xlu0 %3479
        %3481 = vrot.lane.b32.xlu0 %v3450, 32
        %v3482 = vpop.permute.xlu0 %3481
        %3483 = vrot.lane.b32.xlu0 %v3452, 32
        %v3484 = vpop.permute.xlu0 %3483
        %3485 = vrot.lane.b32.xlu0 %v3454, 32
        %v3486 = vpop.permute.xlu0 %3485
        %3487 = vrot.lane.b32.xlu0 %v3456, 32
        %v3488 = vpop.permute.xlu0 %3487
        %3489 = vrot.lane.b32.xlu0 %v3458, 32
        %v3490 = vpop.permute.xlu0 %3489
        %3491 = vrot.lane.b32.xlu0 %v3460, 32
        %v3492 = vpop.permute.xlu0 %3491
        %3493 = vrot.lane.b32.xlu0 %v3462, 32
        %v3494 = vpop.permute.xlu0 %3493
        %3495 = vrot.lane.b32.xlu0 %v3464, 32
        %v3496 = vpop.permute.xlu0 %3495
        %3497 = vrot.lane.b32.xlu0 %v3466, 32
        %v3498 = vpop.permute.xlu0 %3497
        %3499 = vrot.lane.b32.xlu0 %v3468, 32
        %v3500 = vpop.permute.xlu0 %3499
        %vm3517 = vcmask 392448
        %vm3518 = vmand %vm3517, %vm1557
        %v3519 = vld [vmem:[%s3077] sm:$0xff]
        %v3520 = vsel %vm3518, %v3470, %v3519
        %3521 = vst [vmem:[%s3077] sm:$0xff] %v3520
        %v3522 = vld [vmem:[%s3077 + $0x8] sm:$0xff]
        %v3523 = vsel %vm3518, %v3472, %v3522
        %3524 = vst [vmem:[%s3077 + $0x8] sm:$0xff] %v3523
        %v3525 = vld [vmem:[%s3077 + $0x10] sm:$0xff]
        %v3526 = vsel %vm3518, %v3474, %v3525
        %3527 = vst [vmem:[%s3077 + $0x10] sm:$0xff] %v3526
        %v3528 = vld [vmem:[%s3077 + $0x18] sm:$0xff]
        %v3529 = vsel %vm3518, %v3476, %v3528
        %3530 = vst [vmem:[%s3077 + $0x18] sm:$0xff] %v3529
        %v3531 = vld [vmem:[%s3077 + $0x20] sm:$0xff]
        %v3532 = vsel %vm3518, %v3478, %v3531
        %3533 = vst [vmem:[%s3077 + $0x20] sm:$0xff] %v3532
        %v3534 = vld [vmem:[%s3077 + $0x28] sm:$0xff]
        %v3535 = vsel %vm3518, %v3480, %v3534
        %3536 = vst [vmem:[%s3077 + $0x28] sm:$0xff] %v3535
        %v3537 = vld [vmem:[%s3077 + $0x30] sm:$0xff]
        %v3538 = vsel %vm3518, %v3482, %v3537
        %3539 = vst [vmem:[%s3077 + $0x30] sm:$0xff] %v3538
        %v3540 = vld [vmem:[%s3077 + $0x38] sm:$0xff]
        %v3541 = vsel %vm3518, %v3484, %v3540
        %3542 = vst [vmem:[%s3077 + $0x38] sm:$0xff] %v3541
        %v3543 = vld [vmem:[%s3077 + $0x40] sm:$0xff]
        %v3544 = vsel %vm3518, %v3486, %v3543
        %3545 = vst [vmem:[%s3077 + $0x40] sm:$0xff] %v3544
        %v3546 = vld [vmem:[%s3077 + $0x48] sm:$0xff]
        %v3547 = vsel %vm3518, %v3488, %v3546
        %3548 = vst [vmem:[%s3077 + $0x48] sm:$0xff] %v3547
        %v3549 = vld [vmem:[%s3077 + $0x50] sm:$0xff]
        %v3550 = vsel %vm3518, %v3490, %v3549
        %3551 = vst [vmem:[%s3077 + $0x50] sm:$0xff] %v3550
        %v3552 = vld [vmem:[%s3077 + $0x58] sm:$0xff]
        %v3553 = vsel %vm3518, %v3492, %v3552
        %3554 = vst [vmem:[%s3077 + $0x58] sm:$0xff] %v3553
        %v3555 = vld [vmem:[%s3077 + $0x60] sm:$0xff]
        %v3556 = vsel %vm3518, %v3494, %v3555
        %3557 = vst [vmem:[%s3077 + $0x60] sm:$0xff] %v3556
        %v3558 = vld [vmem:[%s3077 + $0x68] sm:$0xff]
        %v3559 = vsel %vm3518, %v3496, %v3558
        %3560 = vst [vmem:[%s3077 + $0x68] sm:$0xff] %v3559
        %v3561 = vld [vmem:[%s3077 + $0x70] sm:$0xff]
        %v3562 = vsel %vm3518, %v3498, %v3561
        %3563 = vst [vmem:[%s3077 + $0x70] sm:$0xff] %v3562
        %v3564 = vld [vmem:[%s3077 + $0x78] sm:$0xff]
        %v3565 = vsel %vm3518, %v3500, %v3564
        %3566 = vst [vmem:[%s3077 + $0x78] sm:$0xff] %v3565
        %v3567 = vld [vmem:[#allocation3] sm:$0xff]
        %v3568 = vld [vmem:[#allocation3 + $0x8] sm:$0xff]
        %v3569 = vld [vmem:[#allocation3 + $0x10] sm:$0xff]
        %v3570 = vld [vmem:[#allocation3 + $0x18] sm:$0xff]
        %v3571 = vld [vmem:[#allocation3 + $0x20] sm:$0xff]
        %v3572 = vld [vmem:[#allocation3 + $0x28] sm:$0xff]
        %v3573 = vld [vmem:[#allocation3 + $0x30] sm:$0xff]
        %v3574 = vld [vmem:[#allocation3 + $0x38] sm:$0xff]
        %v3575 = vld [vmem:[#allocation3 + $0x40] sm:$0xff]
        %v3576 = vld [vmem:[#allocation3 + $0x48] sm:$0xff]
        %v3577 = vld [vmem:[#allocation3 + $0x50] sm:$0xff]
        %v3578 = vld [vmem:[#allocation3 + $0x58] sm:$0xff]
        %v3579 = vld [vmem:[#allocation3 + $0x60] sm:$0xff]
        %v3580 = vld [vmem:[#allocation3 + $0x68] sm:$0xff]
        %v3581 = vld [vmem:[#allocation3 + $0x70] sm:$0xff]
        %v3582 = vld [vmem:[#allocation3 + $0x78] sm:$0xff]
        %v3583 = vld [vmem:[%s6] sm:$0xf]
        %v3584 = vld [vmem:[%s6 + $0x4] sm:$0xf]
        %v3585 = vld [vmem:[%s6 + $0x8] sm:$0xf]
        %v3586 = vld [vmem:[%s6 + $0xc] sm:$0xf]
        %v3587 = vld [vmem:[%s6 + $0x10] sm:$0xf]
        %v3588 = vld [vmem:[%s6 + $0x14] sm:$0xf]
        %v3589 = vld [vmem:[%s3077] sm:$0xff]
        %v3590 = vld [vmem:[%s3077 + $0x8] sm:$0xff]
        %v3591 = vld [vmem:[%s3077 + $0x10] sm:$0xff]
        %v3592 = vld [vmem:[%s3077 + $0x18] sm:$0xff]
        %v3593 = vld [vmem:[%s3077 + $0x20] sm:$0xff]
        %v3594 = vld [vmem:[%s3077 + $0x28] sm:$0xff]
        %v3595 = vld [vmem:[%s3077 + $0x30] sm:$0xff]
        %v3596 = vld [vmem:[%s3077 + $0x38] sm:$0xff]
        %v3597 = vld [vmem:[%s3077 + $0x40] sm:$0xff]
        %v3598 = vld [vmem:[%s3077 + $0x48] sm:$0xff]
        %v3599 = vld [vmem:[%s3077 + $0x50] sm:$0xff]
        %v3600 = vld [vmem:[%s3077 + $0x58] sm:$0xff]
        %v3601 = vld [vmem:[%s3077 + $0x60] sm:$0xff]
        %v3602 = vld [vmem:[%s3077 + $0x68] sm:$0xff]
        %v3603 = vld [vmem:[%s3077 + $0x70] sm:$0xff]
        %v3604 = vld [vmem:[%s3077 + $0x78] sm:$0xff]
        %s3605 = scalar_lea.vmem %s6, 24
        %v3606 = vld [vmem:[%s3605] sm:$0xf]
        %v3607 = vld [vmem:[%s3605 + $0x4] sm:$0xf]
        %v3608 = vld [vmem:[%s3605 + $0x8] sm:$0xf]
        %v3609 = vld [vmem:[%s3605 + $0xc] sm:$0xf]
        %v3610 = vld [vmem:[%s3605 + $0x10] sm:$0xf]
        %v3611 = vld [vmem:[%s3605 + $0x14] sm:$0xf]
        %v3618 = vunpack.c.l.b16 %v3606
        %v3619 = vunpack.c.l.b16 %v3607
        %v3620 = vunpack.c.l.b16 %v3608
        %v3621 = vunpack.c.l.b16 %v3609
        %v3622 = vunpack.c.l.b16 %v3610
        %v3623 = vunpack.c.l.b16 %v3611
        %v3624 = vpack.c.b16 %v3619, %v3618
        %v3625 = vpack.c.b16 %v3621, %v3620
        %v3626 = vpack.c.b16 %v3623, %v3622
        %v3631 = vsel %vm3073, %v3589, 0
        %v3634 = vsel %vm3073, %v3590, 0
        %v3637 = vsel %vm3073, %v3591, 0
        %v3640 = vsel %vm3073, %v3592, 0
        %v3643 = vsel %vm3073, %v3593, 0
        %v3646 = vsel %vm3073, %v3594, 0
        %v3649 = vsel %vm3073, %v3595, 0
        %v3652 = vsel %vm3073, %v3596, 0
        %v3655 = vsel %vm3073, %v3597, 0
        %v3658 = vsel %vm3073, %v3598, 0
        %v3661 = vsel %vm3073, %v3599, 0
        %v3664 = vsel %vm3073, %v3600, 0
        %v3667 = vsel %vm3073, %v3601, 0
        %v3670 = vsel %vm3073, %v3602, 0
        %v3673 = vsel %vm3073, %v3603, 0
        %v3676 = vsel %vm3073, %v3604, 0
        %3678 = vmatprep.subr.bf16.mxu0 0
        %3679 = vmatpush1.bf16.msra.mxu0 %v3624
        %3680 = vmatprep.subr.bf16.mxu0 0
        %3681 = vmatpush1.bf16.msra.mxu0 %v3625
        %3682 = vmatprep.subr.bf16.mxu0 0
        %3683 = vmatpush1.bf16.msra.mxu0 %v3626
        %3684 = vmatprep.subr.bf16.mxu0 0
        %3685 = vmatpush1.bf16.msra.mxu0 0
        %3686 = vmatprep.subr.bf16.mxu0 0
        %3687 = vmatpush1.bf16.msra.mxu0 0
        %3688 = vmatprep.subr.bf16.mxu0 0
        %3689 = vmatpush1.bf16.msra.mxu0 0
        %3690 = vmatprep.subr.bf16.mxu0 0
        %3691 = vmatpush1.bf16.msra.mxu0 0
        %3692 = vmatprep.subr.bf16.mxu0 0
        %3693 = vmatpush1.bf16.msra.mxu0 0
        %3694 = vmatprep.subr.bf16.mxu0 0
        %3695 = vmatpush1.bf16.msra.mxu0 0
        %3696 = vmatprep.subr.bf16.mxu0 0
        %3697 = vmatpush1.bf16.msra.mxu0 0
        %3698 = vmatprep.subr.bf16.mxu0 0
        %3699 = vmatpush1.bf16.msra.mxu0 0
        %3700 = vmatprep.subr.bf16.mxu0 0
        %3701 = vmatpush1.bf16.msra.mxu0 0
        %3702 = vmatprep.subr.bf16.mxu0 0
        %3703 = vmatpush1.bf16.msra.mxu0 0
        %3704 = vmatprep.subr.bf16.mxu0 0
        %3705 = vmatpush1.bf16.msra.mxu0 0
        %3706 = vmatprep.subr.bf16.mxu0 0
        %3707 = vmatpush1.bf16.msra.mxu0 0
        %3708 = vmatprep.subr.bf16.mxu0 0
        %3709 = vmatpush1.bf16.msra.mxu0 0
        %3710 = vmatprep.mubr.bf16.mxu0 0
        %3711 = vmatmul.mubr.bf16.gmra.mrb[0].mxu0 %v3631
        %v3712 = vpop.f32.mrb[0].mxu0
        %v3713 = vadd.f32 0.0, %v3712
        %v3714 = vpop.f32.mrb[0].mxu0
        %v3715 = vpop.f32.mrb[0].mxu0
        %v3716 = vadd.f32 0.0, %v3715
        %v3717 = vpop.f32.mrb[0].mxu0
        %3718 = vmatprep.mubr.bf16.mxu0 0
        %3719 = vmatmul.mubr.bf16.gmra.mrb[0].mxu0 %v3634
        %v3720 = vpop.f32.mrb[0].mxu0
        %v3721 = vadd.f32 0.0, %v3720
        %v3722 = vpop.f32.mrb[0].mxu0
        %v3723 = vpop.f32.mrb[0].mxu0
        %v3724 = vadd.f32 0.0, %v3723
        %v3725 = vpop.f32.mrb[0].mxu0
        %3726 = vmatprep.mubr.bf16.mxu0 0
        %3727 = vmatmul.mubr.bf16.gmra.mrb[0].mxu0 %v3637
        %v3728 = vpop.f32.mrb[0].mxu0
        %v3729 = vadd.f32 0.0, %v3728
        %v3730 = vpop.f32.mrb[0].mxu0
        %v3731 = vpop.f32.mrb[0].mxu0
        %v3732 = vadd.f32 0.0, %v3731
        %v3733 = vpop.f32.mrb[0].mxu0
        %3734 = vmatprep.mubr.bf16.mxu0 0
        %3735 = vmatmul.mubr.bf16.gmra.mrb[0].mxu0 %v3640
        %v3736 = vpop.f32.mrb[0].mxu0
        %v3737 = vadd.f32 0.0, %v3736
        %v3738 = vpop.f32.mrb[0].mxu0
        %v3739 = vpop.f32.mrb[0].mxu0
        %v3740 = vadd.f32 0.0, %v3739
        %v3741 = vpop.f32.mrb[0].mxu0
        %3742 = vmatprep.mubr.bf16.mxu0 0
        %3743 = vmatmul.mubr.bf16.gmra.mrb[0].mxu0 %v3643
        %v3744 = vpop.f32.mrb[0].mxu0
        %v3745 = vadd.f32 0.0, %v3744
        %v3746 = vpop.f32.mrb[0].mxu0
        %v3747 = vpop.f32.mrb[0].mxu0
        %v3748 = vadd.f32 0.0, %v3747
        %v3749 = vpop.f32.mrb[0].mxu0
        %3750 = vmatprep.mubr.bf16.mxu0 0
        %3751 = vmatmul.mubr.bf16.gmra.mrb[0].mxu0 %v3646
        %v3752 = vpop.f32.mrb[0].mxu0
        %v3753 = vadd.f32 0.0, %v3752
        %v3754 = vpop.f32.mrb[0].mxu0
        %v3755 = vpop.f32.mrb[0].mxu0
        %v3756 = vadd.f32 0.0, %v3755
        %v3757 = vpop.f32.mrb[0].mxu0
        %3758 = vmatprep.mubr.bf16.mxu0 0
        %3759 = vmatmul.mubr.bf16.gmra.mrb[0].mxu0 %v3649
        %v3760 = vpop.f32.mrb[0].mxu0
        %v3761 = vadd.f32 0.0, %v3760
        %v3762 = vpop.f32.mrb[0].mxu0
        %v3763 = vpop.f32.mrb[0].mxu0
        %v3764 = vadd.f32 0.0, %v3763
        %v3765 = vpop.f32.mrb[0].mxu0
        %3766 = vmatprep.mubr.bf16.mxu0 0
        %3767 = vmatmul.mubr.bf16.gmra.mrb[0].mxu0 %v3652
        %v3768 = vpop.f32.mrb[0].mxu0
        %v3769 = vadd.f32 0.0, %v3768
        %v3770 = vpop.f32.mrb[0].mxu0
        %v3771 = vpop.f32.mrb[0].mxu0
        %v3772 = vadd.f32 0.0, %v3771
        %v3773 = vpop.f32.mrb[0].mxu0
        %3774 = vmatprep.mubr.bf16.mxu0 0
        %3775 = vmatmul.mubr.bf16.gmra.mrb[0].mxu0 %v3655
        %v3776 = vpop.f32.mrb[0].mxu0
        %v3777 = vadd.f32 0.0, %v3776
        %v3778 = vpop.f32.mrb[0].mxu0
        %v3779 = vpop.f32.mrb[0].mxu0
        %v3780 = vadd.f32 0.0, %v3779
        %v3781 = vpop.f32.mrb[0].mxu0
        %3782 = vmatprep.mubr.bf16.mxu0 0
        %3783 = vmatmul.mubr.bf16.gmra.mrb[0].mxu0 %v3658
        %v3784 = vpop.f32.mrb[0].mxu0
        %v3785 = vadd.f32 0.0, %v3784
        %v3786 = vpop.f32.mrb[0].mxu0
        %v3787 = vpop.f32.mrb[0].mxu0
        %v3788 = vadd.f32 0.0, %v3787
        %v3789 = vpop.f32.mrb[0].mxu0
        %3790 = vmatprep.mubr.bf16.mxu0 0
        %3791 = vmatmul.mubr.bf16.gmra.mrb[0].mxu0 %v3661
        %v3792 = vpop.f32.mrb[0].mxu0
        %v3793 = vadd.f32 0.0, %v3792
        %v3794 = vpop.f32.mrb[0].mxu0
        %v3795 = vpop.f32.mrb[0].mxu0
        %v3796 = vadd.f32 0.0, %v3795
        %v3797 = vpop.f32.mrb[0].mxu0
        %3798 = vmatprep.mubr.bf16.mxu0 0
        %3799 = vmatmul.mubr.bf16.gmra.mrb[0].mxu0 %v3664
        %v3800 = vpop.f32.mrb[0].mxu0
        %v3801 = vadd.f32 0.0, %v3800
        %v3802 = vpop.f32.mrb[0].mxu0
        %v3803 = vpop.f32.mrb[0].mxu0
        %v3804 = vadd.f32 0.0, %v3803
        %v3805 = vpop.f32.mrb[0].mxu0
        %3806 = vmatprep.mubr.bf16.mxu0 0
        %3807 = vmatmul.mubr.bf16.gmra.mrb[0].mxu0 %v3667
        %v3808 = vpop.f32.mrb[0].mxu0
        %v3809 = vadd.f32 0.0, %v3808
        %v3810 = vpop.f32.mrb[0].mxu0
        %v3811 = vpop.f32.mrb[0].mxu0
        %v3812 = vadd.f32 0.0, %v3811
        %v3813 = vpop.f32.mrb[0].mxu0
        %3814 = vmatprep.mubr.bf16.mxu0 0
        %3815 = vmatmul.mubr.bf16.gmra.mrb[0].mxu0 %v3670
        %v3816 = vpop.f32.mrb[0].mxu0
        %v3817 = vadd.f32 0.0, %v3816
        %v3818 = vpop.f32.mrb[0].mxu0
        %v3819 = vpop.f32.mrb[0].mxu0
        %v3820 = vadd.f32 0.0, %v3819
        %v3821 = vpop.f32.mrb[0].mxu0
        %3822 = vmatprep.mubr.bf16.mxu0 0
        %3823 = vmatmul.mubr.bf16.gmra.mrb[0].mxu0 %v3673
        %v3824 = vpop.f32.mrb[0].mxu0
        %v3825 = vadd.f32 0.0, %v3824
        %v3826 = vpop.f32.mrb[0].mxu0
        %v3827 = vpop.f32.mrb[0].mxu0
        %v3828 = vadd.f32 0.0, %v3827
        %v3829 = vpop.f32.mrb[0].mxu0
        %3830 = vmatprep.mubr.bf16.mxu0 0
        %3831 = vmatmul.mubr.bf16.gmra.mrb[0].mxu0 %v3676
        %v3832 = vpop.f32.mrb[0].mxu0
        %v3833 = vadd.f32 0.0, %v3832
        %v3834 = vpop.f32.mrb[0].mxu0
        %v3835 = vpop.f32.mrb[0].mxu0
        %v3836 = vadd.f32 0.0, %v3835
        %v3837 = vpop.f32.mrb[0].mxu0
        %3838 = vdwg.mxu0
        %v3845 = vunpack.c.l.b16 %v3583
        %v3846 = vunpack.c.l.b16 %v3584
        %v3847 = vunpack.c.l.b16 %v3585
        %v3848 = vunpack.c.l.b16 %v3586
        %v3849 = vunpack.c.l.b16 %v3587
        %v3850 = vunpack.c.l.b16 %v3588
        %v3851 = vpack.c.b16 %v3846, %v3845
        %v3852 = vpack.c.b16 %v3848, %v3847
        %v3853 = vpack.c.b16 %v3850, %v3849
        %v3858 = vsel %vm3073, %v3567, 0
        %v3861 = vsel %vm3073, %v3568, 0
        %v3864 = vsel %vm3073, %v3569, 0
        %v3867 = vsel %vm3073, %v3570, 0
        %v3870 = vsel %vm3073, %v3571, 0
        %v3873 = vsel %vm3073, %v3572, 0
        %v3876 = vsel %vm3073, %v3573, 0
        %v3879 = vsel %vm3073, %v3574, 0
        %v3882 = vsel %vm3073, %v3575, 0
        %v3885 = vsel %vm3073, %v3576, 0
        %v3888 = vsel %vm3073, %v3577, 0
        %v3891 = vsel %vm3073, %v3578, 0
        %v3894 = vsel %vm3073, %v3579, 0
        %v3897 = vsel %vm3073, %v3580, 0
        %v3900 = vsel %vm3073, %v3581, 0
        %v3903 = vsel %vm3073, %v3582, 0
        %3905 = vmatprep.subr.bf16.mxu0 0
        %3906 = vmatpush1.bf16.msra.mxu0 %v3851
        %3907 = vmatprep.subr.bf16.mxu0 0
        %3908 = vmatpush1.bf16.msra.mxu0 %v3852
        %3909 = vmatprep.subr.bf16.mxu0 0
        %3910 = vmatpush1.bf16.msra.mxu0 %v3853
        %3911 = vmatprep.subr.bf16.mxu0 0
        %3912 = vmatpush1.bf16.msra.mxu0 0
        %3913 = vmatprep.subr.bf16.mxu0 0
        %3914 = vmatpush1.bf16.msra.mxu0 0
        %3915 = vmatprep.subr.bf16.mxu0 0
        %3916 = vmatpush1.bf16.msra.mxu0 0
        %3917 = vmatprep.subr.bf16.mxu0 0
        %3918 = vmatpush1.bf16.msra.mxu0 0
        %3919 = vmatprep.subr.bf16.mxu0 0
        %3920 = vmatpush1.bf16.msra.mxu0 0
        %3921 = vmatprep.subr.bf16.mxu0 0
        %3922 = vmatpush1.bf16.msra.mxu0 0
        %3923 = vmatprep.subr.bf16.mxu0 0
        %3924 = vmatpush1.bf16.msra.mxu0 0
        %3925 = vmatprep.subr.bf16.mxu0 0
        %3926 = vmatpush1.bf16.msra.mxu0 0
        %3927 = vmatprep.subr.bf16.mxu0 0
        %3928 = vmatpush1.bf16.msra.mxu0 0
        %3929 = vmatprep.subr.bf16.mxu0 0
        %3930 = vmatpush1.bf16.msra.mxu0 0
        %3931 = vmatprep.subr.bf16.mxu0 0
        %3932 = vmatpush1.bf16.msra.mxu0 0
        %3933 = vmatprep.subr.bf16.mxu0 0
        %3934 = vmatpush1.bf16.msra.mxu0 0
        %3935 = vmatprep.subr.bf16.mxu0 0
        %3936 = vmatpush1.bf16.msra.mxu0 0
        %3937 = vmatprep.mubr.bf16.mxu0 0
        %3938 = vmatmul.mubr.bf16.gmra.mrb[0].mxu0 %v3858
        %v3939 = vpop.f32.mrb[0].mxu0
        %v3940 = vadd.f32 %v3713, %v3939
        %v3941 = vpop.f32.mrb[0].mxu0
        %v3942 = vpop.f32.mrb[0].mxu0
        %v3943 = vadd.f32 %v3716, %v3942
        %v3944 = vpop.f32.mrb[0].mxu0
        %3945 = vmatprep.mubr.bf16.mxu0 0
        %3946 = vmatmul.mubr.bf16.gmra.mrb[0].mxu0 %v3861
        %v3947 = vpop.f32.mrb[0].mxu0
        %v3948 = vadd.f32 %v3721, %v3947
        %v3949 = vpop.f32.mrb[0].mxu0
        %v3950 = vpop.f32.mrb[0].mxu0
        %v3951 = vadd.f32 %v3724, %v3950
        %v3952 = vpop.f32.mrb[0].mxu0
        %3953 = vmatprep.mubr.bf16.mxu0 0
        %3954 = vmatmul.mubr.bf16.gmra.mrb[0].mxu0 %v3864
        %v3955 = vpop.f32.mrb[0].mxu0
        %v3956 = vadd.f32 %v3729, %v3955
        %v3957 = vpop.f32.mrb[0].mxu0
        %v3958 = vpop.f32.mrb[0].mxu0
        %v3959 = vadd.f32 %v3732, %v3958
        %v3960 = vpop.f32.mrb[0].mxu0
        %3961 = vmatprep.mubr.bf16.mxu0 0
        %3962 = vmatmul.mubr.bf16.gmra.mrb[0].mxu0 %v3867
        %v3963 = vpop.f32.mrb[0].mxu0
        %v3964 = vadd.f32 %v3737, %v3963
        %v3965 = vpop.f32.mrb[0].mxu0
        %v3966 = vpop.f32.mrb[0].mxu0
        %v3967 = vadd.f32 %v3740, %v3966
        %v3968 = vpop.f32.mrb[0].mxu0
        %3969 = vmatprep.mubr.bf16.mxu0 0
        %3970 = vmatmul.mubr.bf16.gmra.mrb[0].mxu0 %v3870
        %v3971 = vpop.f32.mrb[0].mxu0
        %v3972 = vadd.f32 %v3745, %v3971
        %v3973 = vpop.f32.mrb[0].mxu0
        %v3974 = vpop.f32.mrb[0].mxu0
        %v3975 = vadd.f32 %v3748, %v3974
        %v3976 = vpop.f32.mrb[0].mxu0
        %3977 = vmatprep.mubr.bf16.mxu0 0
        %3978 = vmatmul.mubr.bf16.gmra.mrb[0].mxu0 %v3873
        %v3979 = vpop.f32.mrb[0].mxu0
        %v3980 = vadd.f32 %v3753, %v3979
        %v3981 = vpop.f32.mrb[0].mxu0
        %v3982 = vpop.f32.mrb[0].mxu0
        %v3983 = vadd.f32 %v3756, %v3982
        %v3984 = vpop.f32.mrb[0].mxu0
        %3985 = vmatprep.mubr.bf16.mxu0 0
        %3986 = vmatmul.mubr.bf16.gmra.mrb[0].mxu0 %v3876
        %v3987 = vpop.f32.mrb[0].mxu0
        %v3988 = vadd.f32 %v3761, %v3987
        %v3989 = vpop.f32.mrb[0].mxu0
        %v3990 = vpop.f32.mrb[0].mxu0
        %v3991 = vadd.f32 %v3764, %v3990
        %v3992 = vpop.f32.mrb[0].mxu0
        %3993 = vmatprep.mubr.bf16.mxu0 0
        %3994 = vmatmul.mubr.bf16.gmra.mrb[0].mxu0 %v3879
        %v3995 = vpop.f32.mrb[0].mxu0
        %v3996 = vadd.f32 %v3769, %v3995
        %v3997 = vpop.f32.mrb[0].mxu0
        %v3998 = vpop.f32.mrb[0].mxu0
        %v3999 = vadd.f32 %v3772, %v3998
        %v4000 = vpop.f32.mrb[0].mxu0
        %4001 = vmatprep.mubr.bf16.mxu0 0
        %4002 = vmatmul.mubr.bf16.gmra.mrb[0].mxu0 %v3882
        %v4003 = vpop.f32.mrb[0].mxu0
        %v4004 = vadd.f32 %v3777, %v4003
        %v4005 = vpop.f32.mrb[0].mxu0
        %v4006 = vpop.f32.mrb[0].mxu0
        %v4007 = vadd.f32 %v3780, %v4006
        %v4008 = vpop.f32.mrb[0].mxu0
        %4009 = vmatprep.mubr.bf16.mxu0 0
        %4010 = vmatmul.mubr.bf16.gmra.mrb[0].mxu0 %v3885
        %v4011 = vpop.f32.mrb[0].mxu0
        %v4012 = vadd.f32 %v3785, %v4011
        %v4013 = vpop.f32.mrb[0].mxu0
        %v4014 = vpop.f32.mrb[0].mxu0
        %v4015 = vadd.f32 %v3788, %v4014
        %v4016 = vpop.f32.mrb[0].mxu0
        %4017 = vmatprep.mubr.bf16.mxu0 0
        %4018 = vmatmul.mubr.bf16.gmra.mrb[0].mxu0 %v3888
        %v4019 = vpop.f32.mrb[0].mxu0
        %v4020 = vadd.f32 %v3793, %v4019
        %v4021 = vpop.f32.mrb[0].mxu0
        %v4022 = vpop.f32.mrb[0].mxu0
        %v4023 = vadd.f32 %v3796, %v4022
        %v4024 = vpop.f32.mrb[0].mxu0
        %4025 = vmatprep.mubr.bf16.mxu0 0
        %4026 = vmatmul.mubr.bf16.gmra.mrb[0].mxu0 %v3891
        %v4027 = vpop.f32.mrb[0].mxu0
        %v4028 = vadd.f32 %v3801, %v4027
        %v4029 = vpop.f32.mrb[0].mxu0
        %v4030 = vpop.f32.mrb[0].mxu0
        %v4031 = vadd.f32 %v3804, %v4030
        %v4032 = vpop.f32.mrb[0].mxu0
        %4033 = vmatprep.mubr.bf16.mxu0 0
        %4034 = vmatmul.mubr.bf16.gmra.mrb[0].mxu0 %v3894
        %v4035 = vpop.f32.mrb[0].mxu0
        %v4036 = vadd.f32 %v3809, %v4035
        %v4037 = vpop.f32.mrb[0].mxu0
        %v4038 = vpop.f32.mrb[0].mxu0
        %v4039 = vadd.f32 %v3812, %v4038
        %v4040 = vpop.f32.mrb[0].mxu0
        %4041 = vmatprep.mubr.bf16.mxu0 0
        %4042 = vmatmul.mubr.bf16.gmra.mrb[0].mxu0 %v3897
        %v4043 = vpop.f32.mrb[0].mxu0
        %v4044 = vadd.f32 %v3817, %v4043
        %v4045 = vpop.f32.mrb[0].mxu0
        %v4046 = vpop.f32.mrb[0].mxu0
        %v4047 = vadd.f32 %v3820, %v4046
        %v4048 = vpop.f32.mrb[0].mxu0
        %4049 = vmatprep.mubr.bf16.mxu0 0
        %4050 = vmatmul.mubr.bf16.gmra.mrb[0].mxu0 %v3900
        %v4051 = vpop.f32.mrb[0].mxu0
        %v4052 = vadd.f32 %v3825, %v4051
        %v4053 = vpop.f32.mrb[0].mxu0
        %v4054 = vpop.f32.mrb[0].mxu0
        %v4055 = vadd.f32 %v3828, %v4054
        %v4056 = vpop.f32.mrb[0].mxu0
        %4057 = vmatprep.mubr.bf16.mxu0 0
        %4058 = vmatmul.mubr.bf16.gmra.mrb[0].mxu0 %v3903
        %v4059 = vpop.f32.mrb[0].mxu0
        %v4060 = vadd.f32 %v3833, %v4059
        %v4061 = vpop.f32.mrb[0].mxu0
        %v4062 = vpop.f32.mrb[0].mxu0
        %v4063 = vadd.f32 %v3836, %v4062
        %v4064 = vpop.f32.mrb[0].mxu0
        %4065 = vdwg.mxu0
        %s4066 = scalar_lea.vmem [#allocation3], 16
        %v4067 = vld [vmem:[%s4066] sm:$0xff]
        %v4068 = vld [vmem:[%s4066 + $0x8] sm:$0xff]
        %v4069 = vld [vmem:[%s4066 + $0x10] sm:$0xff]
        %v4070 = vld [vmem:[%s4066 + $0x18] sm:$0xff]
        %v4071 = vld [vmem:[%s4066 + $0x20] sm:$0xff]
        %v4072 = vld [vmem:[%s4066 + $0x28] sm:$0xff]
        %v4073 = vld [vmem:[%s4066 + $0x30] sm:$0xff]
        %v4074 = vld [vmem:[%s4066 + $0x38] sm:$0xff]
        %v4075 = vld [vmem:[%s4066 + $0x40] sm:$0xff]
        %v4076 = vld [vmem:[%s4066 + $0x48] sm:$0xff]
        %v4077 = vld [vmem:[%s4066 + $0x50] sm:$0xff]
        %v4078 = vld [vmem:[%s4066 + $0x58] sm:$0xff]
        %v4079 = vld [vmem:[%s4066 + $0x60] sm:$0xff]
        %v4080 = vld [vmem:[%s4066 + $0x68] sm:$0xff]
        %v4081 = vld [vmem:[%s4066 + $0x70] sm:$0xff]
        %v4082 = vld [vmem:[%s4066 + $0x78] sm:$0xff]
        %s4083 = scalar_lea.vmem %s6, 48
        %v4084 = vld [vmem:[%s4083] sm:$0xf]
        %v4085 = vld [vmem:[%s4083 + $0x4] sm:$0xf]
        %v4086 = vld [vmem:[%s4083 + $0x8] sm:$0xf]
        %v4087 = vld [vmem:[%s4083 + $0xc] sm:$0xf]
        %v4088 = vld [vmem:[%s4083 + $0x10] sm:$0xf]
        %v4089 = vld [vmem:[%s4083 + $0x14] sm:$0xf]
        %v4096 = vunpack.c.l.b16 %v4084
        %v4097 = vunpack.c.l.b16 %v4085
        %v4098 = vunpack.c.l.b16 %v4086
        %v4099 = vunpack.c.l.b16 %v4087
        %v4100 = vunpack.c.l.b16 %v4088
        %v4101 = vunpack.c.l.b16 %v4089
        %v4102 = vpack.c.b16 %v4097, %v4096
        %v4103 = vpack.c.b16 %v4099, %v4098
        %v4104 = vpack.c.b16 %v4101, %v4100
        %v4109 = vsel %vm3073, %v4067, 0
        %v4112 = vsel %vm3073, %v4068, 0
        %v4115 = vsel %vm3073, %v4069, 0
        %v4118 = vsel %vm3073, %v4070, 0
        %v4121 = vsel %vm3073, %v4071, 0
        %v4124 = vsel %vm3073, %v4072, 0
        %v4127 = vsel %vm3073, %v4073, 0
        %v4130 = vsel %vm3073, %v4074, 0
        %v4133 = vsel %vm3073, %v4075, 0
        %v4136 = vsel %vm3073, %v4076, 0
        %v4139 = vsel %vm3073, %v4077, 0
        %v4142 = vsel %vm3073, %v4078, 0
        %v4145 = vsel %vm3073, %v4079, 0
        %v4148 = vsel %vm3073, %v4080, 0
        %v4151 = vsel %vm3073, %v4081, 0
        %v4154 = vsel %vm3073, %v4082, 0
        %4156 = vmatprep.subr.bf16.mxu0 0
        %4157 = vmatpush1.bf16.msra.mxu0 %v4102
        %4158 = vmatprep.subr.bf16.mxu0 0
        %4159 = vmatpush1.bf16.msra.mxu0 %v4103
        %4160 = vmatprep.subr.bf16.mxu0 0
        %4161 = vmatpush1.bf16.msra.mxu0 %v4104
        %4162 = vmatprep.subr.bf16.mxu0 0
        %4163 = vmatpush1.bf16.msra.mxu0 0
        %4164 = vmatprep.subr.bf16.mxu0 0
        %4165 = vmatpush1.bf16.msra.mxu0 0
        %4166 = vmatprep.subr.bf16.mxu0 0
        %4167 = vmatpush1.bf16.msra.mxu0 0
        %4168 = vmatprep.subr.bf16.mxu0 0
        %4169 = vmatpush1.bf16.msra.mxu0 0
        %4170 = vmatprep.subr.bf16.mxu0 0
        %4171 = vmatpush1.bf16.msra.mxu0 0
        %4172 = vmatprep.subr.bf16.mxu0 0
        %4173 = vmatpush1.bf16.msra.mxu0 0
        %4174 = vmatprep.subr.bf16.mxu0 0
        %4175 = vmatpush1.bf16.msra.mxu0 0
        %4176 = vmatprep.subr.bf16.mxu0 0
        %4177 = vmatpush1.bf16.msra.mxu0 0
        %4178 = vmatprep.subr.bf16.mxu0 0
        %4179 = vmatpush1.bf16.msra.mxu0 0
        %4180 = vmatprep.subr.bf16.mxu0 0
        %4181 = vmatpush1.bf16.msra.mxu0 0
        %4182 = vmatprep.subr.bf16.mxu0 0
        %4183 = vmatpush1.bf16.msra.mxu0 0
        %4184 = vmatprep.subr.bf16.mxu0 0
        %4185 = vmatpush1.bf16.msra.mxu0 0
        %4186 = vmatprep.subr.bf16.mxu0 0
        %4187 = vmatpush1.bf16.msra.mxu0 0
        %4188 = vmatprep.mubr.bf16.mxu0 0
        %4189 = vmatmul.mubr.bf16.gmra.mrb[0].mxu0 %v4109
        %v4190 = vpop.f32.mrb[0].mxu0
        %v4191 = vadd.f32 0.0, %v4190
        %v4192 = vpop.f32.mrb[0].mxu0
        %v4193 = vpop.f32.mrb[0].mxu0
        %v4194 = vadd.f32 0.0, %v4193
        %v4195 = vpop.f32.mrb[0].mxu0
        %4196 = vmatprep.mubr.bf16.mxu0 0
        %4197 = vmatmul.mubr.bf16.gmra.mrb[0].mxu0 %v4112
        %v4198 = vpop.f32.mrb[0].mxu0
        %v4199 = vadd.f32 0.0, %v4198
        %v4200 = vpop.f32.mrb[0].mxu0
        %v4201 = vpop.f32.mrb[0].mxu0
        %v4202 = vadd.f32 0.0, %v4201
        %v4203 = vpop.f32.mrb[0].mxu0
        %4204 = vmatprep.mubr.bf16.mxu0 0
        %4205 = vmatmul.mubr.bf16.gmra.mrb[0].mxu0 %v4115
        %v4206 = vpop.f32.mrb[0].mxu0
        %v4207 = vadd.f32 0.0, %v4206
        %v4208 = vpop.f32.mrb[0].mxu0
        %v4209 = vpop.f32.mrb[0].mxu0
        %v4210 = vadd.f32 0.0, %v4209
        %v4211 = vpop.f32.mrb[0].mxu0
        %4212 = vmatprep.mubr.bf16.mxu0 0
        %4213 = vmatmul.mubr.bf16.gmra.mrb[0].mxu0 %v4118
        %v4214 = vpop.f32.mrb[0].mxu0
        %v4215 = vadd.f32 0.0, %v4214
        %v4216 = vpop.f32.mrb[0].mxu0
        %v4217 = vpop.f32.mrb[0].mxu0
        %v4218 = vadd.f32 0.0, %v4217
        %v4219 = vpop.f32.mrb[0].mxu0
        %4220 = vmatprep.mubr.bf16.mxu0 0
        %4221 = vmatmul.mubr.bf16.gmra.mrb[0].mxu0 %v4121
        %v4222 = vpop.f32.mrb[0].mxu0
        %v4223 = vadd.f32 0.0, %v4222
        %v4224 = vpop.f32.mrb[0].mxu0
        %v4225 = vpop.f32.mrb[0].mxu0
        %v4226 = vadd.f32 0.0, %v4225
        %v4227 = vpop.f32.mrb[0].mxu0
        %4228 = vmatprep.mubr.bf16.mxu0 0
        %4229 = vmatmul.mubr.bf16.gmra.mrb[0].mxu0 %v4124
        %v4230 = vpop.f32.mrb[0].mxu0
        %v4231 = vadd.f32 0.0, %v4230
        %v4232 = vpop.f32.mrb[0].mxu0
        %v4233 = vpop.f32.mrb[0].mxu0
        %v4234 = vadd.f32 0.0, %v4233
        %v4235 = vpop.f32.mrb[0].mxu0
        %4236 = vmatprep.mubr.bf16.mxu0 0
        %4237 = vmatmul.mubr.bf16.gmra.mrb[0].mxu0 %v4127
        %v4238 = vpop.f32.mrb[0].mxu0
        %v4239 = vadd.f32 0.0, %v4238
        %v4240 = vpop.f32.mrb[0].mxu0
        %v4241 = vpop.f32.mrb[0].mxu0
        %v4242 = vadd.f32 0.0, %v4241
        %v4243 = vpop.f32.mrb[0].mxu0
        %4244 = vmatprep.mubr.bf16.mxu0 0
        %4245 = vmatmul.mubr.bf16.gmra.mrb[0].mxu0 %v4130
        %v4246 = vpop.f32.mrb[0].mxu0
        %v4247 = vadd.f32 0.0, %v4246
        %v4248 = vpop.f32.mrb[0].mxu0
        %v4249 = vpop.f32.mrb[0].mxu0
        %v4250 = vadd.f32 0.0, %v4249
        %v4251 = vpop.f32.mrb[0].mxu0
        %4252 = vmatprep.mubr.bf16.mxu0 0
        %4253 = vmatmul.mubr.bf16.gmra.mrb[0].mxu0 %v4133
        %v4254 = vpop.f32.mrb[0].mxu0
        %v4255 = vadd.f32 0.0, %v4254
        %v4256 = vpop.f32.mrb[0].mxu0
        %v4257 = vpop.f32.mrb[0].mxu0
        %v4258 = vadd.f32 0.0, %v4257
        %v4259 = vpop.f32.mrb[0].mxu0
        %4260 = vmatprep.mubr.bf16.mxu0 0
        %4261 = vmatmul.mubr.bf16.gmra.mrb[0].mxu0 %v4136
        %v4262 = vpop.f32.mrb[0].mxu0
        %v4263 = vadd.f32 0.0, %v4262
        %v4264 = vpop.f32.mrb[0].mxu0
        %v4265 = vpop.f32.mrb[0].mxu0
        %v4266 = vadd.f32 0.0, %v4265
        %v4267 = vpop.f32.mrb[0].mxu0
        %4268 = vmatprep.mubr.bf16.mxu0 0
        %4269 = vmatmul.mubr.bf16.gmra.mrb[0].mxu0 %v4139
        %v4270 = vpop.f32.mrb[0].mxu0
        %v4271 = vadd.f32 0.0, %v4270
        %v4272 = vpop.f32.mrb[0].mxu0
        %v4273 = vpop.f32.mrb[0].mxu0
        %v4274 = vadd.f32 0.0, %v4273
        %v4275 = vpop.f32.mrb[0].mxu0
        %4276 = vmatprep.mubr.bf16.mxu0 0
        %4277 = vmatmul.mubr.bf16.gmra.mrb[0].mxu0 %v4142
        %v4278 = vpop.f32.mrb[0].mxu0
        %v4279 = vadd.f32 0.0, %v4278
        %v4280 = vpop.f32.mrb[0].mxu0
        %v4281 = vpop.f32.mrb[0].mxu0
        %v4282 = vadd.f32 0.0, %v4281
        %v4283 = vpop.f32.mrb[0].mxu0
        %4284 = vmatprep.mubr.bf16.mxu0 0
        %4285 = vmatmul.mubr.bf16.gmra.mrb[0].mxu0 %v4145
        %v4286 = vpop.f32.mrb[0].mxu0
        %v4287 = vadd.f32 0.0, %v4286
        %v4288 = vpop.f32.mrb[0].mxu0
        %v4289 = vpop.f32.mrb[0].mxu0
        %v4290 = vadd.f32 0.0, %v4289
        %v4291 = vpop.f32.mrb[0].mxu0
        %4292 = vmatprep.mubr.bf16.mxu0 0
        %4293 = vmatmul.mubr.bf16.gmra.mrb[0].mxu0 %v4148
        %v4294 = vpop.f32.mrb[0].mxu0
        %v4295 = vadd.f32 0.0, %v4294
        %v4296 = vpop.f32.mrb[0].mxu0
        %v4297 = vpop.f32.mrb[0].mxu0
        %v4298 = vadd.f32 0.0, %v4297
        %v4299 = vpop.f32.mrb[0].mxu0
        %4300 = vmatprep.mubr.bf16.mxu0 0
        %4301 = vmatmul.mubr.bf16.gmra.mrb[0].mxu0 %v4151
        %v4302 = vpop.f32.mrb[0].mxu0
        %v4303 = vadd.f32 0.0, %v4302
        %v4304 = vpop.f32.mrb[0].mxu0
        %v4305 = vpop.f32.mrb[0].mxu0
        %v4306 = vadd.f32 0.0, %v4305
        %v4307 = vpop.f32.mrb[0].mxu0
        %4308 = vmatprep.mubr.bf16.mxu0 0
        %4309 = vmatmul.mubr.bf16.gmra.mrb[0].mxu0 %v4154
        %v4310 = vpop.f32.mrb[0].mxu0
        %v4311 = vadd.f32 0.0, %v4310
        %v4312 = vpop.f32.mrb[0].mxu0
        %v4313 = vpop.f32.mrb[0].mxu0
        %v4314 = vadd.f32 0.0, %v4313
        %v4315 = vpop.f32.mrb[0].mxu0
        %4316 = vdwg.mxu0
        %v4317 = vadd.f32 %v3940, %v4191
        %v4318 = vadd.f32 %v3943, %v4194
        %v4319 = vadd.f32 %v3948, %v4199
        %v4320 = vadd.f32 %v3951, %v4202
        %v4321 = vadd.f32 %v3956, %v4207
        %v4322 = vadd.f32 %v3959, %v4210
        %v4323 = vadd.f32 %v3964, %v4215
        %v4324 = vadd.f32 %v3967, %v4218
        %v4325 = vadd.f32 %v3972, %v4223
        %v4326 = vadd.f32 %v3975, %v4226
        %v4327 = vadd.f32 %v3980, %v4231
        %v4328 = vadd.f32 %v3983, %v4234
        %v4329 = vadd.f32 %v3988, %v4239
        %v4330 = vadd.f32 %v3991, %v4242
        %v4331 = vadd.f32 %v3996, %v4247
        %v4332 = vadd.f32 %v3999, %v4250
        %v4333 = vadd.f32 %v4004, %v4255
        %v4334 = vadd.f32 %v4007, %v4258
        %v4335 = vadd.f32 %v4012, %v4263
        %v4336 = vadd.f32 %v4015, %v4266
        %v4337 = vadd.f32 %v4020, %v4271
        %v4338 = vadd.f32 %v4023, %v4274
        %v4339 = vadd.f32 %v4028, %v4279
        %v4340 = vadd.f32 %v4031, %v4282
        %v4341 = vadd.f32 %v4036, %v4287
        %v4342 = vadd.f32 %v4039, %v4290
        %v4343 = vadd.f32 %v4044, %v4295
        %v4344 = vadd.f32 %v4047, %v4298
        %v4345 = vadd.f32 %v4052, %v4303
        %v4346 = vadd.f32 %v4055, %v4306
        %v4347 = vadd.f32 %v4060, %v4311
        %v4348 = vadd.f32 %v4063, %v4314
        %v4349 = vld [vmem:[%s7] sm:$0x1]
        %v4351 = vlaneseq
        %v4352 = vshrl.u32 %v4351, 7
        %v4353 = vsub.s32 0, %v4352
        %v4354 = vrot.slane %v4349, %v4353
        %v4356 = vadd.f32 %v4317, %v4354
        %v4357 = vadd.f32 %v4318, %v4354
        %v4358 = vadd.f32 %v4319, %v4354
        %v4359 = vadd.f32 %v4320, %v4354
        %v4360 = vadd.f32 %v4321, %v4354
        %v4361 = vadd.f32 %v4322, %v4354
        %v4362 = vadd.f32 %v4323, %v4354
        %v4363 = vadd.f32 %v4324, %v4354
        %v4364 = vadd.f32 %v4325, %v4354
        %v4365 = vadd.f32 %v4326, %v4354
        %v4366 = vadd.f32 %v4327, %v4354
        %v4367 = vadd.f32 %v4328, %v4354
        %v4368 = vadd.f32 %v4329, %v4354
        %v4369 = vadd.f32 %v4330, %v4354
        %v4370 = vadd.f32 %v4331, %v4354
        %v4371 = vadd.f32 %v4332, %v4354
        %v4372 = vadd.f32 %v4333, %v4354
        %v4373 = vadd.f32 %v4334, %v4354
        %v4374 = vadd.f32 %v4335, %v4354
        %v4375 = vadd.f32 %v4336, %v4354
        %v4376 = vadd.f32 %v4337, %v4354
        %v4377 = vadd.f32 %v4338, %v4354
        %v4378 = vadd.f32 %v4339, %v4354
        %v4379 = vadd.f32 %v4340, %v4354
        %v4380 = vadd.f32 %v4341, %v4354
        %v4381 = vadd.f32 %v4342, %v4354
        %v4382 = vadd.f32 %v4343, %v4354
        %v4383 = vadd.f32 %v4344, %v4354
        %v4384 = vadd.f32 %v4345, %v4354
        %v4385 = vadd.f32 %v4346, %v4354
        %v4386 = vadd.f32 %v4347, %v4354
        %v4387 = vadd.f32 %v4348, %v4354
        %v4388 = vld [vmem:[%s16] sm:$0xff]
        %v4389 = vld [vmem:[%s16 + $0x8] sm:$0xff]
        %v4390 = vsel %vm2389, %v4356, 0.0
        %v4391 = vsel %vm2389, %v4357, 0.0
        %v4392 = vadd.f32 %v4390, %v4391
        %v4393 = vsel %vm2389, %v4358, 0.0
        %v4394 = vadd.f32 %v4392, %v4393
        %v4395 = vsel %vm2389, %v4359, 0.0
        %v4396 = vadd.f32 %v4394, %v4395
        %v4397 = vsel %vm2389, %v4360, 0.0
        %v4398 = vadd.f32 %v4396, %v4397
        %v4399 = vsel %vm2389, %v4361, 0.0
        %v4400 = vadd.f32 %v4398, %v4399
        %v4401 = vsel %vm2389, %v4362, 0.0
        %v4402 = vadd.f32 %v4400, %v4401
        %v4403 = vsel %vm2389, %v4363, 0.0
        %v4404 = vadd.f32 %v4402, %v4403
        %v4405 = vsel %vm2389, %v4364, 0.0
        %v4406 = vadd.f32 %v4404, %v4405
        %v4407 = vsel %vm2389, %v4365, 0.0
        %v4408 = vadd.f32 %v4406, %v4407
        %v4409 = vsel %vm2389, %v4366, 0.0
        %v4410 = vadd.f32 %v4408, %v4409
        %v4411 = vsel %vm2389, %v4367, 0.0
        %v4412 = vadd.f32 %v4410, %v4411
        %v4413 = vsel %vm2389, %v4368, 0.0
        %v4414 = vadd.f32 %v4412, %v4413
        %v4415 = vsel %vm2389, %v4369, 0.0
        %v4416 = vadd.f32 %v4414, %v4415
        %v4417 = vsel %vm2389, %v4370, 0.0
        %v4418 = vadd.f32 %v4416, %v4417
        %v4419 = vsel %vm2389, %v4371, 0.0
        %v4420 = vadd.f32 %v4418, %v4419
        %v4421 = vsel %vm2389, %v4372, 0.0
        %v4422 = vadd.f32 %v4420, %v4421
        %v4423 = vsel %vm2389, %v4373, 0.0
        %v4424 = vadd.f32 %v4422, %v4423
        %v4425 = vsel %vm2389, %v4374, 0.0
        %v4426 = vadd.f32 %v4424, %v4425
        %v4427 = vsel %vm2389, %v4375, 0.0
        %v4428 = vadd.f32 %v4426, %v4427
        %v4429 = vsel %vm2389, %v4376, 0.0
        %v4430 = vadd.f32 %v4428, %v4429
        %v4431 = vsel %vm2389, %v4377, 0.0
        %v4432 = vadd.f32 %v4430, %v4431
        %v4433 = vsel %vm2389, %v4378, 0.0
        %v4434 = vadd.f32 %v4432, %v4433
        %v4435 = vsel %vm2389, %v4379, 0.0
        %v4436 = vadd.f32 %v4434, %v4435
        %v4437 = vsel %vm2389, %v4380, 0.0
        %v4438 = vadd.f32 %v4436, %v4437
        %v4439 = vsel %vm2389, %v4381, 0.0
        %v4440 = vadd.f32 %v4438, %v4439
        %v4441 = vsel %vm2389, %v4382, 0.0
        %v4442 = vadd.f32 %v4440, %v4441
        %v4443 = vsel %vm2389, %v4383, 0.0
        %v4444 = vadd.f32 %v4442, %v4443
        %v4445 = vsel %vm2389, %v4384, 0.0
        %v4446 = vadd.f32 %v4444, %v4445
        %v4447 = vsel %vm2389, %v4385, 0.0
        %v4448 = vadd.f32 %v4446, %v4447
        %v4449 = vsel %vm2389, %v4386, 0.0
        %v4450 = vadd.f32 %v4448, %v4449
        %v4451 = vsel %vm2389, %v4387, 0.0
        %v4452 = vadd.f32 %v4450, %v4451
        %v4453 = vrot.slane %v4452, 4
        %v4454 = vadd.f32 %v4452, %v4453
        %v4455 = vrot.slane %v4454, 2
        %v4456 = vadd.f32 %v4454, %v4455
        %v4457 = vrot.slane %v4456, 1
        %v4458 = vadd.f32 %v4456, %v4457
        %v4460 = vsel %vm2389, %v4458, 0
        %4462 = vmatprep.subr.mxu0 0.0
        %4463 = vmatpush1.msra.mxu0 %v4388
        %4464 = vmatprep.subr.mxu0 0.0
        %4465 = vmatpush1.msra.mxu0 %v4389
        %4466 = vmatprep.subr.mxu0 0.0
        %4467 = vmatpush1.msra.mxu0 0.0
        %4468 = vmatprep.subr.mxu0 0.0
        %4469 = vmatpush1.msra.mxu0 0.0
        %4470 = vmatprep.subr.mxu0 0.0
        %4471 = vmatpush1.msra.mxu0 0.0
        %4472 = vmatprep.subr.mxu0 0.0
        %4473 = vmatpush1.msra.mxu0 0.0
        %4474 = vmatprep.subr.mxu0 0.0
        %4475 = vmatpush1.msra.mxu0 0.0
        %4476 = vmatprep.subr.mxu0 0.0
        %4477 = vmatpush1.msra.mxu0 0.0
        %4478 = vmatprep.subr.mxu0 0.0
        %4479 = vmatpush1.msra.mxu0 0.0
        %4480 = vmatprep.subr.mxu0 0.0
        %4481 = vmatpush1.msra.mxu0 0.0
        %4482 = vmatprep.subr.mxu0 0.0
        %4483 = vmatpush1.msra.mxu0 0.0
        %4484 = vmatprep.subr.mxu0 0.0
        %4485 = vmatpush1.msra.mxu0 0.0
        %4486 = vmatprep.subr.mxu0 0.0
        %4487 = vmatpush1.msra.mxu0 0.0
        %4488 = vmatprep.subr.mxu0 0.0
        %4489 = vmatpush1.msra.mxu0 0.0
        %4490 = vmatprep.subr.mxu0 0.0
        %4491 = vmatpush1.msra.mxu0 0.0
        %4492 = vmatprep.subr.mxu0 0.0
        %4493 = vmatpush1.msra.mxu0 0.0
        %4494 = vmatprep.subr.mxu0 0.0
        %4495 = vmatpush1.msra.mxu0 0.0
        %4496 = vmatprep.subr.mxu0 0.0
        %4497 = vmatpush1.msra.mxu0 0.0
        %4498 = vmatprep.subr.mxu0 0.0
        %4499 = vmatpush1.msra.mxu0 0.0
        %4500 = vmatprep.subr.mxu0 0.0
        %4501 = vmatpush1.msra.mxu0 0.0
        %4502 = vmatprep.subr.mxu0 0.0
        %4503 = vmatpush1.msra.mxu0 0.0
        %4504 = vmatprep.subr.mxu0 0.0
        %4505 = vmatpush1.msra.mxu0 0.0
        %4506 = vmatprep.subr.mxu0 0.0
        %4507 = vmatpush1.msra.mxu0 0.0
        %4508 = vmatprep.subr.mxu0 0.0
        %4509 = vmatpush1.msra.mxu0 0.0
        %4510 = vmatprep.subr.mxu0 0.0
        %4511 = vmatpush1.msra.mxu0 0.0
        %4512 = vmatprep.subr.mxu0 0.0
        %4513 = vmatpush1.msra.mxu0 0.0
        %4514 = vmatprep.subr.mxu0 0.0
        %4515 = vmatpush1.msra.mxu0 0.0
        %4516 = vmatprep.subr.mxu0 0.0
        %4517 = vmatpush1.msra.mxu0 0.0
        %4518 = vmatprep.subr.mxu0 0.0
        %4519 = vmatpush1.msra.mxu0 0.0
        %4520 = vmatprep.subr.mxu0 0.0
        %4521 = vmatpush1.msra.mxu0 0.0
        %4522 = vmatprep.subr.mxu0 0.0
        %4523 = vmatpush1.msra.mxu0 0.0
        %4524 = vmatprep.subr.mxu0 0.0
        %4525 = vmatpush1.msra.mxu0 0.0
        %4526 = vmatprep.mubr.f32.mxu0 0.0
        %4527 = vmatmul.mubr.f32.gmra.mrb[0].mxu0 %v4460
        %v4528 = vpop.f32.mrb[0].mxu0
        %v4529 = vadd.f32 0.0, %v4528
        %v4530 = vpop.f32.mrb[0].mxu0
        %4531 = vdwg.mxu0
        %v4532 = vmul.f32 %v4356, %v4356
        %v4533 = vmul.f32 %v4357, %v4357
        %v4534 = vmul.f32 %v4358, %v4358
        %v4535 = vmul.f32 %v4359, %v4359
        %v4536 = vmul.f32 %v4360, %v4360
        %v4537 = vmul.f32 %v4361, %v4361
        %v4538 = vmul.f32 %v4362, %v4362
        %v4539 = vmul.f32 %v4363, %v4363
        %v4540 = vmul.f32 %v4364, %v4364
        %v4541 = vmul.f32 %v4365, %v4365
        %v4542 = vmul.f32 %v4366, %v4366
        %v4543 = vmul.f32 %v4367, %v4367
        %v4544 = vmul.f32 %v4368, %v4368
        %v4545 = vmul.f32 %v4369, %v4369
        %v4546 = vmul.f32 %v4370, %v4370
        %v4547 = vmul.f32 %v4371, %v4371
        %v4548 = vmul.f32 %v4372, %v4372
        %v4549 = vmul.f32 %v4373, %v4373
        %v4550 = vmul.f32 %v4374, %v4374
        %v4551 = vmul.f32 %v4375, %v4375
        %v4552 = vmul.f32 %v4376, %v4376
        %v4553 = vmul.f32 %v4377, %v4377
        %v4554 = vmul.f32 %v4378, %v4378
        %v4555 = vmul.f32 %v4379, %v4379
        %v4556 = vmul.f32 %v4380, %v4380
        %v4557 = vmul.f32 %v4381, %v4381
        %v4558 = vmul.f32 %v4382, %v4382
        %v4559 = vmul.f32 %v4383, %v4383
        %v4560 = vmul.f32 %v4384, %v4384
        %v4561 = vmul.f32 %v4385, %v4385
        %v4562 = vmul.f32 %v4386, %v4386
        %v4563 = vmul.f32 %v4387, %v4387
        %v4564 = vsel %vm2389, %v4532, 0.0
        %v4565 = vsel %vm2389, %v4533, 0.0
        %v4566 = vadd.f32 %v4564, %v4565
        %v4567 = vsel %vm2389, %v4534, 0.0
        %v4568 = vadd.f32 %v4566, %v4567
        %v4569 = vsel %vm2389, %v4535, 0.0
        %v4570 = vadd.f32 %v4568, %v4569
        %v4571 = vsel %vm2389, %v4536, 0.0
        %v4572 = vadd.f32 %v4570, %v4571
        %v4573 = vsel %vm2389, %v4537, 0.0
        %v4574 = vadd.f32 %v4572, %v4573
        %v4575 = vsel %vm2389, %v4538, 0.0
        %v4576 = vadd.f32 %v4574, %v4575
        %v4577 = vsel %vm2389, %v4539, 0.0
        %v4578 = vadd.f32 %v4576, %v4577
        %v4579 = vsel %vm2389, %v4540, 0.0
        %v4580 = vadd.f32 %v4578, %v4579
        %v4581 = vsel %vm2389, %v4541, 0.0
        %v4582 = vadd.f32 %v4580, %v4581
        %v4583 = vsel %vm2389, %v4542, 0.0
        %v4584 = vadd.f32 %v4582, %v4583
        %v4585 = vsel %vm2389, %v4543, 0.0
        %v4586 = vadd.f32 %v4584, %v4585
        %v4587 = vsel %vm2389, %v4544, 0.0
        %v4588 = vadd.f32 %v4586, %v4587
        %v4589 = vsel %vm2389, %v4545, 0.0
        %v4590 = vadd.f32 %v4588, %v4589
        %v4591 = vsel %vm2389, %v4546, 0.0
        %v4592 = vadd.f32 %v4590, %v4591
        %v4593 = vsel %vm2389, %v4547, 0.0
        %v4594 = vadd.f32 %v4592, %v4593
        %v4595 = vsel %vm2389, %v4548, 0.0
        %v4596 = vadd.f32 %v4594, %v4595
        %v4597 = vsel %vm2389, %v4549, 0.0
        %v4598 = vadd.f32 %v4596, %v4597
        %v4599 = vsel %vm2389, %v4550, 0.0
        %v4600 = vadd.f32 %v4598, %v4599
        %v4601 = vsel %vm2389, %v4551, 0.0
        %v4602 = vadd.f32 %v4600, %v4601
        %v4603 = vsel %vm2389, %v4552, 0.0
        %v4604 = vadd.f32 %v4602, %v4603
        %v4605 = vsel %vm2389, %v4553, 0.0
        %v4606 = vadd.f32 %v4604, %v4605
        %v4607 = vsel %vm2389, %v4554, 0.0
        %v4608 = vadd.f32 %v4606, %v4607
        %v4609 = vsel %vm2389, %v4555, 0.0
        %v4610 = vadd.f32 %v4608, %v4609
        %v4611 = vsel %vm2389, %v4556, 0.0
        %v4612 = vadd.f32 %v4610, %v4611
        %v4613 = vsel %vm2389, %v4557, 0.0
        %v4614 = vadd.f32 %v4612, %v4613
        %v4615 = vsel %vm2389, %v4558, 0.0
        %v4616 = vadd.f32 %v4614, %v4615
        %v4617 = vsel %vm2389, %v4559, 0.0
        %v4618 = vadd.f32 %v4616, %v4617
        %v4619 = vsel %vm2389, %v4560, 0.0
        %v4620 = vadd.f32 %v4618, %v4619
        %v4621 = vsel %vm2389, %v4561, 0.0
        %v4622 = vadd.f32 %v4620, %v4621
        %v4623 = vsel %vm2389, %v4562, 0.0
        %v4624 = vadd.f32 %v4622, %v4623
        %v4625 = vsel %vm2389, %v4563, 0.0
        %v4626 = vadd.f32 %v4624, %v4625
        %v4627 = vrot.slane %v4626, 4
        %v4628 = vadd.f32 %v4626, %v4627
        %v4629 = vrot.slane %v4628, 2
        %v4630 = vadd.f32 %v4628, %v4629
        %v4631 = vrot.slane %v4630, 1
        %v4632 = vadd.f32 %v4630, %v4631
        %v4634 = vsel %vm2389, %v4632, 0
        %4636 = vmatprep.subr.mxu0 0.0
        %4637 = vmatpush1.msra.mxu0 %v4388
        %4638 = vmatprep.subr.mxu0 0.0
        %4639 = vmatpush1.msra.mxu0 %v4389
        %4640 = vmatprep.subr.mxu0 0.0
        %4641 = vmatpush1.msra.mxu0 0.0
        %4642 = vmatprep.subr.mxu0 0.0
        %4643 = vmatpush1.msra.mxu0 0.0
        %4644 = vmatprep.subr.mxu0 0.0
        %4645 = vmatpush1.msra.mxu0 0.0
        %4646 = vmatprep.subr.mxu0 0.0
        %4647 = vmatpush1.msra.mxu0 0.0
        %4648 = vmatprep.subr.mxu0 0.0
        %4649 = vmatpush1.msra.mxu0 0.0
        %4650 = vmatprep.subr.mxu0 0.0
        %4651 = vmatpush1.msra.mxu0 0.0
        %4652 = vmatprep.subr.mxu0 0.0
        %4653 = vmatpush1.msra.mxu0 0.0
        %4654 = vmatprep.subr.mxu0 0.0
        %4655 = vmatpush1.msra.mxu0 0.0
        %4656 = vmatprep.subr.mxu0 0.0
        %4657 = vmatpush1.msra.mxu0 0.0
        %4658 = vmatprep.subr.mxu0 0.0
        %4659 = vmatpush1.msra.mxu0 0.0
        %4660 = vmatprep.subr.mxu0 0.0
        %4661 = vmatpush1.msra.mxu0 0.0
        %4662 = vmatprep.subr.mxu0 0.0
        %4663 = vmatpush1.msra.mxu0 0.0
        %4664 = vmatprep.subr.mxu0 0.0
        %4665 = vmatpush1.msra.mxu0 0.0
        %4666 = vmatprep.subr.mxu0 0.0
        %4667 = vmatpush1.msra.mxu0 0.0
        %4668 = vmatprep.subr.mxu0 0.0
        %4669 = vmatpush1.msra.mxu0 0.0
        %4670 = vmatprep.subr.mxu0 0.0
        %4671 = vmatpush1.msra.mxu0 0.0
        %4672 = vmatprep.subr.mxu0 0.0
        %4673 = vmatpush1.msra.mxu0 0.0
        %4674 = vmatprep.subr.mxu0 0.0
        %4675 = vmatpush1.msra.mxu0 0.0
        %4676 = vmatprep.subr.mxu0 0.0
        %4677 = vmatpush1.msra.mxu0 0.0
        %4678 = vmatprep.subr.mxu0 0.0
        %4679 = vmatpush1.msra.mxu0 0.0
        %4680 = vmatprep.subr.mxu0 0.0
        %4681 = vmatpush1.msra.mxu0 0.0
        %4682 = vmatprep.subr.mxu0 0.0
        %4683 = vmatpush1.msra.mxu0 0.0
        %4684 = vmatprep.subr.mxu0 0.0
        %4685 = vmatpush1.msra.mxu0 0.0
        %4686 = vmatprep.subr.mxu0 0.0
        %4687 = vmatpush1.msra.mxu0 0.0
        %4688 = vmatprep.subr.mxu0 0.0
        %4689 = vmatpush1.msra.mxu0 0.0
        %4690 = vmatprep.subr.mxu0 0.0
        %4691 = vmatpush1.msra.mxu0 0.0
        %4692 = vmatprep.subr.mxu0 0.0
        %4693 = vmatpush1.msra.mxu0 0.0
        %4694 = vmatprep.subr.mxu0 0.0
        %4695 = vmatpush1.msra.mxu0 0.0
        %4696 = vmatprep.subr.mxu0 0.0
        %4697 = vmatpush1.msra.mxu0 0.0
        %4698 = vmatprep.subr.mxu0 0.0
        %4699 = vmatpush1.msra.mxu0 0.0
        %4700 = vmatprep.mubr.f32.mxu0 0.0
        %4701 = vmatmul.mubr.f32.gmra.mrb[0].mxu0 %v4634
        %v4702 = vpop.f32.mrb[0].mxu0
        %v4703 = vadd.f32 0.0, %v4702
        %v4704 = vpop.f32.mrb[0].mxu0
        %4705 = vdwg.mxu0
        %v4706 = vmul.f32 %v4529, %v4529
        %v4707 = vsub.f32 %v4703, %v4706
        %v4708 = vmax.f32 %v4707, 0.0
        %v4709 = vadd.f32 %v4708, 1e-05
        %v4710 = vrsqrt.pop %v4709
        %v4711 = vlaneseq
        %v4712 = vshrl.u32 %v4711, 7
        %v4713 = vsub.s32 0, %v4712
        %v4714 = vrot.slane %v4529, %v4713
        %v4715 = vsub.f32 %v4356, %v4714
        %v4716 = vsub.f32 %v4357, %v4714
        %v4717 = vsub.f32 %v4358, %v4714
        %v4718 = vsub.f32 %v4359, %v4714
        %v4719 = vsub.f32 %v4360, %v4714
        %v4720 = vsub.f32 %v4361, %v4714
        %v4721 = vsub.f32 %v4362, %v4714
        %v4722 = vsub.f32 %v4363, %v4714
        %v4723 = vsub.f32 %v4364, %v4714
        %v4724 = vsub.f32 %v4365, %v4714
        %v4725 = vsub.f32 %v4366, %v4714
        %v4726 = vsub.f32 %v4367, %v4714
        %v4727 = vsub.f32 %v4368, %v4714
        %v4728 = vsub.f32 %v4369, %v4714
        %v4729 = vsub.f32 %v4370, %v4714
        %v4730 = vsub.f32 %v4371, %v4714
        %v4731 = vsub.f32 %v4372, %v4714
        %v4732 = vsub.f32 %v4373, %v4714
        %v4733 = vsub.f32 %v4374, %v4714
        %v4734 = vsub.f32 %v4375, %v4714
        %v4735 = vsub.f32 %v4376, %v4714
        %v4736 = vsub.f32 %v4377, %v4714
        %v4737 = vsub.f32 %v4378, %v4714
        %v4738 = vsub.f32 %v4379, %v4714
        %v4739 = vsub.f32 %v4380, %v4714
        %v4740 = vsub.f32 %v4381, %v4714
        %v4741 = vsub.f32 %v4382, %v4714
        %v4742 = vsub.f32 %v4383, %v4714
        %v4743 = vsub.f32 %v4384, %v4714
        %v4744 = vsub.f32 %v4385, %v4714
        %v4745 = vsub.f32 %v4386, %v4714
        %v4746 = vsub.f32 %v4387, %v4714
        %v4747 = vld [vmem:[%s8] sm:$0x1]
        %v4748 = vmul.f32 %v4710, %v4747
        %v4749 = vlaneseq
        %v4750 = vshrl.u32 %v4749, 7
        %v4751 = vsub.s32 0, %v4750
        %v4752 = vrot.slane %v4748, %v4751
        %v4753 = vmul.f32 %v4715, %v4752
        %v4754 = vmul.f32 %v4716, %v4752
        %v4755 = vmul.f32 %v4717, %v4752
        %v4756 = vmul.f32 %v4718, %v4752
        %v4757 = vmul.f32 %v4719, %v4752
        %v4758 = vmul.f32 %v4720, %v4752
        %v4759 = vmul.f32 %v4721, %v4752
        %v4760 = vmul.f32 %v4722, %v4752
        %v4761 = vmul.f32 %v4723, %v4752
        %v4762 = vmul.f32 %v4724, %v4752
        %v4763 = vmul.f32 %v4725, %v4752
        %v4764 = vmul.f32 %v4726, %v4752
        %v4765 = vmul.f32 %v4727, %v4752
        %v4766 = vmul.f32 %v4728, %v4752
        %v4767 = vmul.f32 %v4729, %v4752
        %v4768 = vmul.f32 %v4730, %v4752
        %v4769 = vmul.f32 %v4731, %v4752
        %v4770 = vmul.f32 %v4732, %v4752
        %v4771 = vmul.f32 %v4733, %v4752
        %v4772 = vmul.f32 %v4734, %v4752
        %v4773 = vmul.f32 %v4735, %v4752
        %v4774 = vmul.f32 %v4736, %v4752
        %v4775 = vmul.f32 %v4737, %v4752
        %v4776 = vmul.f32 %v4738, %v4752
        %v4777 = vmul.f32 %v4739, %v4752
        %v4778 = vmul.f32 %v4740, %v4752
        %v4779 = vmul.f32 %v4741, %v4752
        %v4780 = vmul.f32 %v4742, %v4752
        %v4781 = vmul.f32 %v4743, %v4752
        %v4782 = vmul.f32 %v4744, %v4752
        %v4783 = vmul.f32 %v4745, %v4752
        %v4784 = vmul.f32 %v4746, %v4752
        %v4785 = vld [vmem:[%s9] sm:$0x1]
        %v4787 = vlaneseq
        %v4788 = vshrl.u32 %v4787, 7
        %v4789 = vsub.s32 0, %v4788
        %v4790 = vrot.slane %v4785, %v4789
        %v4792 = vadd.f32 %v4753, %v4790
        %v4793 = vadd.f32 %v4754, %v4790
        %v4794 = vadd.f32 %v4755, %v4790
        %v4795 = vadd.f32 %v4756, %v4790
        %v4796 = vadd.f32 %v4757, %v4790
        %v4797 = vadd.f32 %v4758, %v4790
        %v4798 = vadd.f32 %v4759, %v4790
        %v4799 = vadd.f32 %v4760, %v4790
        %v4800 = vadd.f32 %v4761, %v4790
        %v4801 = vadd.f32 %v4762, %v4790
        %v4802 = vadd.f32 %v4763, %v4790
        %v4803 = vadd.f32 %v4764, %v4790
        %v4804 = vadd.f32 %v4765, %v4790
        %v4805 = vadd.f32 %v4766, %v4790
        %v4806 = vadd.f32 %v4767, %v4790
        %v4807 = vadd.f32 %v4768, %v4790
        %v4808 = vadd.f32 %v4769, %v4790
        %v4809 = vadd.f32 %v4770, %v4790
        %v4810 = vadd.f32 %v4771, %v4790
        %v4811 = vadd.f32 %v4772, %v4790
        %v4812 = vadd.f32 %v4773, %v4790
        %v4813 = vadd.f32 %v4774, %v4790
        %v4814 = vadd.f32 %v4775, %v4790
        %v4815 = vadd.f32 %v4776, %v4790
        %v4816 = vadd.f32 %v4777, %v4790
        %v4817 = vadd.f32 %v4778, %v4790
        %v4818 = vadd.f32 %v4779, %v4790
        %v4819 = vadd.f32 %v4780, %v4790
        %v4820 = vadd.f32 %v4781, %v4790
        %v4821 = vadd.f32 %v4782, %v4790
        %v4822 = vadd.f32 %v4783, %v4790
        %v4823 = vadd.f32 %v4784, %v4790
        %v4824 = vmul.f32 %v4792, 0.5
        %v4825 = vmul.f32 %v4793, 0.5
        %v4826 = vmul.f32 %v4794, 0.5
        %v4827 = vmul.f32 %v4795, 0.5
        %v4828 = vmul.f32 %v4796, 0.5
        %v4829 = vmul.f32 %v4797, 0.5
        %v4830 = vmul.f32 %v4798, 0.5
        %v4831 = vmul.f32 %v4799, 0.5
        %v4832 = vmul.f32 %v4800, 0.5
        %v4833 = vmul.f32 %v4801, 0.5
        %v4834 = vmul.f32 %v4802, 0.5
        %v4835 = vmul.f32 %v4803, 0.5
        %v4836 = vmul.f32 %v4804, 0.5
        %v4837 = vmul.f32 %v4805, 0.5
        %v4838 = vmul.f32 %v4806, 0.5
        %v4839 = vmul.f32 %v4807, 0.5
        %v4840 = vmul.f32 %v4808, 0.5
        %v4841 = vmul.f32 %v4809, 0.5
        %v4842 = vmul.f32 %v4810, 0.5
        %v4843 = vmul.f32 %v4811, 0.5
        %v4844 = vmul.f32 %v4812, 0.5
        %v4845 = vmul.f32 %v4813, 0.5
        %v4846 = vmul.f32 %v4814, 0.5
        %v4847 = vmul.f32 %v4815, 0.5
        %v4848 = vmul.f32 %v4816, 0.5
        %v4849 = vmul.f32 %v4817, 0.5
        %v4850 = vmul.f32 %v4818, 0.5
        %v4851 = vmul.f32 %v4819, 0.5
        %v4852 = vmul.f32 %v4820, 0.5
        %v4853 = vmul.f32 %v4821, 0.5
        %v4854 = vmul.f32 %v4822, 0.5
        %v4855 = vmul.f32 %v4823, 0.5
        %v4856 = vtanh.pop %v4824
        %v4857 = vtanh.pop %v4825
        %v4858 = vtanh.pop %v4826
        %v4859 = vtanh.pop %v4827
        %v4860 = vtanh.pop %v4828
        %v4861 = vtanh.pop %v4829
        %v4862 = vtanh.pop %v4830
        %v4863 = vtanh.pop %v4831
        %v4864 = vtanh.pop %v4832
        %v4865 = vtanh.pop %v4833
        %v4866 = vtanh.pop %v4834
        %v4867 = vtanh.pop %v4835
        %v4868 = vtanh.pop %v4836
        %v4869 = vtanh.pop %v4837
        %v4870 = vtanh.pop %v4838
        %v4871 = vtanh.pop %v4839
        %v4872 = vtanh.pop %v4840
        %v4873 = vtanh.pop %v4841
        %v4874 = vtanh.pop %v4842
        %v4875 = vtanh.pop %v4843
        %v4876 = vtanh.pop %v4844
        %v4877 = vtanh.pop %v4845
        %v4878 = vtanh.pop %v4846
        %v4879 = vtanh.pop %v4847
        %v4880 = vtanh.pop %v4848
        %v4881 = vtanh.pop %v4849
        %v4882 = vtanh.pop %v4850
        %v4883 = vtanh.pop %v4851
        %v4884 = vtanh.pop %v4852
        %v4885 = vtanh.pop %v4853
        %v4886 = vtanh.pop %v4854
        %v4887 = vtanh.pop %v4855
        %v4888 = vmul.f32 %v4856, 0.5
        %v4889 = vmul.f32 %v4857, 0.5
        %v4890 = vmul.f32 %v4858, 0.5
        %v4891 = vmul.f32 %v4859, 0.5
        %v4892 = vmul.f32 %v4860, 0.5
        %v4893 = vmul.f32 %v4861, 0.5
        %v4894 = vmul.f32 %v4862, 0.5
        %v4895 = vmul.f32 %v4863, 0.5
        %v4896 = vmul.f32 %v4864, 0.5
        %v4897 = vmul.f32 %v4865, 0.5
        %v4898 = vmul.f32 %v4866, 0.5
        %v4899 = vmul.f32 %v4867, 0.5
        %v4900 = vmul.f32 %v4868, 0.5
        %v4901 = vmul.f32 %v4869, 0.5
        %v4902 = vmul.f32 %v4870, 0.5
        %v4903 = vmul.f32 %v4871, 0.5
        %v4904 = vmul.f32 %v4872, 0.5
        %v4905 = vmul.f32 %v4873, 0.5
        %v4906 = vmul.f32 %v4874, 0.5
        %v4907 = vmul.f32 %v4875, 0.5
        %v4908 = vmul.f32 %v4876, 0.5
        %v4909 = vmul.f32 %v4877, 0.5
        %v4910 = vmul.f32 %v4878, 0.5
        %v4911 = vmul.f32 %v4879, 0.5
        %v4912 = vmul.f32 %v4880, 0.5
        %v4913 = vmul.f32 %v4881, 0.5
        %v4914 = vmul.f32 %v4882, 0.5
        %v4915 = vmul.f32 %v4883, 0.5
        %v4916 = vmul.f32 %v4884, 0.5
        %v4917 = vmul.f32 %v4885, 0.5
        %v4918 = vmul.f32 %v4886, 0.5
        %v4919 = vmul.f32 %v4887, 0.5
        %v4920 = vadd.f32 %v4888, 0.5
        %v4921 = vadd.f32 %v4889, 0.5
        %v4922 = vadd.f32 %v4890, 0.5
        %v4923 = vadd.f32 %v4891, 0.5
        %v4924 = vadd.f32 %v4892, 0.5
        %v4925 = vadd.f32 %v4893, 0.5
        %v4926 = vadd.f32 %v4894, 0.5
        %v4927 = vadd.f32 %v4895, 0.5
        %v4928 = vadd.f32 %v4896, 0.5
        %v4929 = vadd.f32 %v4897, 0.5
        %v4930 = vadd.f32 %v4898, 0.5
        %v4931 = vadd.f32 %v4899, 0.5
        %v4932 = vadd.f32 %v4900, 0.5
        %v4933 = vadd.f32 %v4901, 0.5
        %v4934 = vadd.f32 %v4902, 0.5
        %v4935 = vadd.f32 %v4903, 0.5
        %v4936 = vadd.f32 %v4904, 0.5
        %v4937 = vadd.f32 %v4905, 0.5
        %v4938 = vadd.f32 %v4906, 0.5
        %v4939 = vadd.f32 %v4907, 0.5
        %v4940 = vadd.f32 %v4908, 0.5
        %v4941 = vadd.f32 %v4909, 0.5
        %v4942 = vadd.f32 %v4910, 0.5
        %v4943 = vadd.f32 %v4911, 0.5
        %v4944 = vadd.f32 %v4912, 0.5
        %v4945 = vadd.f32 %v4913, 0.5
        %v4946 = vadd.f32 %v4914, 0.5
        %v4947 = vadd.f32 %v4915, 0.5
        %v4948 = vadd.f32 %v4916, 0.5
        %v4949 = vadd.f32 %v4917, 0.5
        %v4950 = vadd.f32 %v4918, 0.5
        %v4951 = vadd.f32 %v4919, 0.5
        %v4952 = vmul.f32 %v4792, %v4920
        %v4953 = vmul.f32 %v4793, %v4921
        %v4954 = vmul.f32 %v4794, %v4922
        %v4955 = vmul.f32 %v4795, %v4923
        %v4956 = vmul.f32 %v4796, %v4924
        %v4957 = vmul.f32 %v4797, %v4925
        %v4958 = vmul.f32 %v4798, %v4926
        %v4959 = vmul.f32 %v4799, %v4927
        %v4960 = vmul.f32 %v4800, %v4928
        %v4961 = vmul.f32 %v4801, %v4929
        %v4962 = vmul.f32 %v4802, %v4930
        %v4963 = vmul.f32 %v4803, %v4931
        %v4964 = vmul.f32 %v4804, %v4932
        %v4965 = vmul.f32 %v4805, %v4933
        %v4966 = vmul.f32 %v4806, %v4934
        %v4967 = vmul.f32 %v4807, %v4935
        %v4968 = vmul.f32 %v4808, %v4936
        %v4969 = vmul.f32 %v4809, %v4937
        %v4970 = vmul.f32 %v4810, %v4938
        %v4971 = vmul.f32 %v4811, %v4939
        %v4972 = vmul.f32 %v4812, %v4940
        %v4973 = vmul.f32 %v4813, %v4941
        %v4974 = vmul.f32 %v4814, %v4942
        %v4975 = vmul.f32 %v4815, %v4943
        %v4976 = vmul.f32 %v4816, %v4944
        %v4977 = vmul.f32 %v4817, %v4945
        %v4978 = vmul.f32 %v4818, %v4946
        %v4979 = vmul.f32 %v4819, %v4947
        %v4980 = vmul.f32 %v4820, %v4948
        %v4981 = vmul.f32 %v4821, %v4949
        %v4982 = vmul.f32 %v4822, %v4950
        %v4983 = vmul.f32 %v4823, %v4951
        %v4984 = vld [vmem:[%s546] sm:$0xf]
        %v4985 = vld [vmem:[%s546 + $0x4] sm:$0xf]
        %v4986 = vld [vmem:[%s546 + $0x8] sm:$0xf]
        %v4987 = vld [vmem:[%s546 + $0xc] sm:$0xf]
        %v4988 = vld [vmem:[%s546 + $0x10] sm:$0xf]
        %v4989 = vld [vmem:[%s546 + $0x14] sm:$0xf]
        %v4990 = vld [vmem:[%s546 + $0x18] sm:$0xf]
        %v4991 = vld [vmem:[%s546 + $0x1c] sm:$0xf]
        %v4992 = vld [vmem:[%s546 + $0x20] sm:$0xf]
        %v4993 = vld [vmem:[%s546 + $0x24] sm:$0xf]
        %v4994 = vld [vmem:[%s546 + $0x28] sm:$0xf]
        %v4995 = vld [vmem:[%s546 + $0x2c] sm:$0xf]
        %v4996 = vld [vmem:[%s546 + $0x30] sm:$0xf]
        %v4997 = vld [vmem:[%s546 + $0x34] sm:$0xf]
        %v4998 = vld [vmem:[%s546 + $0x38] sm:$0xf]
        %v4999 = vld [vmem:[%s546 + $0x3c] sm:$0xf]
        %v5000 = vld [vmem:[%s546 + $0x40] sm:$0xf]
        %v5001 = vld [vmem:[%s546 + $0x44] sm:$0xf]
        %v5002 = vld [vmem:[%s546 + $0x48] sm:$0xf]
        %v5003 = vld [vmem:[%s546 + $0x4c] sm:$0xf]
        %v5004 = vld [vmem:[%s546 + $0x50] sm:$0xf]
        %v5005 = vld [vmem:[%s546 + $0x54] sm:$0xf]
        %v5006 = vld [vmem:[%s546 + $0x58] sm:$0xf]
        %v5007 = vld [vmem:[%s546 + $0x5c] sm:$0xf]
        %v5008 = vld [vmem:[%s546 + $0x60] sm:$0xf]
        %v5009 = vld [vmem:[%s546 + $0x64] sm:$0xf]
        %v5010 = vld [vmem:[%s546 + $0x68] sm:$0xf]
        %v5011 = vld [vmem:[%s546 + $0x6c] sm:$0xf]
        %v5012 = vld [vmem:[%s546 + $0x70] sm:$0xf]
        %v5013 = vld [vmem:[%s546 + $0x74] sm:$0xf]
        %v5014 = vld [vmem:[%s546 + $0x78] sm:$0xf]
        %v5015 = vld [vmem:[%s546 + $0x7c] sm:$0xf]
        %v5016 = vld [vmem:[%s14] sm:$0x3]
        %v5017 = vld [vmem:[%s15] sm:$0x1]
        %v5019 = vlaneseq
        %v5020 = vshrl.u32 %v5019, 7
        %v5021 = vsub.s32 0, %v5020
        %v5022 = vrot.slane %v5017, %v5021
        %v5056 = vunpack.c.l.b16 %v4984
        %v5057 = vunpack.c.l.b16 %v4985
        %v5058 = vunpack.c.l.b16 %v4986
        %v5059 = vunpack.c.l.b16 %v4987
        %v5060 = vunpack.c.l.b16 %v4988
        %v5061 = vunpack.c.l.b16 %v4989
        %v5062 = vunpack.c.l.b16 %v4990
        %v5063 = vunpack.c.l.b16 %v4991
        %v5064 = vunpack.c.l.b16 %v4992
        %v5065 = vunpack.c.l.b16 %v4993
        %v5066 = vunpack.c.l.b16 %v4994
        %v5067 = vunpack.c.l.b16 %v4995
        %v5068 = vunpack.c.l.b16 %v4996
        %v5069 = vunpack.c.l.b16 %v4997
        %v5070 = vunpack.c.l.b16 %v4998
        %v5071 = vunpack.c.l.b16 %v4999
        %v5072 = vunpack.c.l.b16 %v5000
        %v5073 = vunpack.c.l.b16 %v5001
        %v5074 = vunpack.c.l.b16 %v5002
        %v5075 = vunpack.c.l.b16 %v5003
        %v5076 = vunpack.c.l.b16 %v5004
        %v5077 = vunpack.c.l.b16 %v5005
        %v5078 = vunpack.c.l.b16 %v5006
        %v5079 = vunpack.c.l.b16 %v5007
        %v5080 = vunpack.c.l.b16 %v5008
        %v5081 = vunpack.c.l.b16 %v5009
        %v5082 = vunpack.c.l.b16 %v5010
        %v5083 = vunpack.c.l.b16 %v5011
        %v5084 = vunpack.c.l.b16 %v5012
        %v5085 = vunpack.c.l.b16 %v5013
        %v5086 = vunpack.c.l.b16 %v5014
        %v5087 = vunpack.c.l.b16 %v5015
        %v5088 = vpack.c.b16 %v5057, %v5056
        %v5089 = vpack.c.b16 %v5059, %v5058
        %v5090 = vpack.c.b16 %v5061, %v5060
        %v5091 = vpack.c.b16 %v5063, %v5062
        %v5092 = vpack.c.b16 %v5065, %v5064
        %v5093 = vpack.c.b16 %v5067, %v5066
        %v5094 = vpack.c.b16 %v5069, %v5068
        %v5095 = vpack.c.b16 %v5071, %v5070
        %v5096 = vpack.c.b16 %v5073, %v5072
        %v5097 = vpack.c.b16 %v5075, %v5074
        %v5098 = vpack.c.b16 %v5077, %v5076
        %v5099 = vpack.c.b16 %v5079, %v5078
        %v5100 = vpack.c.b16 %v5081, %v5080
        %v5101 = vpack.c.b16 %v5083, %v5082
        %v5102 = vpack.c.b16 %v5085, %v5084
        %v5103 = vpack.c.b16 %v5087, %v5086
        %vm5104 = vcmask 31744
        %v5106 = vsel %vm5104, %v5088, 0
        %v5109 = vsel %vm5104, %v5089, 0
        %v5112 = vsel %vm5104, %v5090, 0
        %v5115 = vsel %vm5104, %v5091, 0
        %v5118 = vsel %vm5104, %v5092, 0
        %v5121 = vsel %vm5104, %v5093, 0
        %v5124 = vsel %vm5104, %v5094, 0
        %v5127 = vsel %vm5104, %v5095, 0
        %v5130 = vsel %vm5104, %v5096, 0
        %v5133 = vsel %vm5104, %v5097, 0
        %v5136 = vsel %vm5104, %v5098, 0
        %v5139 = vsel %vm5104, %v5099, 0
        %v5142 = vsel %vm5104, %v5100, 0
        %v5145 = vsel %vm5104, %v5101, 0
        %v5148 = vsel %vm5104, %v5102, 0
        %v5151 = vsel %vm5104, %v5103, 0
        %vm5153 = vcmask 1041408
        %v5155 = vsel %vm5153, %v5016, 0
        %5157 = vmatprep.subr.bf16.mxu0 0
        %5158 = vmatpush1.bf16.msra.mxu0 %v5155
        %5159 = vmatprep.subr.bf16.mxu0 0
        %5160 = vmatpush1.bf16.msra.mxu0 0
        %5161 = vmatprep.subr.bf16.mxu0 0
        %5162 = vmatpush1.bf16.msra.mxu0 0
        %5163 = vmatprep.subr.bf16.mxu0 0
        %5164 = vmatpush1.bf16.msra.mxu0 0
        %5165 = vmatprep.subr.bf16.mxu0 0
        %5166 = vmatpush1.bf16.msra.mxu0 0
        %5167 = vmatprep.subr.bf16.mxu0 0
        %5168 = vmatpush1.bf16.msra.mxu0 0
        %5169 = vmatprep.subr.bf16.mxu0 0
        %5170 = vmatpush1.bf16.msra.mxu0 0
        %5171 = vmatprep.subr.bf16.mxu0 0
        %5172 = vmatpush1.bf16.msra.mxu0 0
        %5173 = vmatprep.subr.bf16.mxu0 0
        %5174 = vmatpush1.bf16.msra.mxu0 0
        %5175 = vmatprep.subr.bf16.mxu0 0
        %5176 = vmatpush1.bf16.msra.mxu0 0
        %5177 = vmatprep.subr.bf16.mxu0 0
        %5178 = vmatpush1.bf16.msra.mxu0 0
        %5179 = vmatprep.subr.bf16.mxu0 0
        %5180 = vmatpush1.bf16.msra.mxu0 0
        %5181 = vmatprep.subr.bf16.mxu0 0
        %5182 = vmatpush1.bf16.msra.mxu0 0
        %5183 = vmatprep.subr.bf16.mxu0 0
        %5184 = vmatpush1.bf16.msra.mxu0 0
        %5185 = vmatprep.subr.bf16.mxu0 0
        %5186 = vmatpush1.bf16.msra.mxu0 0
        %5187 = vmatprep.subr.bf16.mxu0 0
        %5188 = vmatpush1.bf16.msra.mxu0 0
        %5189 = vmatprep.mubr.bf16.mxu0 0
        %5190 = vmatmul.mubr.bf16.gmra.mrb[0].mxu0 %v5106
        %v5191 = vpop.f32.mrb[0].mxu0
        %v5192 = vadd.f32 %v5022, %v5191
        %v5193 = vpop.f32.mrb[0].mxu0
        %v5194 = vpop.f32.mrb[0].mxu0
        %v5195 = vadd.f32 %v5022, %v5194
        %v5196 = vpop.f32.mrb[0].mxu0
        %5197 = vmatprep.mubr.bf16.mxu0 0
        %5198 = vmatmul.mubr.bf16.gmra.mrb[0].mxu0 %v5109
        %v5199 = vpop.f32.mrb[0].mxu0
        %v5200 = vadd.f32 %v5022, %v5199
        %v5201 = vpop.f32.mrb[0].mxu0
        %v5202 = vpop.f32.mrb[0].mxu0
        %v5203 = vadd.f32 %v5022, %v5202
        %v5204 = vpop.f32.mrb[0].mxu0
        %5205 = vmatprep.mubr.bf16.mxu0 0
        %5206 = vmatmul.mubr.bf16.gmra.mrb[0].mxu0 %v5112
        %v5207 = vpop.f32.mrb[0].mxu0
        %v5208 = vadd.f32 %v5022, %v5207
        %v5209 = vpop.f32.mrb[0].mxu0
        %v5210 = vpop.f32.mrb[0].mxu0
        %v5211 = vadd.f32 %v5022, %v5210
        %v5212 = vpop.f32.mrb[0].mxu0
        %5213 = vmatprep.mubr.bf16.mxu0 0
        %5214 = vmatmul.mubr.bf16.gmra.mrb[0].mxu0 %v5115
        %v5215 = vpop.f32.mrb[0].mxu0
        %v5216 = vadd.f32 %v5022, %v5215
        %v5217 = vpop.f32.mrb[0].mxu0
        %v5218 = vpop.f32.mrb[0].mxu0
        %v5219 = vadd.f32 %v5022, %v5218
        %v5220 = vpop.f32.mrb[0].mxu0
        %5221 = vmatprep.mubr.bf16.mxu0 0
        %5222 = vmatmul.mubr.bf16.gmra.mrb[0].mxu0 %v5118
        %v5223 = vpop.f32.mrb[0].mxu0
        %v5224 = vadd.f32 %v5022, %v5223
        %v5225 = vpop.f32.mrb[0].mxu0
        %v5226 = vpop.f32.mrb[0].mxu0
        %v5227 = vadd.f32 %v5022, %v5226
        %v5228 = vpop.f32.mrb[0].mxu0
        %5229 = vmatprep.mubr.bf16.mxu0 0
        %5230 = vmatmul.mubr.bf16.gmra.mrb[0].mxu0 %v5121
        %v5231 = vpop.f32.mrb[0].mxu0
        %v5232 = vadd.f32 %v5022, %v5231
        %v5233 = vpop.f32.mrb[0].mxu0
        %v5234 = vpop.f32.mrb[0].mxu0
        %v5235 = vadd.f32 %v5022, %v5234
        %v5236 = vpop.f32.mrb[0].mxu0
        %5237 = vmatprep.mubr.bf16.mxu0 0
        %5238 = vmatmul.mubr.bf16.gmra.mrb[0].mxu0 %v5124
        %v5239 = vpop.f32.mrb[0].mxu0
        %v5240 = vadd.f32 %v5022, %v5239
        %v5241 = vpop.f32.mrb[0].mxu0
        %v5242 = vpop.f32.mrb[0].mxu0
        %v5243 = vadd.f32 %v5022, %v5242
        %v5244 = vpop.f32.mrb[0].mxu0
        %5245 = vmatprep.mubr.bf16.mxu0 0
        %5246 = vmatmul.mubr.bf16.gmra.mrb[0].mxu0 %v5127
        %v5247 = vpop.f32.mrb[0].mxu0
        %v5248 = vadd.f32 %v5022, %v5247
        %v5249 = vpop.f32.mrb[0].mxu0
        %v5250 = vpop.f32.mrb[0].mxu0
        %v5251 = vadd.f32 %v5022, %v5250
        %v5252 = vpop.f32.mrb[0].mxu0
        %5253 = vmatprep.mubr.bf16.mxu0 0
        %5254 = vmatmul.mubr.bf16.gmra.mrb[0].mxu0 %v5130
        %v5255 = vpop.f32.mrb[0].mxu0
        %v5256 = vadd.f32 %v5022, %v5255
        %v5257 = vpop.f32.mrb[0].mxu0
        %v5258 = vpop.f32.mrb[0].mxu0
        %v5259 = vadd.f32 %v5022, %v5258
        %v5260 = vpop.f32.mrb[0].mxu0
        %5261 = vmatprep.mubr.bf16.mxu0 0
        %5262 = vmatmul.mubr.bf16.gmra.mrb[0].mxu0 %v5133
        %v5263 = vpop.f32.mrb[0].mxu0
        %v5264 = vadd.f32 %v5022, %v5263
        %v5265 = vpop.f32.mrb[0].mxu0
        %v5266 = vpop.f32.mrb[0].mxu0
        %v5267 = vadd.f32 %v5022, %v5266
        %v5268 = vpop.f32.mrb[0].mxu0
        %5269 = vmatprep.mubr.bf16.mxu0 0
        %5270 = vmatmul.mubr.bf16.gmra.mrb[0].mxu0 %v5136
        %v5271 = vpop.f32.mrb[0].mxu0
        %v5272 = vadd.f32 %v5022, %v5271
        %v5273 = vpop.f32.mrb[0].mxu0
        %v5274 = vpop.f32.mrb[0].mxu0
        %v5275 = vadd.f32 %v5022, %v5274
        %v5276 = vpop.f32.mrb[0].mxu0
        %5277 = vmatprep.mubr.bf16.mxu0 0
        %5278 = vmatmul.mubr.bf16.gmra.mrb[0].mxu0 %v5139
        %v5279 = vpop.f32.mrb[0].mxu0
        %v5280 = vadd.f32 %v5022, %v5279
        %v5281 = vpop.f32.mrb[0].mxu0
        %v5282 = vpop.f32.mrb[0].mxu0
        %v5283 = vadd.f32 %v5022, %v5282
        %v5284 = vpop.f32.mrb[0].mxu0
        %5285 = vmatprep.mubr.bf16.mxu0 0
        %5286 = vmatmul.mubr.bf16.gmra.mrb[0].mxu0 %v5142
        %v5287 = vpop.f32.mrb[0].mxu0
        %v5288 = vadd.f32 %v5022, %v5287
        %v5289 = vpop.f32.mrb[0].mxu0
        %v5290 = vpop.f32.mrb[0].mxu0
        %v5291 = vadd.f32 %v5022, %v5290
        %v5292 = vpop.f32.mrb[0].mxu0
        %5293 = vmatprep.mubr.bf16.mxu0 0
        %5294 = vmatmul.mubr.bf16.gmra.mrb[0].mxu0 %v5145
        %v5295 = vpop.f32.mrb[0].mxu0
        %v5296 = vadd.f32 %v5022, %v5295
        %v5297 = vpop.f32.mrb[0].mxu0
        %v5298 = vpop.f32.mrb[0].mxu0
        %v5299 = vadd.f32 %v5022, %v5298
        %v5300 = vpop.f32.mrb[0].mxu0
        %5301 = vmatprep.mubr.bf16.mxu0 0
        %5302 = vmatmul.mubr.bf16.gmra.mrb[0].mxu0 %v5148
        %v5303 = vpop.f32.mrb[0].mxu0
        %v5304 = vadd.f32 %v5022, %v5303
        %v5305 = vpop.f32.mrb[0].mxu0
        %v5306 = vpop.f32.mrb[0].mxu0
        %v5307 = vadd.f32 %v5022, %v5306
        %v5308 = vpop.f32.mrb[0].mxu0
        %5309 = vmatprep.mubr.bf16.mxu0 0
        %5310 = vmatmul.mubr.bf16.gmra.mrb[0].mxu0 %v5151
        %v5311 = vpop.f32.mrb[0].mxu0
        %v5312 = vadd.f32 %v5022, %v5311
        %v5313 = vpop.f32.mrb[0].mxu0
        %v5314 = vpop.f32.mrb[0].mxu0
        %v5315 = vadd.f32 %v5022, %v5314
        %v5316 = vpop.f32.mrb[0].mxu0
        %5317 = vdwg.mxu0
        %v5318 = vadd.f32 %v4952, %v5192
        %v5319 = vadd.f32 %v4953, %v5195
        %v5320 = vadd.f32 %v4954, %v5200
        %v5321 = vadd.f32 %v4955, %v5203
        %v5322 = vadd.f32 %v4956, %v5208
        %v5323 = vadd.f32 %v4957, %v5211
        %v5324 = vadd.f32 %v4958, %v5216
        %v5325 = vadd.f32 %v4959, %v5219
        %v5326 = vadd.f32 %v4960, %v5224
        %v5327 = vadd.f32 %v4961, %v5227
        %v5328 = vadd.f32 %v4962, %v5232
        %v5329 = vadd.f32 %v4963, %v5235
        %v5330 = vadd.f32 %v4964, %v5240
        %v5331 = vadd.f32 %v4965, %v5243
        %v5332 = vadd.f32 %v4966, %v5248
        %v5333 = vadd.f32 %v4967, %v5251
        %v5334 = vadd.f32 %v4968, %v5256
        %v5335 = vadd.f32 %v4969, %v5259
        %v5336 = vadd.f32 %v4970, %v5264
        %v5337 = vadd.f32 %v4971, %v5267
        %v5338 = vadd.f32 %v4972, %v5272
        %v5339 = vadd.f32 %v4973, %v5275
        %v5340 = vadd.f32 %v4974, %v5280
        %v5341 = vadd.f32 %v4975, %v5283
        %v5342 = vadd.f32 %v4976, %v5288
        %v5343 = vadd.f32 %v4977, %v5291
        %v5344 = vadd.f32 %v4978, %v5296
        %v5345 = vadd.f32 %v4979, %v5299
        %v5346 = vadd.f32 %v4980, %v5304
        %v5347 = vadd.f32 %v4981, %v5307
        %v5348 = vadd.f32 %v4982, %v5312
        %v5349 = vadd.f32 %v4983, %v5315
        %5350 = vst.msk [vmem:[%s541] sm:$0xff] %vm2389, %v5318
        %5351 = vst.msk [vmem:[%s541 + $0x8] sm:$0xff] %vm2389, %v5319
        %5352 = vst.msk [vmem:[%s541 + $0x10] sm:$0xff] %vm2389, %v5320
        %5353 = vst.msk [vmem:[%s541 + $0x18] sm:$0xff] %vm2389, %v5321
        %5354 = vst.msk [vmem:[%s541 + $0x20] sm:$0xff] %vm2389, %v5322
        %5355 = vst.msk [vmem:[%s541 + $0x28] sm:$0xff] %vm2389, %v5323
        %5356 = vst.msk [vmem:[%s541 + $0x30] sm:$0xff] %vm2389, %v5324
        %5357 = vst.msk [vmem:[%s541 + $0x38] sm:$0xff] %vm2389, %v5325
        %5358 = vst.msk [vmem:[%s541 + $0x40] sm:$0xff] %vm2389, %v5326
        %5359 = vst.msk [vmem:[%s541 + $0x48] sm:$0xff] %vm2389, %v5327
        %5360 = vst.msk [vmem:[%s541 + $0x50] sm:$0xff] %vm2389, %v5328
        %5361 = vst.msk [vmem:[%s541 + $0x58] sm:$0xff] %vm2389, %v5329
        %5362 = vst.msk [vmem:[%s541 + $0x60] sm:$0xff] %vm2389, %v5330
        %5363 = vst.msk [vmem:[%s541 + $0x68] sm:$0xff] %vm2389, %v5331
        %5364 = vst.msk [vmem:[%s541 + $0x70] sm:$0xff] %vm2389, %v5332
        %5365 = vst.msk [vmem:[%s541 + $0x78] sm:$0xff] %vm2389, %v5333
        %5366 = vst.msk [vmem:[%s541 + $0x80] sm:$0xff] %vm2389, %v5334
        %5367 = vst.msk [vmem:[%s541 + $0x88] sm:$0xff] %vm2389, %v5335
        %5368 = vst.msk [vmem:[%s541 + $0x90] sm:$0xff] %vm2389, %v5336
        %5369 = vst.msk [vmem:[%s541 + $0x98] sm:$0xff] %vm2389, %v5337
        %5370 = vst.msk [vmem:[%s541 + $0xa0] sm:$0xff] %vm2389, %v5338
        %5371 = vst.msk [vmem:[%s541 + $0xa8] sm:$0xff] %vm2389, %v5339
        %5372 = vst.msk [vmem:[%s541 + $0xb0] sm:$0xff] %vm2389, %v5340
        %5373 = vst.msk [vmem:[%s541 + $0xb8] sm:$0xff] %vm2389, %v5341
        %5374 = vst.msk [vmem:[%s541 + $0xc0] sm:$0xff] %vm2389, %v5342
        %5375 = vst.msk [vmem:[%s541 + $0xc8] sm:$0xff] %vm2389, %v5343
        %5376 = vst.msk [vmem:[%s541 + $0xd0] sm:$0xff] %vm2389, %v5344
        %5377 = vst.msk [vmem:[%s541 + $0xd8] sm:$0xff] %vm2389, %v5345
        %5378 = vst.msk [vmem:[%s541 + $0xe0] sm:$0xff] %vm2389, %v5346
        %5379 = vst.msk [vmem:[%s541 + $0xe8] sm:$0xff] %vm2389, %v5347
        %5380 = vst.msk [vmem:[%s541 + $0xf0] sm:$0xff] %vm2389, %v5348
        %5381 = vst.msk [vmem:[%s541 + $0xf8] sm:$0xff] %vm2389, %v5349
        %s5382 = sand.u32 %s401, 1
        %s5383 = scalar_lea.sflag [#allocation5], %s5382
        %s5384 = sand.u32 %s401, 1
        %s5385 = smul.addr %s5384, 256
        %s5386 = scalar_lea.vmem [#allocation4], %s5385
        // Predicated region
        $region89: #{tpu_custom_call.1} parent=87 // pred_check
          %p5387 = pneg %p411
        $region90: #{tpu_custom_call.1} parent=87 // pred_check_branch
          %5389 = sbr.rel (%p5387) target = $region92
        $region91: #{tpu_custom_call.1} parent=87 // pred_region
          %s5391 = ssub.s32 4096, 4096
          %5392 = vsyncadd %s5383, %s5391
          %s5393 = smul.addr %s31, 32
          %s5394 = smul.addr %s5393, 128
          %s5395 = scalar_lea.hbm %s17, %s5394
          %s5396 = sshll.u32 %s5386, 4
          %s5397 = int_to_ptr.vmem [resolvable:$true] %s5396
          %5402 = dma.vmem_to_hbm [thread:$0]  %s5397, 4096, %s5395, %s5383, 128, 128, 8
        $region92: #{tpu_custom_call.1} parent=87 // pred_fallthru
          _
      $region88: #{tpu_custom_call.1} parent=5 // pred_fallthru
        _
      %p5403 = scmp.le.s32.totalorder 2, %s26
      // Predicated region
      $region93: #{tpu_custom_call.1} parent=5 // pred_check
        %p5404 = pneg %p5403
      $region94: #{tpu_custom_call.1} parent=5 // pred_check_branch
        %5406 = sbr.rel (%p5404) target = $region96
      $region95: #{tpu_custom_call.1} parent=5 // pred_region
        %s5407 = ssub.s32 %s26, 2
        // Predicated region
        $region97: #{tpu_custom_call.1} parent=95 // pred_check
          %p5408 = pneg %p417
        $region98: #{tpu_custom_call.1} parent=95 // pred_check_branch
          %5410 = sbr.rel (%p5408) target = $region100
        $region99: #{tpu_custom_call.1} parent=95 // pred_region
          %s5411 = sand.u32 %s402, 1
          %s5412 = scalar_lea.sflag [#allocation5], %s5411
          %s5413 = sand.u32 %s402, 1
          %s5414 = smul.addr %s5413, 256
          %s5415 = scalar_lea.vmem [#allocation4], %s5414
          %5416 = dma.done %s5412, 4096
        $region100: #{tpu_custom_call.1} parent=95 // pred_fallthru
          _
      $region96: #{tpu_custom_call.1} parent=5 // pred_fallthru
        _
    $region6: #{tpu_custom_call.1} parent=1 // loop_footer
      %s30 = sadd.s32 1, %s26
    $region7: #{tpu_custom_call.1} parent=1 // loop_footer_branch
      %25 = sbr.rel target = $region3
    $region8: #{tpu_custom_call.1} parent=1 // loop_exit
      _
    %5417 = vsyncpa [#allocation5], 1
    %s5418 = scalar_lea.sflag [#allocation5], 1
    %5419 = vsyncpa %s5418, 1

</llo_original>
